<compile_context>
chip_gen: v5e
topology: v5e:2x2
jax: 0.10.0
libtpu: 0.0.40
codegen_flags: <defaults>
</compile_context>

<pallas_src>
import jax
import jax.numpy as jnp
from jax.experimental import pallas as pl
from jax.experimental.pallas import tpu as pltpu

N_EMBD = 192
N_HEADS = 6
HEAD_SIZE = N_EMBD // N_HEADS
LN_EPS = 1e-5


def _layernorm(v, gamma, beta):
    mu = jnp.mean(v, axis=-1, keepdims=True)
    var = jnp.mean((v - mu) ** 2, axis=-1, keepdims=True)
    return (v - mu) * jax.lax.rsqrt(var + LN_EPS) * gamma + beta


def transformer_block_kernel(
    x_ref,                      # (Bt, T, C)  f32
    ln1g_ref, ln1b_ref,         # (1, C)      f32
    wq_ref, wk_ref, wv_ref,     # (H, C, D)   bf16, head-major
    wp_ref, bp_ref,             # (H, D, C) bf16, (1, C) f32
    ln2g_ref, ln2b_ref,         # (1, C)      f32
    w1_ref, b1_ref,             # (C, 4C) bf16, (1, 4C) f32
    w2_ref, b2_ref,             # (4C, C) bf16, (1, C) f32
    o_ref,                      # (Bt, T, C)
):
    Bt, T, C = x_ref.shape
    H = N_HEADS
    M = Bt * T

    # Flatten batch into the matmul M dimension (free reshape: leading dims).
    x = x_ref[...].astype(jnp.float32).reshape(M, C)

    # --- self-attention branch: sa(ln1(x)) ---
    h1 = _layernorm(x, ln1g_ref[0], ln1b_ref[0])                    # f32 (M, C)
    h1b = jnp.broadcast_to(h1.astype(jnp.bfloat16)[None], (H, M, C))

    # Head-batched projections: (H, M, C) @ (H, C, D) -> (H, M, D), f32 acc.
    q = jnp.einsum("hmc,hcd->hmd", h1b, wq_ref[...],
                   preferred_element_type=jnp.float32).astype(jnp.bfloat16)
    k = jnp.einsum("hmc,hcd->hmd", h1b, wk_ref[...],
                   preferred_element_type=jnp.float32).astype(jnp.bfloat16)
    v = jnp.einsum("hmc,hcd->hmd", h1b, wv_ref[...],
                   preferred_element_type=jnp.float32).astype(jnp.bfloat16)

    row = jax.lax.broadcasted_iota(jnp.int32, (T, T), 0)   # query index i
    col = jax.lax.broadcasted_iota(jnp.int32, (T, T), 1)   # key index j
    keep = (col <= row)[None]                              # (1, T, T) tril
    scale = C ** (-0.5)

    # Per-sequence attention (Bt is small; slices are sublane-aligned, T % 8 == 0).
    o_parts = []
    for b in range(Bt):
        sl = slice(b * T, (b + 1) * T)
        qb, kb, vb = q[:, sl, :], k[:, sl, :], v[:, sl, :]           # (H, T, D)
        s = jnp.einsum("hid,hjd->hij", qb, kb,
                       preferred_element_type=jnp.float32) * scale    # (H, T, T)
        s = jnp.where(keep, s, -jnp.inf)
        # softmax over dim=1 of (B, T, T)  ->  the QUERY axis (axis=1 here)
        m = jnp.max(s, axis=1, keepdims=True)
        p = jnp.exp(s - m)
        denom = jnp.sum(p, axis=1, keepdims=True)
        w = p * pl.reciprocal(denom, approx=True)
        o_parts.append(jnp.einsum("hij,hjd->hid", w.astype(jnp.bfloat16), vb,
                                  preferred_element_type=jnp.float32))

    o_heads = o_parts[0] if Bt == 1 else jnp.concatenate(o_parts, axis=1)  # (H, M, D)

    # Output projection: sum over heads of (M, D) @ (D, C)  (== concat @ Wp).
    sa = jnp.einsum("hmd,hdc->hmc", o_heads.astype(jnp.bfloat16), wp_ref[...],
                    preferred_element_type=jnp.float32)
    sa = jnp.sum(sa, axis=0) + bp_ref[0]                              # (M, C)

    x1 = x + sa

    # --- feed-forward branch: ffwd(ln2(x1)) ---
    h2 = _layernorm(x1, ln2g_ref[0], ln2b_ref[0])
    ff = jnp.dot(h2.astype(jnp.bfloat16), w1_ref[...],
                 preferred_element_type=jnp.float32) + b1_ref[0]
    ff = jnp.maximum(ff, 0.0)
    ff = jnp.dot(ff.astype(jnp.bfloat16), w2_ref[...],
                 preferred_element_type=jnp.float32) + b2_ref[0]

    o_ref[...] = (x1 + ff).reshape(Bt, T, C).astype(o_ref.dtype)


def transformer_block(x, params, *, batch_tile=None):
    B, T, C = x.shape
    HID = 4 * C
    nh, hd = N_HEADS, C // N_HEADS

    if batch_tile is None:
        # Keep >= 2 grid steps when possible (both v7x TensorCores busy) while
        # fusing several sequences into the matmul M dimension.
        batch_tile = B // 2 if (B % 2 == 0 and B >= 2) else 1
    assert B % batch_tile == 0, (B, batch_tile)
    Bt = batch_tile
    grid = (B // Bt,)

    bf16 = jnp.bfloat16
    # Pre-split attention weights per head (host side, outside the kernel):
    #   wq/wk/wv: (C, C) -> (H, C, D)   heads along the output axis
    #   wp:       (C, C) -> (H, D, C)   heads along the input axis
    split_out = lambda w: jnp.transpose(w.reshape(C, nh, hd), (1, 0, 2)).astype(bf16)
    wq_h = split_out(params["wq"])
    wk_h = split_out(params["wk"])
    wv_h = split_out(params["wv"])
    wp_h = params["wp"].reshape(nh, hd, C).astype(bf16)
    w1 = params["w1"].astype(bf16)
    w2 = params["w2"].astype(bf16)

    # Grid-invariant operands: constant index_map => DMA'd once, kept resident.
    full = lambda shape: pl.BlockSpec(shape, lambda b: (0,) * len(shape))

    in_specs = [
        pl.BlockSpec((Bt, T, C), lambda b: (b, 0, 0)),              # x
        full((1, C)), full((1, C)),                                 # ln1 gamma/beta
        full((nh, C, hd)), full((nh, C, hd)), full((nh, C, hd)),    # Wq, Wk, Wv
        full((nh, hd, C)), full((1, C)),                            # Wproj, bproj
        full((1, C)), full((1, C)),                                 # ln2 gamma/beta
        full((C, HID)), full((1, HID)),                             # W1, b1
        full((HID, C)), full((1, C)),                               # W2, b2
    ]

    return pl.pallas_call(
        transformer_block_kernel,
        out_shape=jax.ShapeDtypeStruct((B, T, C), x.dtype),
        grid_spec=pltpu.PrefetchScalarGridSpec(
            num_scalar_prefetch=0,
            grid=grid,
            in_specs=in_specs,
            out_specs=pl.BlockSpec((Bt, T, C), lambda b: (b, 0, 0)),
        ),
        compiler_params=pltpu.CompilerParams(
            dimension_semantics=("parallel",),
            # ~0.9 MB of bf16 weights (double-buffered) + small activations:
            # 16 MiB is ample and portable across v5e / v6e / v7x.
            vmem_limit_bytes=16 << 20,
        ),
    )(
        x,
        params["ln1_g"], params["ln1_b"],
        wq_h, wk_h, wv_h,
        wp_h, params["bp"],
        params["ln2_g"], params["ln2_b"],
        w1, params["b1"],
        w2, params["b2"],
    )


def transformer_block_ref(x, params):
    """Pure-JAX f32 reference with identical semantics (for validation)."""
    B, T, C = x.shape
    h = _layernorm(x, params["ln1_g"][0], params["ln1_b"][0])
    q = h @ params["wq"]
    k = h @ params["wk"]
    v = h @ params["wv"]
    row = jnp.arange(T)[:, None]
    col = jnp.arange(T)[None, :]
    keep = col <= row
    scale = C ** (-0.5)
    outs = []
    for hh in range(N_HEADS):
        sl = slice(hh * HEAD_SIZE, (hh + 1) * HEAD_SIZE)
        s = jnp.einsum("btd,bsd->bts", q[..., sl], k[..., sl]) * scale
        s = jnp.where(keep[None], s, -jnp.inf)
        w = jax.nn.softmax(s, axis=1)  # dim=1 as in reference
        outs.append(jnp.einsum("bts,bsd->btd", w, v[..., sl]))
    sa = jnp.concatenate(outs, axis=-1) @ params["wp"] + params["bp"][0]
    x1 = x + sa
    h2 = _layernorm(x1, params["ln2_g"][0], params["ln2_b"][0])
    ff = jnp.maximum(h2 @ params["w1"] + params["b1"][0], 0.0)
    ff = ff @ params["w2"] + params["b2"][0]
    return x1 + ff


def init_params(key, C=N_EMBD):
    H = 4 * C
    ks = jax.random.split(key, 8)
    s = 0.02
    return {
        "ln1_g": jnp.ones((1, C), jnp.float32),
        "ln1_b": jnp.zeros((1, C), jnp.float32),
        "wq": s * jax.random.normal(ks[0], (C, C), jnp.float32),
        "wk": s * jax.random.normal(ks[1], (C, C), jnp.float32),
        "wv": s * jax.random.normal(ks[2], (C, C), jnp.float32),
        "wp": s * jax.random.normal(ks[3], (C, C), jnp.float32),
        "bp": s * jax.random.normal(ks[4], (1, C), jnp.float32),
        "ln2_g": jnp.ones((1, C), jnp.float32),
        "ln2_b": jnp.zeros((1, C), jnp.float32),
        "w1": s * jax.random.normal(ks[5], (C, H), jnp.float32),
        "b1": jnp.zeros((1, H), jnp.float32),
        "w2": s * jax.random.normal(ks[6], (H, C), jnp.float32),
        "b2": jnp.zeros((1, C), jnp.float32),
    }


if __name__ == "__main__":
    key = jax.random.PRNGKey(0)
    kx, kp = jax.random.split(key)

    B, T, C = 4, 16, N_EMBD          # T <= block_size (128); Bt=2, grid=(2,)
    x = jax.random.normal(kx, (B, T, C), jnp.float32)
    params = init_params(kp)

    out = jax.jit(transformer_block)(x, params)
    out = jax.block_until_ready(out)

    ref = transformer_block_ref(x, params)
    assert out.shape == (B, T, C)
    max_err = float(jnp.max(jnp.abs(out - ref)))
    # bf16 matmul operands with f32 accumulation vs an all-f32 reference.
    assert max_err < 2e-2, max_err
    print("KERNEL_OK")
</pallas_src>

<mosaic_0001>
module attributes {stable_mosaic.version = 11 : i64} {
  func.func @transformer_block_kernel(%arg0: i32, %arg1: memref<2x16x192xf32, #tpu.memory_space<vmem>>, %arg2: memref<1x192xf32, #tpu.memory_space<vmem>>, %arg3: memref<1x192xf32, #tpu.memory_space<vmem>>, %arg4: memref<6x192x32xbf16, #tpu.memory_space<vmem>>, %arg5: memref<6x192x32xbf16, #tpu.memory_space<vmem>>, %arg6: memref<6x192x32xbf16, #tpu.memory_space<vmem>>, %arg7: memref<6x32x192xbf16, #tpu.memory_space<vmem>>, %arg8: memref<1x192xf32, #tpu.memory_space<vmem>>, %arg9: memref<1x192xf32, #tpu.memory_space<vmem>>, %arg10: memref<1x192xf32, #tpu.memory_space<vmem>>, %arg11: memref<192x768xbf16, #tpu.memory_space<vmem>>, %arg12: memref<1x768xf32, #tpu.memory_space<vmem>>, %arg13: memref<768x192xbf16, #tpu.memory_space<vmem>>, %arg14: memref<1x192xf32, #tpu.memory_space<vmem>>, %arg15: memref<2x16x192xf32, #tpu.memory_space<vmem>>) attributes {dimension_semantics = [#tpu.dimension_semantics<parallel>], iteration_bounds = array<i64: 2>, scalar_prefetch = 0 : i64, scratch_operands = 0 : i64, tpu.core_type = #tpu.core_type<tc>, window_params = [{transform_indices = @transform_0, window_bounds = array<i64: 2, 16, 192>}, {pipeline_mode = #tpu.pipeline_mode<synchronous>, transform_indices = @transform_1, window_bounds = array<i64: 1, 192>}, {pipeline_mode = #tpu.pipeline_mode<synchronous>, transform_indices = @transform_2, window_bounds = array<i64: 1, 192>}, {pipeline_mode = #tpu.pipeline_mode<synchronous>, transform_indices = @transform_3, window_bounds = array<i64: 6, 192, 32>}, {pipeline_mode = #tpu.pipeline_mode<synchronous>, transform_indices = @transform_4, window_bounds = array<i64: 6, 192, 32>}, {pipeline_mode = #tpu.pipeline_mode<synchronous>, transform_indices = @transform_5, window_bounds = array<i64: 6, 192, 32>}, {pipeline_mode = #tpu.pipeline_mode<synchronous>, transform_indices = @transform_6, window_bounds = array<i64: 6, 32, 192>}, {pipeline_mode = #tpu.pipeline_mode<synchronous>, transform_indices = @transform_7, window_bounds = array<i64: 1, 192>}, {pipeline_mode = #tpu.pipeline_mode<synchronous>, transform_indices = @transform_8, window_bounds = array<i64: 1, 192>}, {pipeline_mode = #tpu.pipeline_mode<synchronous>, transform_indices = @transform_9, window_bounds = array<i64: 1, 192>}, {pipeline_mode = #tpu.pipeline_mode<synchronous>, transform_indices = @transform_10, window_bounds = array<i64: 192, 768>}, {pipeline_mode = #tpu.pipeline_mode<synchronous>, transform_indices = @transform_11, window_bounds = array<i64: 1, 768>}, {pipeline_mode = #tpu.pipeline_mode<synchronous>, transform_indices = @transform_12, window_bounds = array<i64: 768, 192>}, {pipeline_mode = #tpu.pipeline_mode<synchronous>, transform_indices = @transform_13, window_bounds = array<i64: 1, 192>}, {transform_indices = @transform_14, window_bounds = array<i64: 2, 16, 192>}]} {
    %c0 = arith.constant 0 : index
    %c0_0 = arith.constant 0 : index
    %c0_1 = arith.constant 0 : index
    %0 = vector.load %arg1[%c0, %c0_0, %c0_1] : memref<2x16x192xf32, #tpu.memory_space<vmem>>, vector<2x16x192xf32>
    %1 = vector.shape_cast %0 : vector<2x16x192xf32> to vector<32x192xf32>
    %c0_2 = arith.constant 0 : index
    %c0_3 = arith.constant 0 : index
    %2 = vector.load %arg2[%c0_2, %c0_3] : memref<1x192xf32, #tpu.memory_space<vmem>>, vector<1x192xf32>
    %3 = vector.shape_cast %2 : vector<1x192xf32> to vector<192xf32>
    %c0_4 = arith.constant 0 : index
    %c0_5 = arith.constant 0 : index
    %4 = vector.load %arg3[%c0_4, %c0_5] : memref<1x192xf32, #tpu.memory_space<vmem>>, vector<1x192xf32>
    %5 = vector.shape_cast %4 : vector<1x192xf32> to vector<192xf32>
    %cst = arith.constant dense<0.000000e+00> : vector<32xf32>
    %6 = vector.multi_reduction <add>, %1, %cst [1] : vector<32x192xf32> to vector<32xf32>
    %7 = vector.shape_cast %6 : vector<32xf32> to vector<32x1xf32>
    %cst_6 = arith.constant 1.920000e+02 : f32
    %8 = vector.broadcast %cst_6 : f32 to vector<32x1xf32>
    %9 = arith.divf %7, %8 : vector<32x1xf32>
    %10 = vector.broadcast %9 : vector<32x1xf32> to vector<32x192xf32>
    %11 = arith.subf %1, %10 : vector<32x192xf32>
    %12 = arith.mulf %11, %11 : vector<32x192xf32>
    %cst_7 = arith.constant dense<0.000000e+00> : vector<32xf32>
    %13 = vector.multi_reduction <add>, %12, %cst_7 [1] : vector<32x192xf32> to vector<32xf32>
    %14 = vector.shape_cast %13 : vector<32xf32> to vector<32x1xf32>
    %cst_8 = arith.constant 1.920000e+02 : f32
    %15 = vector.broadcast %cst_8 : f32 to vector<32x1xf32>
    %16 = arith.divf %14, %15 : vector<32x1xf32>
    %17 = vector.broadcast %9 : vector<32x1xf32> to vector<32x192xf32>
    %18 = arith.subf %1, %17 : vector<32x192xf32>
    %cst_9 = arith.constant 9.99999974E-6 : f32
    %19 = vector.broadcast %cst_9 : f32 to vector<32x1xf32>
    %20 = arith.addf %16, %19 : vector<32x1xf32>
    %21 = math.rsqrt %20 : vector<32x1xf32>
    %22 = vector.broadcast %21 : vector<32x1xf32> to vector<32x192xf32>
    %23 = arith.mulf %18, %22 : vector<32x192xf32>
    %24 = vector.shape_cast %3 : vector<192xf32> to vector<1x192xf32>
    %25 = vector.broadcast %24 : vector<1x192xf32> to vector<32x192xf32>
    %26 = arith.mulf %23, %25 : vector<32x192xf32>
    %27 = vector.shape_cast %5 : vector<192xf32> to vector<1x192xf32>
    %28 = vector.broadcast %27 : vector<1x192xf32> to vector<32x192xf32>
    %29 = arith.addf %26, %28 : vector<32x192xf32>
    %30 = arith.truncf %29 : vector<32x192xf32> to vector<32x192xbf16>
    %31 = vector.shape_cast %30 : vector<32x192xbf16> to vector<1x32x192xbf16>
    %32 = vector.shape_cast %31 : vector<1x32x192xbf16> to vector<1x32x192xbf16>
    %33 = vector.broadcast %32 : vector<1x32x192xbf16> to vector<6x32x192xbf16>
    %c0_10 = arith.constant 0 : index
    %c0_11 = arith.constant 0 : index
    %c0_12 = arith.constant 0 : index
    %34 = vector.load %arg4[%c0_10, %c0_11, %c0_12] : memref<6x192x32xbf16, #tpu.memory_space<vmem>>, vector<6x192x32xbf16>
    "tpu.trace_start"() <{level = 10 : i32, message = "hmc,hcd->hmd"}> : () -> ()
    %cst_13 = arith.constant dense<0.000000e+00> : vector<6x32x32xf32>
    %35 = tpu.matmul %33, %34, %cst_13 {dimension_numbers = #tpu.dot_dimension_numbers<[2], [1], [1], [2], [0, 0, 0, 1, 1, 2], [0], [0]>} : vector<6x32x192xbf16>, vector<6x192x32xbf16>, vector<6x32x32xf32> -> vector<6x32x32xf32>
    "tpu.trace_stop"() : () -> ()
    %36 = arith.truncf %35 : vector<6x32x32xf32> to vector<6x32x32xbf16>
    %c0_14 = arith.constant 0 : index
    %c0_15 = arith.constant 0 : index
    %c0_16 = arith.constant 0 : index
    %37 = vector.load %arg5[%c0_14, %c0_15, %c0_16] : memref<6x192x32xbf16, #tpu.memory_space<vmem>>, vector<6x192x32xbf16>
    "tpu.trace_start"() <{level = 10 : i32, message = "hmc,hcd->hmd"}> : () -> ()
    %cst_17 = arith.constant dense<0.000000e+00> : vector<6x32x32xf32>
    %38 = tpu.matmul %33, %37, %cst_17 {dimension_numbers = #tpu.dot_dimension_numbers<[2], [1], [1], [2], [0, 0, 0, 1, 1, 2], [0], [0]>} : vector<6x32x192xbf16>, vector<6x192x32xbf16>, vector<6x32x32xf32> -> vector<6x32x32xf32>
    "tpu.trace_stop"() : () -> ()
    %39 = arith.truncf %38 : vector<6x32x32xf32> to vector<6x32x32xbf16>
    %c0_18 = arith.constant 0 : index
    %c0_19 = arith.constant 0 : index
    %c0_20 = arith.constant 0 : index
    %40 = vector.load %arg6[%c0_18, %c0_19, %c0_20] : memref<6x192x32xbf16, #tpu.memory_space<vmem>>, vector<6x192x32xbf16>
    "tpu.trace_start"() <{level = 10 : i32, message = "hmc,hcd->hmd"}> : () -> ()
    %cst_21 = arith.constant dense<0.000000e+00> : vector<6x32x32xf32>
    %41 = tpu.matmul %33, %40, %cst_21 {dimension_numbers = #tpu.dot_dimension_numbers<[2], [1], [1], [2], [0, 0, 0, 1, 1, 2], [0], [0]>} : vector<6x32x192xbf16>, vector<6x192x32xbf16>, vector<6x32x32xf32> -> vector<6x32x32xf32>
    "tpu.trace_stop"() : () -> ()
    %42 = arith.truncf %41 : vector<6x32x32xf32> to vector<6x32x32xbf16>
    %43 = tpu.iota {dimensions = array<i32: 0>} : vector<16x16xi32>
    %44 = tpu.iota {dimensions = array<i32: 1>} : vector<16x16xi32>
    %45 = arith.cmpi sle, %44, %43 : vector<16x16xi32>
    %46 = vector.shape_cast %45 : vector<16x16xi1> to vector<1x16x16xi1>
    %47 = vector.extract_strided_slice %36 {offsets = [0, 0, 0], sizes = [6, 16, 32], strides = [1, 1, 1]} : vector<6x32x32xbf16> to vector<6x16x32xbf16>
    %48 = vector.extract_strided_slice %39 {offsets = [0, 0, 0], sizes = [6, 16, 32], strides = [1, 1, 1]} : vector<6x32x32xbf16> to vector<6x16x32xbf16>
    %49 = vector.extract_strided_slice %42 {offsets = [0, 0, 0], sizes = [6, 16, 32], strides = [1, 1, 1]} : vector<6x32x32xbf16> to vector<6x16x32xbf16>
    "tpu.trace_start"() <{level = 10 : i32, message = "hid,hjd->hij"}> : () -> ()
    %cst_22 = arith.constant dense<0.000000e+00> : vector<6x16x16xf32>
    %50 = tpu.matmul %47, %48, %cst_22 {dimension_numbers = #tpu.dot_dimension_numbers<[2], [2], [1], [1], [0, 0, 0, 1, 1, 1], [0], [0]>} : vector<6x16x32xbf16>, vector<6x16x32xbf16>, vector<6x16x16xf32> -> vector<6x16x16xf32>
    "tpu.trace_stop"() : () -> ()
    %cst_23 = arith.constant 0.0721687824 : f32
    %51 = vector.broadcast %cst_23 : f32 to vector<6x16x16xf32>
    %52 = arith.mulf %50, %51 : vector<6x16x16xf32>
    %cst_24 = arith.constant 0xFF800000 : f32
    %53 = vector.shape_cast %46 : vector<1x16x16xi1> to vector<1x16x16xi1>
    %54 = vector.broadcast %53 : vector<1x16x16xi1> to vector<6x16x16xi1>
    %55 = vector.broadcast %cst_24 : f32 to vector<6x16x16xf32>
    %56 = arith.select %54, %52, %55 : vector<6x16x16xi1>, vector<6x16x16xf32>
    %cst_25 = arith.constant dense<0xFF800000> : vector<6x16xf32>
    %57 = vector.multi_reduction <maximumf>, %56, %cst_25 [1] : vector<6x16x16xf32> to vector<6x16xf32>
    %58 = vector.shape_cast %57 : vector<6x16xf32> to vector<6x1x16xf32>
    %59 = vector.broadcast %58 : vector<6x1x16xf32> to vector<6x16x16xf32>
    %60 = arith.subf %56, %59 : vector<6x16x16xf32>
    %61 = math.exp %60 : vector<6x16x16xf32>
    %cst_26 = arith.constant dense<0.000000e+00> : vector<6x16xf32>
    %62 = vector.multi_reduction <add>, %61, %cst_26 [1] : vector<6x16x16xf32> to vector<6x16xf32>
    %63 = vector.shape_cast %62 : vector<6x16xf32> to vector<6x1x16xf32>
    %64 = tpu.reciprocal %63 {approx = true} : vector<6x1x16xf32> -> vector<6x1x16xf32>
    %65 = vector.broadcast %64 : vector<6x1x16xf32> to vector<6x16x16xf32>
    %66 = arith.mulf %61, %65 : vector<6x16x16xf32>
    %67 = arith.truncf %66 : vector<6x16x16xf32> to vector<6x16x16xbf16>
    "tpu.trace_start"() <{level = 10 : i32, message = "hij,hjd->hid"}> : () -> ()
    %cst_27 = arith.constant dense<0.000000e+00> : vector<6x16x32xf32>
    %68 = tpu.matmul %67, %49, %cst_27 {dimension_numbers = #tpu.dot_dimension_numbers<[2], [1], [1], [2], [0, 0, 0, 1, 1, 2], [0], [0]>} : vector<6x16x16xbf16>, vector<6x16x32xbf16>, vector<6x16x32xf32> -> vector<6x16x32xf32>
    "tpu.trace_stop"() : () -> ()
    %69 = vector.extract_strided_slice %36 {offsets = [0, 16, 0], sizes = [6, 16, 32], strides = [1, 1, 1]} : vector<6x32x32xbf16> to vector<6x16x32xbf16>
    %70 = vector.extract_strided_slice %39 {offsets = [0, 16, 0], sizes = [6, 16, 32], strides = [1, 1, 1]} : vector<6x32x32xbf16> to vector<6x16x32xbf16>
    %71 = vector.extract_strided_slice %42 {offsets = [0, 16, 0], sizes = [6, 16, 32], strides = [1, 1, 1]} : vector<6x32x32xbf16> to vector<6x16x32xbf16>
    "tpu.trace_start"() <{level = 10 : i32, message = "hid,hjd->hij"}> : () -> ()
    %cst_28 = arith.constant dense<0.000000e+00> : vector<6x16x16xf32>
    %72 = tpu.matmul %69, %70, %cst_28 {dimension_numbers = #tpu.dot_dimension_numbers<[2], [2], [1], [1], [0, 0, 0, 1, 1, 1], [0], [0]>} : vector<6x16x32xbf16>, vector<6x16x32xbf16>, vector<6x16x16xf32> -> vector<6x16x16xf32>
    "tpu.trace_stop"() : () -> ()
    %cst_29 = arith.constant 0.0721687824 : f32
    %73 = vector.broadcast %cst_29 : f32 to vector<6x16x16xf32>
    %74 = arith.mulf %72, %73 : vector<6x16x16xf32>
    %cst_30 = arith.constant 0xFF800000 : f32
    %75 = vector.shape_cast %46 : vector<1x16x16xi1> to vector<1x16x16xi1>
    %76 = vector.broadcast %75 : vector<1x16x16xi1> to vector<6x16x16xi1>
    %77 = vector.broadcast %cst_30 : f32 to vector<6x16x16xf32>
    %78 = arith.select %76, %74, %77 : vector<6x16x16xi1>, vector<6x16x16xf32>
    %cst_31 = arith.constant dense<0xFF800000> : vector<6x16xf32>
    %79 = vector.multi_reduction <maximumf>, %78, %cst_31 [1] : vector<6x16x16xf32> to vector<6x16xf32>
    %80 = vector.shape_cast %79 : vector<6x16xf32> to vector<6x1x16xf32>
    %81 = vector.broadcast %80 : vector<6x1x16xf32> to vector<6x16x16xf32>
    %82 = arith.subf %78, %81 : vector<6x16x16xf32>
    %83 = math.exp %82 : vector<6x16x16xf32>
    %cst_32 = arith.constant dense<0.000000e+00> : vector<6x16xf32>
    %84 = vector.multi_reduction <add>, %83, %cst_32 [1] : vector<6x16x16xf32> to vector<6x16xf32>
    %85 = vector.shape_cast %84 : vector<6x16xf32> to vector<6x1x16xf32>
    %86 = tpu.reciprocal %85 {approx = true} : vector<6x1x16xf32> -> vector<6x1x16xf32>
    %87 = vector.broadcast %86 : vector<6x1x16xf32> to vector<6x16x16xf32>
    %88 = arith.mulf %83, %87 : vector<6x16x16xf32>
    %89 = arith.truncf %88 : vector<6x16x16xf32> to vector<6x16x16xbf16>
    "tpu.trace_start"() <{level = 10 : i32, message = "hij,hjd->hid"}> : () -> ()
    %cst_33 = arith.constant dense<0.000000e+00> : vector<6x16x32xf32>
    %90 = tpu.matmul %89, %71, %cst_33 {dimension_numbers = #tpu.dot_dimension_numbers<[2], [1], [1], [2], [0, 0, 0, 1, 1, 2], [0], [0]>} : vector<6x16x16xbf16>, vector<6x16x32xbf16>, vector<6x16x32xf32> -> vector<6x16x32xf32>
    "tpu.trace_stop"() : () -> ()
    %91 = tpu.concatenate %68, %90 in 1 : vector<6x16x32xf32>, vector<6x16x32xf32> -> vector<6x32x32xf32>
    %92 = arith.truncf %91 : vector<6x32x32xf32> to vector<6x32x32xbf16>
    %c0_34 = arith.constant 0 : index
    %c0_35 = arith.constant 0 : index
    %c0_36 = arith.constant 0 : index
    %93 = vector.load %arg7[%c0_34, %c0_35, %c0_36] : memref<6x32x192xbf16, #tpu.memory_space<vmem>>, vector<6x32x192xbf16>
    "tpu.trace_start"() <{level = 10 : i32, message = "hmd,hdc->hmc"}> : () -> ()
    %cst_37 = arith.constant dense<0.000000e+00> : vector<6x32x192xf32>
    %94 = tpu.matmul %92, %93, %cst_37 {dimension_numbers = #tpu.dot_dimension_numbers<[2], [1], [1], [2], [0, 0, 0, 1, 1, 2], [0], [0]>} : vector<6x32x32xbf16>, vector<6x32x192xbf16>, vector<6x32x192xf32> -> vector<6x32x192xf32>
    "tpu.trace_stop"() : () -> ()
    %cst_38 = arith.constant dense<0.000000e+00> : vector<32x192xf32>
    %95 = vector.multi_reduction <add>, %94, %cst_38 [0] : vector<6x32x192xf32> to vector<32x192xf32>
    %c0_39 = arith.constant 0 : index
    %c0_40 = arith.constant 0 : index
    %96 = vector.load %arg8[%c0_39, %c0_40] : memref<1x192xf32, #tpu.memory_space<vmem>>, vector<1x192xf32>
    %97 = vector.shape_cast %96 : vector<1x192xf32> to vector<192xf32>
    %98 = vector.shape_cast %97 : vector<192xf32> to vector<1x192xf32>
    %99 = vector.broadcast %98 : vector<1x192xf32> to vector<32x192xf32>
    %100 = arith.addf %95, %99 : vector<32x192xf32>
    %101 = arith.addf %1, %100 : vector<32x192xf32>
    %c0_41 = arith.constant 0 : index
    %c0_42 = arith.constant 0 : index
    %102 = vector.load %arg9[%c0_41, %c0_42] : memref<1x192xf32, #tpu.memory_space<vmem>>, vector<1x192xf32>
    %103 = vector.shape_cast %102 : vector<1x192xf32> to vector<192xf32>
    %c0_43 = arith.constant 0 : index
    %c0_44 = arith.constant 0 : index
    %104 = vector.load %arg10[%c0_43, %c0_44] : memref<1x192xf32, #tpu.memory_space<vmem>>, vector<1x192xf32>
    %105 = vector.shape_cast %104 : vector<1x192xf32> to vector<192xf32>
    %cst_45 = arith.constant dense<0.000000e+00> : vector<32xf32>
    %106 = vector.multi_reduction <add>, %101, %cst_45 [1] : vector<32x192xf32> to vector<32xf32>
    %107 = vector.shape_cast %106 : vector<32xf32> to vector<32x1xf32>
    %cst_46 = arith.constant 1.920000e+02 : f32
    %108 = vector.broadcast %cst_46 : f32 to vector<32x1xf32>
    %109 = arith.divf %107, %108 : vector<32x1xf32>
    %110 = vector.broadcast %109 : vector<32x1xf32> to vector<32x192xf32>
    %111 = arith.subf %101, %110 : vector<32x192xf32>
    %112 = arith.mulf %111, %111 : vector<32x192xf32>
    %cst_47 = arith.constant dense<0.000000e+00> : vector<32xf32>
    %113 = vector.multi_reduction <add>, %112, %cst_47 [1] : vector<32x192xf32> to vector<32xf32>
    %114 = vector.shape_cast %113 : vector<32xf32> to vector<32x1xf32>
    %cst_48 = arith.constant 1.920000e+02 : f32
    %115 = vector.broadcast %cst_48 : f32 to vector<32x1xf32>
    %116 = arith.divf %114, %115 : vector<32x1xf32>
    %117 = vector.broadcast %109 : vector<32x1xf32> to vector<32x192xf32>
    %118 = arith.subf %101, %117 : vector<32x192xf32>
    %cst_49 = arith.constant 9.99999974E-6 : f32
    %119 = vector.broadcast %cst_49 : f32 to vector<32x1xf32>
    %120 = arith.addf %116, %119 : vector<32x1xf32>
    %121 = math.rsqrt %120 : vector<32x1xf32>
    %122 = vector.broadcast %121 : vector<32x1xf32> to vector<32x192xf32>
    %123 = arith.mulf %118, %122 : vector<32x192xf32>
    %124 = vector.shape_cast %103 : vector<192xf32> to vector<1x192xf32>
    %125 = vector.broadcast %124 : vector<1x192xf32> to vector<32x192xf32>
    %126 = arith.mulf %123, %125 : vector<32x192xf32>
    %127 = vector.shape_cast %105 : vector<192xf32> to vector<1x192xf32>
    %128 = vector.broadcast %127 : vector<1x192xf32> to vector<32x192xf32>
    %129 = arith.addf %126, %128 : vector<32x192xf32>
    %130 = arith.truncf %129 : vector<32x192xf32> to vector<32x192xbf16>
    %c0_50 = arith.constant 0 : index
    %c0_51 = arith.constant 0 : index
    %131 = vector.load %arg11[%c0_50, %c0_51] : memref<192x768xbf16, #tpu.memory_space<vmem>>, vector<192x768xbf16>
    %cst_52 = arith.constant dense<0.000000e+00> : vector<32x768xf32>
    %132 = tpu.matmul %130, %131, %cst_52 {dimension_numbers = #tpu.dot_dimension_numbers<[1], [0], [0], [1], [0, 0, 1, 1], [], []>} : vector<32x192xbf16>, vector<192x768xbf16>, vector<32x768xf32> -> vector<32x768xf32>
    %c0_53 = arith.constant 0 : index
    %c0_54 = arith.constant 0 : index
    %133 = vector.load %arg12[%c0_53, %c0_54] : memref<1x768xf32, #tpu.memory_space<vmem>>, vector<1x768xf32>
    %134 = vector.shape_cast %133 : vector<1x768xf32> to vector<768xf32>
    %135 = vector.shape_cast %134 : vector<768xf32> to vector<1x768xf32>
    %136 = vector.broadcast %135 : vector<1x768xf32> to vector<32x768xf32>
    %137 = arith.addf %132, %136 : vector<32x768xf32>
    %cst_55 = arith.constant 0.000000e+00 : f32
    %138 = vector.broadcast %cst_55 : f32 to vector<32x768xf32>
    %139 = arith.maximumf %137, %138 : vector<32x768xf32>
    %140 = arith.truncf %139 : vector<32x768xf32> to vector<32x768xbf16>
    %c0_56 = arith.constant 0 : index
    %c0_57 = arith.constant 0 : index
    %141 = vector.load %arg13[%c0_56, %c0_57] : memref<768x192xbf16, #tpu.memory_space<vmem>>, vector<768x192xbf16>
    %cst_58 = arith.constant dense<0.000000e+00> : vector<32x192xf32>
    %142 = tpu.matmul %140, %141, %cst_58 {dimension_numbers = #tpu.dot_dimension_numbers<[1], [0], [0], [1], [0, 0, 1, 1], [], []>} : vector<32x768xbf16>, vector<768x192xbf16>, vector<32x192xf32> -> vector<32x192xf32>
    %c0_59 = arith.constant 0 : index
    %c0_60 = arith.constant 0 : index
    %143 = vector.load %arg14[%c0_59, %c0_60] : memref<1x192xf32, #tpu.memory_space<vmem>>, vector<1x192xf32>
    %144 = vector.shape_cast %143 : vector<1x192xf32> to vector<192xf32>
    %145 = vector.shape_cast %144 : vector<192xf32> to vector<1x192xf32>
    %146 = vector.broadcast %145 : vector<1x192xf32> to vector<32x192xf32>
    %147 = arith.addf %142, %146 : vector<32x192xf32>
    %148 = arith.addf %101, %147 : vector<32x192xf32>
    %149 = vector.shape_cast %148 : vector<32x192xf32> to vector<2x16x192xf32>
    %c0_61 = arith.constant 0 : index
    %c0_62 = arith.constant 0 : index
    %c0_63 = arith.constant 0 : index
    %150 = vector.load %arg15[%c0_61, %c0_62, %c0_63] : memref<2x16x192xf32, #tpu.memory_space<vmem>>, vector<2x16x192xf32>
    tpu.vector_store %arg15[%c0_61, %c0_62, %c0_63], %149 {strides = array<i32>} : memref<2x16x192xf32, #tpu.memory_space<vmem>>, vector<2x16x192xf32>,
    return
  }
  func.func @transform_0(%arg0: i32) -> (i32, i32, i32) {
    %c0_i32 = arith.constant 0 : i32
    %c0_i32_0 = arith.constant 0 : i32
    %c0_i32_1 = arith.constant 0 : i32
    return %arg0, %c0_i32, %c0_i32_0 : i32, i32, i32
  }
  func.func @transform_1(%arg0: i32) -> (i32, i32) {
    %c0_i32 = arith.constant 0 : i32
    %c0_i32_0 = arith.constant 0 : i32
    %c0_i32_1 = arith.constant 0 : i32
    return %c0_i32, %c0_i32_0 : i32, i32
  }
  func.func @transform_2(%arg0: i32) -> (i32, i32) {
    %c0_i32 = arith.constant 0 : i32
    %c0_i32_0 = arith.constant 0 : i32
    %c0_i32_1 = arith.constant 0 : i32
    return %c0_i32, %c0_i32_0 : i32, i32
  }
  func.func @transform_3(%arg0: i32) -> (i32, i32, i32) {
    %c0_i32 = arith.constant 0 : i32
    %c0_i32_0 = arith.constant 0 : i32
    %c0_i32_1 = arith.constant 0 : i32
    %c0_i32_2 = arith.constant 0 : i32
    return %c0_i32, %c0_i32_0, %c0_i32_1 : i32, i32, i32
  }
  func.func @transform_4(%arg0: i32) -> (i32, i32, i32) {
    %c0_i32 = arith.constant 0 : i32
    %c0_i32_0 = arith.constant 0 : i32
    %c0_i32_1 = arith.constant 0 : i32
    %c0_i32_2 = arith.constant 0 : i32
    return %c0_i32, %c0_i32_0, %c0_i32_1 : i32, i32, i32
  }
  func.func @transform_5(%arg0: i32) -> (i32, i32, i32) {
    %c0_i32 = arith.constant 0 : i32
    %c0_i32_0 = arith.constant 0 : i32
    %c0_i32_1 = arith.constant 0 : i32
    %c0_i32_2 = arith.constant 0 : i32
    return %c0_i32, %c0_i32_0, %c0_i32_1 : i32, i32, i32
  }
  func.func @transform_6(%arg0: i32) -> (i32, i32, i32) {
    %c0_i32 = arith.constant 0 : i32
    %c0_i32_0 = arith.constant 0 : i32
    %c0_i32_1 = arith.constant 0 : i32
    %c0_i32_2 = arith.constant 0 : i32
    return %c0_i32, %c0_i32_0, %c0_i32_1 : i32, i32, i32
  }
  func.func @transform_7(%arg0: i32) -> (i32, i32) {
    %c0_i32 = arith.constant 0 : i32
    %c0_i32_0 = arith.constant 0 : i32
    %c0_i32_1 = arith.constant 0 : i32
    return %c0_i32, %c0_i32_0 : i32, i32
  }
  func.func @transform_8(%arg0: i32) -> (i32, i32) {
    %c0_i32 = arith.constant 0 : i32
    %c0_i32_0 = arith.constant 0 : i32
    %c0_i32_1 = arith.constant 0 : i32
    return %c0_i32, %c0_i32_0 : i32, i32
  }
  func.func @transform_9(%arg0: i32) -> (i32, i32) {
    %c0_i32 = arith.constant 0 : i32
    %c0_i32_0 = arith.constant 0 : i32
    %c0_i32_1 = arith.constant 0 : i32
    return %c0_i32, %c0_i32_0 : i32, i32
  }
  func.func @transform_10(%arg0: i32) -> (i32, i32) {
    %c0_i32 = arith.constant 0 : i32
    %c0_i32_0 = arith.constant 0 : i32
    %c0_i32_1 = arith.constant 0 : i32
    return %c0_i32, %c0_i32_0 : i32, i32
  }
  func.func @transform_11(%arg0: i32) -> (i32, i32) {
    %c0_i32 = arith.constant 0 : i32
    %c0_i32_0 = arith.constant 0 : i32
    %c0_i32_1 = arith.constant 0 : i32
    return %c0_i32, %c0_i32_0 : i32, i32
  }
  func.func @transform_12(%arg0: i32) -> (i32, i32) {
    %c0_i32 = arith.constant 0 : i32
    %c0_i32_0 = arith.constant 0 : i32
    %c0_i32_1 = arith.constant 0 : i32
    return %c0_i32, %c0_i32_0 : i32, i32
  }
  func.func @transform_13(%arg0: i32) -> (i32, i32) {
    %c0_i32 = arith.constant 0 : i32
    %c0_i32_0 = arith.constant 0 : i32
    %c0_i32_1 = arith.constant 0 : i32
    return %c0_i32, %c0_i32_0 : i32, i32
  }
  func.func @transform_14(%arg0: i32) -> (i32, i32, i32) {
    %c0_i32 = arith.constant 0 : i32
    %c0_i32_0 = arith.constant 0 : i32
    %c0_i32_1 = arith.constant 0 : i32
    return %arg0, %c0_i32, %c0_i32_0 : i32, i32, i32
  }
}

</mosaic_0001>

<llo_original>
// kernel: transformer_block.1
$region0: #{transformer_block.1}
  #allocation0 [shape = 'u32[]', space=smem, size = 0x4, offset = 0x4, fixed_abs, tag = 'smem constant byte address 0x4 - core index']
  #allocation1 [shape = 'u32[72,128]{1,0:T(1,128)}', space=vmem, size = 0x9000, scoped, tag = 'internal scratch']
  %s0 = inlined_call_operand.vmem [shape: f32[4,16,192], index: 0, kind: input, shape index: {}]
  %s1 = inlined_call_operand.vmem [shape: f32[1,192], index: 1, kind: input, shape index: {}]
  %s2 = inlined_call_operand.vmem [shape: f32[1,192], index: 2, kind: input, shape index: {}]
  %s3 = inlined_call_operand.vmem [shape: bf16[6,192,32], index: 3, kind: input, shape index: {}]
  %s4 = inlined_call_operand.vmem [shape: bf16[6,192,32], index: 4, kind: input, shape index: {}]
  %s5 = inlined_call_operand.vmem [shape: bf16[6,192,32], index: 5, kind: input, shape index: {}]
  %s6 = inlined_call_operand.vmem [shape: bf16[6,32,192], index: 6, kind: input, shape index: {}]
  %s7 = inlined_call_operand.vmem [shape: f32[1,192], index: 7, kind: input, shape index: {}]
  %s8 = inlined_call_operand.vmem [shape: f32[1,192], index: 8, kind: input, shape index: {}]
  %s9 = inlined_call_operand.vmem [shape: f32[1,192], index: 9, kind: input, shape index: {}]
  %s10 = inlined_call_operand.vmem [shape: bf16[192,768], index: 10, kind: input, shape index: {}]
  %s11 = inlined_call_operand.vmem [shape: f32[1,768], index: 11, kind: input, shape index: {}]
  %s12 = inlined_call_operand.vmem [shape: bf16[768,192], index: 12, kind: input, shape index: {}]
  %s13 = inlined_call_operand.vmem [shape: f32[1,192], index: 13, kind: input, shape index: {}]
  %s14 = inlined_call_operand.hbm [shape: f32[4,16,192], index: 14, kind: output, shape index: {}]
  %s15 = sld [smem:[#allocation0]]
  $region89: #{transformer_block.1} parent=0
    _
  %s17 = ssub.s32 1, %s15
  %s18 = scalar_select 0, %s17, %s15
  $region1: #{transformer_block.1} parent=0
    #allocation2 [shape = 'u8[65536]{0}', space=vmem, size = 0x10000, scoped, tag = 'output window, operand 0']
    #allocation3 [shape = 's32[2]{0}', space=sflag, size = 0x8, scoped, tag = 'scoped memory for transformer_block.1']
    %19 = vsyncpa [#allocation3], 0
    %s20 = scalar_lea.sflag [#allocation3], 1
    %21 = vsyncpa %s20, 0
    loop: start=0, step=1, limit=4
    $region2: #{transformer_block.1} parent=1 // loop_pre_header
      _
    $region3: #{transformer_block.1} parent=1 // loop_header
      %s23 = sphi 0, %s27
      %p24 = scmp.ge.s32.totalorder %s23, 4
      %s33 = sphi 0, %s35
      %s36 = sphi 0, %s33
      %s37 = sphi 0, %s36
      %s53 = sphi 0, %s37
      %s57 = sphi 0, %s57
      %s59 = sphi 0, %s57
      %s60 = sphi 0, %s59
      %s74 = sphi 0, %s60
      %s78 = sphi 0, %s78
      %s80 = sphi 0, %s78
      %s81 = sphi 0, %s80
      %s95 = sphi 0, %s81
      %s99 = sphi 0, %s99
      %s101 = sphi 0, %s99
      %s102 = sphi 0, %s101
      %s116 = sphi 0, %s102
      %s120 = sphi 0, %s120
      %s122 = sphi 0, %s120
      %s123 = sphi 0, %s122
      %s137 = sphi 0, %s123
      %s141 = sphi 0, %s141
      %s143 = sphi 0, %s141
      %s144 = sphi 0, %s143
      %s158 = sphi 0, %s144
      %s162 = sphi 0, %s162
      %s164 = sphi 0, %s162
      %s165 = sphi 0, %s164
      %s179 = sphi 0, %s165
      %s183 = sphi 0, %s183
      %s185 = sphi 0, %s183
      %s186 = sphi 0, %s185
      %s200 = sphi 0, %s186
      %s204 = sphi 0, %s204
      %s206 = sphi 0, %s204
      %s207 = sphi 0, %s206
      %s221 = sphi 0, %s207
      %s225 = sphi 0, %s225
      %s227 = sphi 0, %s225
      %s228 = sphi 0, %s227
      %s242 = sphi 0, %s228
      %s246 = sphi 0, %s246
      %s248 = sphi 0, %s246
      %s249 = sphi 0, %s248
      %s263 = sphi 0, %s249
      %s267 = sphi 0, %s267
      %s269 = sphi 0, %s267
      %s270 = sphi 0, %s269
      %s284 = sphi 0, %s270
      %s288 = sphi 0, %s288
      %s290 = sphi 0, %s288
      %s291 = sphi 0, %s290
      %s305 = sphi 0, %s291
      %s309 = sphi 0, %s309
      %s311 = sphi 0, %s309
      %s312 = sphi 0, %s311
      %s326 = sphi 0, %s312
      %s332 = sphi 0, %s334
      %s335 = sphi 0, %s332
      %s336 = sphi 0, %s335
      %s352 = sphi 0, %s336
    $region4: #{transformer_block.1} parent=1 // loop_header_branch
      %26 = sbr.rel (%p24) target = $region8
    $region5: #{transformer_block.1} parent=1 // loop_body
      %s28 = ssub.s32 %s23, 1
      %s29 = ssub.s32 %s23, 2
      %s30 = sadd.s32 %s23, 1
      %s31 = ssub.s32 %s23, %s30
      %p32 = scmp.eq.s32.totalorder %s31, 0
      %s34 = sadd.s32 %s33, 1
      %s35 = scalar_select %p32, %s33, %s34
      %p38 = pneg %p32
      %p39 = scmp.eq.s32.totalorder %s23, 1
      %p40 = por %p38, %p39
      %p41 = scmp.ne.s32.totalorder %s33, %s36
      %p42 = scmp.eq.s32.totalorder %s23, 0
      %p43 = por %p41, %p42
      %p44 = scmp.ne.s32.totalorder %s33, %s36
      %p45 = scmp.eq.s32.totalorder %s28, 1
      %p46 = por %p44, %p45
      %p47 = scmp.ne.s32.totalorder %s36, %s37
      %p48 = scmp.eq.s32.totalorder %s28, 0
      %p49 = por %p47, %p48
      %p50 = scmp.ne.s32.totalorder %s36, %s37
      %p51 = scmp.eq.s32.totalorder %s29, 1
      %p52 = por %p50, %p51
      %p54 = scmp.ne.s32.totalorder %s37, %s53
      %p55 = scmp.eq.s32.totalorder %s29, 0
      %p56 = por %p54, %p55
      %s58 = sadd.s32 %s57, 1
      %p61 = scmp.eq.s32.totalorder %s23, 1
      %p62 = scmp.ne.s32.totalorder %s57, %s59
      %p63 = scmp.eq.s32.totalorder %s23, 0
      %p64 = por %p62, %p63
      %p65 = scmp.ne.s32.totalorder %s57, %s59
      %p66 = scmp.eq.s32.totalorder %s28, 1
      %p67 = por %p65, %p66
      %p68 = scmp.ne.s32.totalorder %s59, %s60
      %p69 = scmp.eq.s32.totalorder %s28, 0
      %p70 = por %p68, %p69
      %p71 = scmp.ne.s32.totalorder %s59, %s60
      %p72 = scmp.eq.s32.totalorder %s29, 1
      %p73 = por %p71, %p72
      %p75 = scmp.ne.s32.totalorder %s60, %s74
      %p76 = scmp.eq.s32.totalorder %s29, 0
      %p77 = por %p75, %p76
      %s79 = sadd.s32 %s78, 1
      %p82 = scmp.eq.s32.totalorder %s23, 1
      %p83 = scmp.ne.s32.totalorder %s78, %s80
      %p84 = scmp.eq.s32.totalorder %s23, 0
      %p85 = por %p83, %p84
      %p86 = scmp.ne.s32.totalorder %s78, %s80
      %p87 = scmp.eq.s32.totalorder %s28, 1
      %p88 = por %p86, %p87
      %p89 = scmp.ne.s32.totalorder %s80, %s81
      %p90 = scmp.eq.s32.totalorder %s28, 0
      %p91 = por %p89, %p90
      %p92 = scmp.ne.s32.totalorder %s80, %s81
      %p93 = scmp.eq.s32.totalorder %s29, 1
      %p94 = por %p92, %p93
      %p96 = scmp.ne.s32.totalorder %s81, %s95
      %p97 = scmp.eq.s32.totalorder %s29, 0
      %p98 = por %p96, %p97
      %s100 = sadd.s32 %s99, 1
      %p103 = scmp.eq.s32.totalorder %s23, 1
      %p104 = scmp.ne.s32.totalorder %s99, %s101
      %p105 = scmp.eq.s32.totalorder %s23, 0
      %p106 = por %p104, %p105
      %p107 = scmp.ne.s32.totalorder %s99, %s101
      %p108 = scmp.eq.s32.totalorder %s28, 1
      %p109 = por %p107, %p108
      %p110 = scmp.ne.s32.totalorder %s101, %s102
      %p111 = scmp.eq.s32.totalorder %s28, 0
      %p112 = por %p110, %p111
      %p113 = scmp.ne.s32.totalorder %s101, %s102
      %p114 = scmp.eq.s32.totalorder %s29, 1
      %p115 = por %p113, %p114
      %p117 = scmp.ne.s32.totalorder %s102, %s116
      %p118 = scmp.eq.s32.totalorder %s29, 0
      %p119 = por %p117, %p118
      %s121 = sadd.s32 %s120, 1
      %p124 = scmp.eq.s32.totalorder %s23, 1
      %p125 = scmp.ne.s32.totalorder %s120, %s122
      %p126 = scmp.eq.s32.totalorder %s23, 0
      %p127 = por %p125, %p126
      %p128 = scmp.ne.s32.totalorder %s120, %s122
      %p129 = scmp.eq.s32.totalorder %s28, 1
      %p130 = por %p128, %p129
      %p131 = scmp.ne.s32.totalorder %s122, %s123
      %p132 = scmp.eq.s32.totalorder %s28, 0
      %p133 = por %p131, %p132
      %p134 = scmp.ne.s32.totalorder %s122, %s123
      %p135 = scmp.eq.s32.totalorder %s29, 1
      %p136 = por %p134, %p135
      %p138 = scmp.ne.s32.totalorder %s123, %s137
      %p139 = scmp.eq.s32.totalorder %s29, 0
      %p140 = por %p138, %p139
      %s142 = sadd.s32 %s141, 1
      %p145 = scmp.eq.s32.totalorder %s23, 1
      %p146 = scmp.ne.s32.totalorder %s141, %s143
      %p147 = scmp.eq.s32.totalorder %s23, 0
      %p148 = por %p146, %p147
      %p149 = scmp.ne.s32.totalorder %s141, %s143
      %p150 = scmp.eq.s32.totalorder %s28, 1
      %p151 = por %p149, %p150
      %p152 = scmp.ne.s32.totalorder %s143, %s144
      %p153 = scmp.eq.s32.totalorder %s28, 0
      %p154 = por %p152, %p153
      %p155 = scmp.ne.s32.totalorder %s143, %s144
      %p156 = scmp.eq.s32.totalorder %s29, 1
      %p157 = por %p155, %p156
      %p159 = scmp.ne.s32.totalorder %s144, %s158
      %p160 = scmp.eq.s32.totalorder %s29, 0
      %p161 = por %p159, %p160
      %s163 = sadd.s32 %s162, 1
      %p166 = scmp.eq.s32.totalorder %s23, 1
      %p167 = scmp.ne.s32.totalorder %s162, %s164
      %p168 = scmp.eq.s32.totalorder %s23, 0
      %p169 = por %p167, %p168
      %p170 = scmp.ne.s32.totalorder %s162, %s164
      %p171 = scmp.eq.s32.totalorder %s28, 1
      %p172 = por %p170, %p171
      %p173 = scmp.ne.s32.totalorder %s164, %s165
      %p174 = scmp.eq.s32.totalorder %s28, 0
      %p175 = por %p173, %p174
      %p176 = scmp.ne.s32.totalorder %s164, %s165
      %p177 = scmp.eq.s32.totalorder %s29, 1
      %p178 = por %p176, %p177
      %p180 = scmp.ne.s32.totalorder %s165, %s179
      %p181 = scmp.eq.s32.totalorder %s29, 0
      %p182 = por %p180, %p181
      %s184 = sadd.s32 %s183, 1
      %p187 = scmp.eq.s32.totalorder %s23, 1
      %p188 = scmp.ne.s32.totalorder %s183, %s185
      %p189 = scmp.eq.s32.totalorder %s23, 0
      %p190 = por %p188, %p189
      %p191 = scmp.ne.s32.totalorder %s183, %s185
      %p192 = scmp.eq.s32.totalorder %s28, 1
      %p193 = por %p191, %p192
      %p194 = scmp.ne.s32.totalorder %s185, %s186
      %p195 = scmp.eq.s32.totalorder %s28, 0
      %p196 = por %p194, %p195
      %p197 = scmp.ne.s32.totalorder %s185, %s186
      %p198 = scmp.eq.s32.totalorder %s29, 1
      %p199 = por %p197, %p198
      %p201 = scmp.ne.s32.totalorder %s186, %s200
      %p202 = scmp.eq.s32.totalorder %s29, 0
      %p203 = por %p201, %p202
      %s205 = sadd.s32 %s204, 1
      %p208 = scmp.eq.s32.totalorder %s23, 1
      %p209 = scmp.ne.s32.totalorder %s204, %s206
      %p210 = scmp.eq.s32.totalorder %s23, 0
      %p211 = por %p209, %p210
      %p212 = scmp.ne.s32.totalorder %s204, %s206
      %p213 = scmp.eq.s32.totalorder %s28, 1
      %p214 = por %p212, %p213
      %p215 = scmp.ne.s32.totalorder %s206, %s207
      %p216 = scmp.eq.s32.totalorder %s28, 0
      %p217 = por %p215, %p216
      %p218 = scmp.ne.s32.totalorder %s206, %s207
      %p219 = scmp.eq.s32.totalorder %s29, 1
      %p220 = por %p218, %p219
      %p222 = scmp.ne.s32.totalorder %s207, %s221
      %p223 = scmp.eq.s32.totalorder %s29, 0
      %p224 = por %p222, %p223
      %s226 = sadd.s32 %s225, 1
      %p229 = scmp.eq.s32.totalorder %s23, 1
      %p230 = scmp.ne.s32.totalorder %s225, %s227
      %p231 = scmp.eq.s32.totalorder %s23, 0
      %p232 = por %p230, %p231
      %p233 = scmp.ne.s32.totalorder %s225, %s227
      %p234 = scmp.eq.s32.totalorder %s28, 1
      %p235 = por %p233, %p234
      %p236 = scmp.ne.s32.totalorder %s227, %s228
      %p237 = scmp.eq.s32.totalorder %s28, 0
      %p238 = por %p236, %p237
      %p239 = scmp.ne.s32.totalorder %s227, %s228
      %p240 = scmp.eq.s32.totalorder %s29, 1
      %p241 = por %p239, %p240
      %p243 = scmp.ne.s32.totalorder %s228, %s242
      %p244 = scmp.eq.s32.totalorder %s29, 0
      %p245 = por %p243, %p244
      %s247 = sadd.s32 %s246, 1
      %p250 = scmp.eq.s32.totalorder %s23, 1
      %p251 = scmp.ne.s32.totalorder %s246, %s248
      %p252 = scmp.eq.s32.totalorder %s23, 0
      %p253 = por %p251, %p252
      %p254 = scmp.ne.s32.totalorder %s246, %s248
      %p255 = scmp.eq.s32.totalorder %s28, 1
      %p256 = por %p254, %p255
      %p257 = scmp.ne.s32.totalorder %s248, %s249
      %p258 = scmp.eq.s32.totalorder %s28, 0
      %p259 = por %p257, %p258
      %p260 = scmp.ne.s32.totalorder %s248, %s249
      %p261 = scmp.eq.s32.totalorder %s29, 1
      %p262 = por %p260, %p261
      %p264 = scmp.ne.s32.totalorder %s249, %s263
      %p265 = scmp.eq.s32.totalorder %s29, 0
      %p266 = por %p264, %p265
      %s268 = sadd.s32 %s267, 1
      %p271 = scmp.eq.s32.totalorder %s23, 1
      %p272 = scmp.ne.s32.totalorder %s267, %s269
      %p273 = scmp.eq.s32.totalorder %s23, 0
      %p274 = por %p272, %p273
      %p275 = scmp.ne.s32.totalorder %s267, %s269
      %p276 = scmp.eq.s32.totalorder %s28, 1
      %p277 = por %p275, %p276
      %p278 = scmp.ne.s32.totalorder %s269, %s270
      %p279 = scmp.eq.s32.totalorder %s28, 0
      %p280 = por %p278, %p279
      %p281 = scmp.ne.s32.totalorder %s269, %s270
      %p282 = scmp.eq.s32.totalorder %s29, 1
      %p283 = por %p281, %p282
      %p285 = scmp.ne.s32.totalorder %s270, %s284
      %p286 = scmp.eq.s32.totalorder %s29, 0
      %p287 = por %p285, %p286
      %s289 = sadd.s32 %s288, 1
      %p292 = scmp.eq.s32.totalorder %s23, 1
      %p293 = scmp.ne.s32.totalorder %s288, %s290
      %p294 = scmp.eq.s32.totalorder %s23, 0
      %p295 = por %p293, %p294
      %p296 = scmp.ne.s32.totalorder %s288, %s290
      %p297 = scmp.eq.s32.totalorder %s28, 1
      %p298 = por %p296, %p297
      %p299 = scmp.ne.s32.totalorder %s290, %s291
      %p300 = scmp.eq.s32.totalorder %s28, 0
      %p301 = por %p299, %p300
      %p302 = scmp.ne.s32.totalorder %s290, %s291
      %p303 = scmp.eq.s32.totalorder %s29, 1
      %p304 = por %p302, %p303
      %p306 = scmp.ne.s32.totalorder %s291, %s305
      %p307 = scmp.eq.s32.totalorder %s29, 0
      %p308 = por %p306, %p307
      %s310 = sadd.s32 %s309, 1
      %p313 = scmp.eq.s32.totalorder %s23, 1
      %p314 = scmp.ne.s32.totalorder %s309, %s311
      %p315 = scmp.eq.s32.totalorder %s23, 0
      %p316 = por %p314, %p315
      %p317 = scmp.ne.s32.totalorder %s309, %s311
      %p318 = scmp.eq.s32.totalorder %s28, 1
      %p319 = por %p317, %p318
      %p320 = scmp.ne.s32.totalorder %s311, %s312
      %p321 = scmp.eq.s32.totalorder %s28, 0
      %p322 = por %p320, %p321
      %p323 = scmp.ne.s32.totalorder %s311, %s312
      %p324 = scmp.eq.s32.totalorder %s29, 1
      %p325 = por %p323, %p324
      %p327 = scmp.ne.s32.totalorder %s312, %s326
      %p328 = scmp.eq.s32.totalorder %s29, 0
      %p329 = por %p327, %p328
      %s330 = ssub.s32 %s23, %s30
      %p331 = scmp.eq.s32.totalorder %s330, 0
      %s333 = sadd.s32 %s332, 1
      %s334 = scalar_select %p331, %s332, %s333
      %p337 = pneg %p331
      %p338 = scmp.eq.s32.totalorder %s23, 1
      %p339 = por %p337, %p338
      %p340 = scmp.ne.s32.totalorder %s332, %s335
      %p341 = scmp.eq.s32.totalorder %s23, 0
      %p342 = por %p340, %p341
      %p343 = scmp.ne.s32.totalorder %s332, %s335
      %p344 = scmp.eq.s32.totalorder %s28, 1
      %p345 = por %p343, %p344
      %p346 = scmp.ne.s32.totalorder %s335, %s336
      %p347 = scmp.eq.s32.totalorder %s28, 0
      %p348 = por %p346, %p347
      %p349 = scmp.ne.s32.totalorder %s335, %s336
      %p350 = scmp.eq.s32.totalorder %s29, 1
      %p351 = por %p349, %p350
      %p353 = scmp.ne.s32.totalorder %s336, %s352
      %p354 = scmp.eq.s32.totalorder %s29, 0
      %p355 = por %p353, %p354
      %p356 = scmp.le.s32.totalorder 1, %s23
      %p357 = scmp.lt.s32.totalorder %s23, 3
      %p358 = pnand %p356, %p357
      %p359 = pneg %p358
      // Predicated region
      $region9: #{transformer_block.1} parent=5 // pred_check
        _
      $region10: #{transformer_block.1} parent=5 // pred_check_branch
        %361 = sbr.rel (%p358) target = $region12
      $region11: #{transformer_block.1} parent=5 // pred_region
        %s362 = ssub.s32 %s23, 1
        // Predicated region
        $region13: #{transformer_block.1} parent=11 // pred_check
          %p363 = pneg %p70
        $region14: #{transformer_block.1} parent=11 // pred_check_branch
          %365 = sbr.rel (%p363) target = $region16
        $region15: #{transformer_block.1} parent=11 // pred_region
          _
        $region16: #{transformer_block.1} parent=11 // pred_fallthru
          _
        // Predicated region
        $region17: #{transformer_block.1} parent=11 // pred_check
          %p366 = pneg %p91
        $region18: #{transformer_block.1} parent=11 // pred_check_branch
          %368 = sbr.rel (%p366) target = $region20
        $region19: #{transformer_block.1} parent=11 // pred_region
          _
        $region20: #{transformer_block.1} parent=11 // pred_fallthru
          _
        // Predicated region
        $region21: #{transformer_block.1} parent=11 // pred_check
          %p369 = pneg %p112
        $region22: #{transformer_block.1} parent=11 // pred_check_branch
          %371 = sbr.rel (%p369) target = $region24
        $region23: #{transformer_block.1} parent=11 // pred_region
          _
        $region24: #{transformer_block.1} parent=11 // pred_fallthru
          _
        // Predicated region
        $region25: #{transformer_block.1} parent=11 // pred_check
          %p372 = pneg %p133
        $region26: #{transformer_block.1} parent=11 // pred_check_branch
          %374 = sbr.rel (%p372) target = $region28
        $region27: #{transformer_block.1} parent=11 // pred_region
          _
        $region28: #{transformer_block.1} parent=11 // pred_fallthru
          _
        // Predicated region
        $region29: #{transformer_block.1} parent=11 // pred_check
          %p375 = pneg %p154
        $region30: #{transformer_block.1} parent=11 // pred_check_branch
          %377 = sbr.rel (%p375) target = $region32
        $region31: #{transformer_block.1} parent=11 // pred_region
          _
        $region32: #{transformer_block.1} parent=11 // pred_fallthru
          _
        // Predicated region
        $region33: #{transformer_block.1} parent=11 // pred_check
          %p378 = pneg %p175
        $region34: #{transformer_block.1} parent=11 // pred_check_branch
          %380 = sbr.rel (%p378) target = $region36
        $region35: #{transformer_block.1} parent=11 // pred_region
          _
        $region36: #{transformer_block.1} parent=11 // pred_fallthru
          _
        // Predicated region
        $region37: #{transformer_block.1} parent=11 // pred_check
          %p381 = pneg %p196
        $region38: #{transformer_block.1} parent=11 // pred_check_branch
          %383 = sbr.rel (%p381) target = $region40
        $region39: #{transformer_block.1} parent=11 // pred_region
          _
        $region40: #{transformer_block.1} parent=11 // pred_fallthru
          _
        // Predicated region
        $region41: #{transformer_block.1} parent=11 // pred_check
          %p384 = pneg %p217
        $region42: #{transformer_block.1} parent=11 // pred_check_branch
          %386 = sbr.rel (%p384) target = $region44
        $region43: #{transformer_block.1} parent=11 // pred_region
          _
        $region44: #{transformer_block.1} parent=11 // pred_fallthru
          _
        // Predicated region
        $region45: #{transformer_block.1} parent=11 // pred_check
          %p387 = pneg %p238
        $region46: #{transformer_block.1} parent=11 // pred_check_branch
          %389 = sbr.rel (%p387) target = $region48
        $region47: #{transformer_block.1} parent=11 // pred_region
          _
        $region48: #{transformer_block.1} parent=11 // pred_fallthru
          _
        // Predicated region
        $region49: #{transformer_block.1} parent=11 // pred_check
          %p390 = pneg %p259
        $region50: #{transformer_block.1} parent=11 // pred_check_branch
          %392 = sbr.rel (%p390) target = $region52
        $region51: #{transformer_block.1} parent=11 // pred_region
          _
        $region52: #{transformer_block.1} parent=11 // pred_fallthru
          _
        // Predicated region
        $region53: #{transformer_block.1} parent=11 // pred_check
          %p393 = pneg %p280
        $region54: #{transformer_block.1} parent=11 // pred_check_branch
          %395 = sbr.rel (%p393) target = $region56
        $region55: #{transformer_block.1} parent=11 // pred_region
          _
        $region56: #{transformer_block.1} parent=11 // pred_fallthru
          _
        // Predicated region
        $region57: #{transformer_block.1} parent=11 // pred_check
          %p396 = pneg %p301
        $region58: #{transformer_block.1} parent=11 // pred_check_branch
          %398 = sbr.rel (%p396) target = $region60
        $region59: #{transformer_block.1} parent=11 // pred_region
          _
        $region60: #{transformer_block.1} parent=11 // pred_fallthru
          _
        // Predicated region
        $region61: #{transformer_block.1} parent=11 // pred_check
          %p399 = pneg %p322
        $region62: #{transformer_block.1} parent=11 // pred_check_branch
          %401 = sbr.rel (%p399) target = $region64
        $region63: #{transformer_block.1} parent=11 // pred_region
          _
        $region64: #{transformer_block.1} parent=11 // pred_fallthru
          _
      $region12: #{transformer_block.1} parent=5 // pred_fallthru
        _
      %p402 = scmp.lt.s32.totalorder %s23, 2
      // Predicated region
      $region65: #{transformer_block.1} parent=5 // pred_check
        %p403 = pneg %p402
      $region66: #{transformer_block.1} parent=5 // pred_check_branch
        %405 = sbr.rel (%p403) target = $region68
      $region67: #{transformer_block.1} parent=5 // pred_region
        // Predicated region
        $region69: #{transformer_block.1} parent=67 // pred_check
          %p406 = pneg %p43
        $region70: #{transformer_block.1} parent=67 // pred_check_branch
          %408 = sbr.rel (%p406) target = $region72
        $region71: #{transformer_block.1} parent=67 // pred_region
          %s409 = smul.u32 2, %s23
          %p410 = scmp.lt.s32.totalorder %s409, 3
          %s411 = scalar_select %p410, %s409, 3
          %s412 = smul.addr %s411, 4
          %s413 = smul.addr %s412, 8
          %s414 = scalar_lea.vmem %s0, %s413
          %s415 = smul.u32 2, %s23
        $region72: #{transformer_block.1} parent=67 // pred_fallthru
          _
      $region68: #{transformer_block.1} parent=5 // pred_fallthru
        _
      %p416 = scmp.le.s32.totalorder 1, %s23
      %p417 = scmp.lt.s32.totalorder %s23, 3
      %p418 = pnand %p416, %p417
      %p419 = pneg %p418
      // Predicated region
      $region73: #{transformer_block.1} parent=5 // pred_check
        _
      $region74: #{transformer_block.1} parent=5 // pred_check_branch
        %421 = sbr.rel (%p418) target = $region76
      $region75: #{transformer_block.1} parent=5 // pred_region
        %s422 = ssub.s32 %s23, 1
        %s423 = smul.u32 2, %s28
        %p424 = scmp.lt.s32.totalorder %s423, 3
        %s425 = scalar_select %p424, %s423, 3
        %s426 = smul.addr %s425, 4
        %s427 = smul.addr %s426, 8
        %s428 = scalar_lea.vmem %s0, %s427
        %p429 = pneg %p49
        %p430 = pneg %p46
        %p431 = pneg %p70
        %p432 = pneg %p67
        %p433 = pneg %p91
        %p434 = pneg %p88
        %p435 = pneg %p112
        %p436 = pneg %p109
        %p437 = pneg %p133
        %p438 = pneg %p130
        %p439 = pneg %p154
        %p440 = pneg %p151
        %p441 = pneg %p175
        %p442 = pneg %p172
        %p443 = pneg %p196
        %p444 = pneg %p193
        %p445 = pneg %p217
        %p446 = pneg %p214
        %p447 = pneg %p238
        %p448 = pneg %p235
        %p449 = pneg %p259
        %p450 = pneg %p256
        %p451 = pneg %p280
        %p452 = pneg %p277
        %p453 = pneg %p301
        %p454 = pneg %p298
        %p455 = pneg %p322
        %p456 = pneg %p319
        %p457 = pneg %p348
        %p458 = pneg %p345
        %s459 = sand.u32 %s335, 1
        %s460 = scalar_lea.sflag [#allocation3], %s459
        %s461 = sand.u32 %s335, 1
        %s462 = smul.addr %s461, 64
        %s463 = scalar_lea.vmem [#allocation2], %s462
        %s464 = smul.u32 2, %s28
        %p465 = scmp.lt.s32.totalorder %s464, 3
        %s466 = scalar_select %p465, %s464, 3
        %s467 = smul.addr %s466, 4
        %s468 = smul.addr %s467, 8
        %s469 = scalar_lea.vmem %s0, %s468
        %s470 = smul.u32 2, %s28
        %s471 = smul.u32 2, %s28
        %v473 = vld [vmem:[%s469] sm:$0xff]
        %v474 = vld [vmem:[%s469 + $0x8] sm:$0xff]
        %v475 = vld [vmem:[%s469 + $0x10] sm:$0xff]
        %v476 = vld [vmem:[%s469 + $0x18] sm:$0xff]
        %v477 = vld [vmem:[%s469 + $0x20] sm:$0xff]
        %v478 = vld [vmem:[%s469 + $0x28] sm:$0xff]
        %v479 = vld [vmem:[%s469 + $0x30] sm:$0xff]
        %v480 = vld [vmem:[%s469 + $0x38] sm:$0xff]
        %v481 = vld [vmem:[%s1] sm:$0x3]
        %v482 = vld [vmem:[%s2] sm:$0x3]
        %vm483 = vcmask 523264
        %v484 = vsel %vm483, %v474, 0.0
        %v485 = vadd.f32 %v473, %v484
        %486 = vadd.xlane.f32.xlu0 %v485
        %v487 = vpop.xlane.xlu0 %486
        %v488 = vsel %vm483, %v476, 0.0
        %v489 = vadd.f32 %v475, %v488
        %490 = vadd.xlane.f32.xlu0 %v489
        %v491 = vpop.xlane.xlu0 %490
        %v492 = vsel %vm483, %v478, 0.0
        %v493 = vadd.f32 %v477, %v492
        %494 = vadd.xlane.f32.xlu0 %v493
        %v495 = vpop.xlane.xlu0 %494
        %v496 = vsel %vm483, %v480, 0.0
        %v497 = vadd.f32 %v479, %v496
        %498 = vadd.xlane.f32.xlu0 %v497
        %v499 = vpop.xlane.xlu0 %498
        %v500 = vrcp.pop 192.0
        %v501 = vmul.f32 192.0, %v500
        %v502 = vsub.f32 1.0, %v501
        %v503 = vmul.f32 %v500, %v502
        %v504 = vadd.f32 %v500, %v503
        %vm505 = vweird.f32 %v500
        %v506 = vsel %vm505, %v500, %v504
        %v507 = vmul.f32 %v487, %v506
        %v508 = vmul.f32 %v491, %v506
        %v509 = vmul.f32 %v495, %v506
        %v510 = vmul.f32 %v499, %v506
        %v511 = vsub.f32 %v473, %v507
        %v512 = vsub.f32 %v474, %v507
        %v513 = vsub.f32 %v475, %v508
        %v514 = vsub.f32 %v476, %v508
        %v515 = vsub.f32 %v477, %v509
        %v516 = vsub.f32 %v478, %v509
        %v517 = vsub.f32 %v479, %v510
        %v518 = vsub.f32 %v480, %v510
        %v519 = vmul.f32 %v511, %v511
        %v520 = vmul.f32 %v512, %v512
        %v521 = vmul.f32 %v513, %v513
        %v522 = vmul.f32 %v514, %v514
        %v523 = vmul.f32 %v515, %v515
        %v524 = vmul.f32 %v516, %v516
        %v525 = vmul.f32 %v517, %v517
        %v526 = vmul.f32 %v518, %v518
        %v527 = vsel %vm483, %v520, 0.0
        %v528 = vadd.f32 %v519, %v527
        %529 = vadd.xlane.f32.xlu0 %v528
        %v530 = vpop.xlane.xlu0 %529
        %v531 = vsel %vm483, %v522, 0.0
        %v532 = vadd.f32 %v521, %v531
        %533 = vadd.xlane.f32.xlu0 %v532
        %v534 = vpop.xlane.xlu0 %533
        %v535 = vsel %vm483, %v524, 0.0
        %v536 = vadd.f32 %v523, %v535
        %537 = vadd.xlane.f32.xlu0 %v536
        %v538 = vpop.xlane.xlu0 %537
        %v539 = vsel %vm483, %v526, 0.0
        %v540 = vadd.f32 %v525, %v539
        %541 = vadd.xlane.f32.xlu0 %v540
        %v542 = vpop.xlane.xlu0 %541
        %v543 = vmul.f32 %v530, %v506
        %v544 = vmul.f32 %v534, %v506
        %v545 = vmul.f32 %v538, %v506
        %v546 = vmul.f32 %v542, %v506
        %v547 = vadd.f32 %v543, 1e-05
        %v548 = vadd.f32 %v544, 1e-05
        %v549 = vadd.f32 %v545, 1e-05
        %v550 = vadd.f32 %v546, 1e-05
        %v551 = vrsqrt.pop %v547
        %v552 = vmul.f32 %v551, %v547
        %v553 = vmul.f32 %v552, %v551
        %v554 = vmul.f32 0.5, %v553
        %v555 = vsub.f32 1.5, %v554
        %v556 = vmul.f32 %v551, %v555
        %vm557 = vweird.f32 %v547
        %vm558 = vweird.f32 %v551
        %vm559 = vmor %vm557, %vm558
        %v560 = vsel %vm559, %v551, %v556
        %v561 = vrsqrt.pop %v548
        %v562 = vmul.f32 %v561, %v548
        %v563 = vmul.f32 %v562, %v561
        %v564 = vmul.f32 0.5, %v563
        %v565 = vsub.f32 1.5, %v564
        %v566 = vmul.f32 %v561, %v565
        %vm567 = vweird.f32 %v548
        %vm568 = vweird.f32 %v561
        %vm569 = vmor %vm567, %vm568
        %v570 = vsel %vm569, %v561, %v566
        %v571 = vrsqrt.pop %v549
        %v572 = vmul.f32 %v571, %v549
        %v573 = vmul.f32 %v572, %v571
        %v574 = vmul.f32 0.5, %v573
        %v575 = vsub.f32 1.5, %v574
        %v576 = vmul.f32 %v571, %v575
        %vm577 = vweird.f32 %v549
        %vm578 = vweird.f32 %v571
        %vm579 = vmor %vm577, %vm578
        %v580 = vsel %vm579, %v571, %v576
        %v581 = vrsqrt.pop %v550
        %v582 = vmul.f32 %v581, %v550
        %v583 = vmul.f32 %v582, %v581
        %v584 = vmul.f32 0.5, %v583
        %v585 = vsub.f32 1.5, %v584
        %v586 = vmul.f32 %v581, %v585
        %vm587 = vweird.f32 %v550
        %vm588 = vweird.f32 %v581
        %vm589 = vmor %vm587, %vm588
        %v590 = vsel %vm589, %v581, %v586
        %v591 = vmul.f32 %v511, %v560
        %v592 = vmul.f32 %v512, %v560
        %v593 = vmul.f32 %v513, %v570
        %v594 = vmul.f32 %v514, %v570
        %v595 = vmul.f32 %v515, %v580
        %v596 = vmul.f32 %v516, %v580
        %v597 = vmul.f32 %v517, %v590
        %v598 = vmul.f32 %v518, %v590
        %v600 = vperm.slane %v481, 0
        %v601 = vperm.slane %v481, 1
        %v604 = vmul.f32 %v591, %v600
        %v605 = vmul.f32 %v592, %v601
        %v606 = vmul.f32 %v593, %v600
        %v607 = vmul.f32 %v594, %v601
        %v608 = vmul.f32 %v595, %v600
        %v609 = vmul.f32 %v596, %v601
        %v610 = vmul.f32 %v597, %v600
        %v611 = vmul.f32 %v598, %v601
        %v613 = vperm.slane %v482, 0
        %v614 = vperm.slane %v482, 1
        %v617 = vadd.f32 %v604, %v613
        %v618 = vadd.f32 %v605, %v614
        %v619 = vadd.f32 %v606, %v613
        %v620 = vadd.f32 %v607, %v614
        %v621 = vadd.f32 %v608, %v613
        %v622 = vadd.f32 %v609, %v614
        %v623 = vadd.f32 %v610, %v613
        %v624 = vadd.f32 %v611, %v614
        %v625 = vpack.c.bf16 %v618, %v617
        %v626 = vpack.c.bf16 %v620, %v619
        %v627 = vpack.c.bf16 %v622, %v621
        %v628 = vpack.c.bf16 %v624, %v623
        %v629 = vld [vmem:[%s3] sm:$0xf]
        %v630 = vld [vmem:[%s3 + $0x4] sm:$0xf]
        %v631 = vld [vmem:[%s3 + $0x8] sm:$0xf]
        %v632 = vld [vmem:[%s3 + $0xc] sm:$0xf]
        %v633 = vld [vmem:[%s3 + $0x10] sm:$0xf]
        %v634 = vld [vmem:[%s3 + $0x14] sm:$0xf]
        %v635 = vld [vmem:[%s3 + $0x18] sm:$0xf]
        %v636 = vld [vmem:[%s3 + $0x1c] sm:$0xf]
        %v637 = vld [vmem:[%s3 + $0x20] sm:$0xf]
        %v638 = vld [vmem:[%s3 + $0x24] sm:$0xf]
        %v639 = vld [vmem:[%s3 + $0x28] sm:$0xf]
        %v640 = vld [vmem:[%s3 + $0x2c] sm:$0xf]
        %v641 = vld [vmem:[%s3 + $0x30] sm:$0xf]
        %v642 = vld [vmem:[%s3 + $0x34] sm:$0xf]
        %v643 = vld [vmem:[%s3 + $0x38] sm:$0xf]
        %v644 = vld [vmem:[%s3 + $0x3c] sm:$0xf]
        %v645 = vld [vmem:[%s3 + $0x40] sm:$0xf]
        %v646 = vld [vmem:[%s3 + $0x44] sm:$0xf]
        %v647 = vld [vmem:[%s3 + $0x48] sm:$0xf]
        %v648 = vld [vmem:[%s3 + $0x4c] sm:$0xf]
        %v649 = vld [vmem:[%s3 + $0x50] sm:$0xf]
        %v650 = vld [vmem:[%s3 + $0x54] sm:$0xf]
        %v651 = vld [vmem:[%s3 + $0x58] sm:$0xf]
        %v652 = vld [vmem:[%s3 + $0x5c] sm:$0xf]
        %v653 = vld [vmem:[%s3 + $0x60] sm:$0xf]
        %v654 = vld [vmem:[%s3 + $0x64] sm:$0xf]
        %v655 = vld [vmem:[%s3 + $0x68] sm:$0xf]
        %v656 = vld [vmem:[%s3 + $0x6c] sm:$0xf]
        %v657 = vld [vmem:[%s3 + $0x70] sm:$0xf]
        %v658 = vld [vmem:[%s3 + $0x74] sm:$0xf]
        %v659 = vld [vmem:[%s3 + $0x78] sm:$0xf]
        %v660 = vld [vmem:[%s3 + $0x7c] sm:$0xf]
        %v661 = vld [vmem:[%s3 + $0x80] sm:$0xf]
        %v662 = vld [vmem:[%s3 + $0x84] sm:$0xf]
        %v663 = vld [vmem:[%s3 + $0x88] sm:$0xf]
        %v664 = vld [vmem:[%s3 + $0x8c] sm:$0xf]
        %v665 = vld [vmem:[%s3 + $0x90] sm:$0xf]
        %v666 = vld [vmem:[%s3 + $0x94] sm:$0xf]
        %v667 = vld [vmem:[%s3 + $0x98] sm:$0xf]
        %v668 = vld [vmem:[%s3 + $0x9c] sm:$0xf]
        %v669 = vld [vmem:[%s3 + $0xa0] sm:$0xf]
        %v670 = vld [vmem:[%s3 + $0xa4] sm:$0xf]
        %v671 = vld [vmem:[%s3 + $0xa8] sm:$0xf]
        %v672 = vld [vmem:[%s3 + $0xac] sm:$0xf]
        %v673 = vld [vmem:[%s3 + $0xb0] sm:$0xf]
        %v674 = vld [vmem:[%s3 + $0xb4] sm:$0xf]
        %v675 = vld [vmem:[%s3 + $0xb8] sm:$0xf]
        %v676 = vld [vmem:[%s3 + $0xbc] sm:$0xf]
        %v677 = vld [vmem:[%s3 + $0xc0] sm:$0xf]
        %v678 = vld [vmem:[%s3 + $0xc4] sm:$0xf]
        %v679 = vld [vmem:[%s3 + $0xc8] sm:$0xf]
        %v680 = vld [vmem:[%s3 + $0xcc] sm:$0xf]
        %v681 = vld [vmem:[%s3 + $0xd0] sm:$0xf]
        %v682 = vld [vmem:[%s3 + $0xd4] sm:$0xf]
        %v683 = vld [vmem:[%s3 + $0xd8] sm:$0xf]
        %v684 = vld [vmem:[%s3 + $0xdc] sm:$0xf]
        %v685 = vld [vmem:[%s3 + $0xe0] sm:$0xf]
        %v686 = vld [vmem:[%s3 + $0xe4] sm:$0xf]
        %v687 = vld [vmem:[%s3 + $0xe8] sm:$0xf]
        %v688 = vld [vmem:[%s3 + $0xec] sm:$0xf]
        %v689 = vld [vmem:[%s3 + $0xf0] sm:$0xf]
        %v690 = vld [vmem:[%s3 + $0xf4] sm:$0xf]
        %v691 = vld [vmem:[%s3 + $0xf8] sm:$0xf]
        %v692 = vld [vmem:[%s3 + $0xfc] sm:$0xf]
        %v693 = vld [vmem:[%s3 + $0x100] sm:$0xf]
        %v694 = vld [vmem:[%s3 + $0x104] sm:$0xf]
        %v695 = vld [vmem:[%s3 + $0x108] sm:$0xf]
        %v696 = vld [vmem:[%s3 + $0x10c] sm:$0xf]
        %v697 = vld [vmem:[%s3 + $0x110] sm:$0xf]
        %v698 = vld [vmem:[%s3 + $0x114] sm:$0xf]
        %v699 = vld [vmem:[%s3 + $0x118] sm:$0xf]
        %v700 = vld [vmem:[%s3 + $0x11c] sm:$0xf]
        %v701 = vld [vmem:[%s3 + $0x120] sm:$0xf]
        %v702 = vld [vmem:[%s3 + $0x124] sm:$0xf]
        %v703 = vld [vmem:[%s3 + $0x128] sm:$0xf]
        %v704 = vld [vmem:[%s3 + $0x12c] sm:$0xf]
        %v705 = vld [vmem:[%s3 + $0x130] sm:$0xf]
        %v706 = vld [vmem:[%s3 + $0x134] sm:$0xf]
        %v707 = vld [vmem:[%s3 + $0x138] sm:$0xf]
        %v708 = vld [vmem:[%s3 + $0x13c] sm:$0xf]
        %v709 = vld [vmem:[%s3 + $0x140] sm:$0xf]
        %v710 = vld [vmem:[%s3 + $0x144] sm:$0xf]
        %v711 = vld [vmem:[%s3 + $0x148] sm:$0xf]
        %v712 = vld [vmem:[%s3 + $0x14c] sm:$0xf]
        %v713 = vld [vmem:[%s3 + $0x150] sm:$0xf]
        %v714 = vld [vmem:[%s3 + $0x154] sm:$0xf]
        %v715 = vld [vmem:[%s3 + $0x158] sm:$0xf]
        %v716 = vld [vmem:[%s3 + $0x15c] sm:$0xf]
        %v717 = vld [vmem:[%s3 + $0x160] sm:$0xf]
        %v718 = vld [vmem:[%s3 + $0x164] sm:$0xf]
        %v719 = vld [vmem:[%s3 + $0x168] sm:$0xf]
        %v720 = vld [vmem:[%s3 + $0x16c] sm:$0xf]
        %v721 = vld [vmem:[%s3 + $0x170] sm:$0xf]
        %v722 = vld [vmem:[%s3 + $0x174] sm:$0xf]
        %v723 = vld [vmem:[%s3 + $0x178] sm:$0xf]
        %v724 = vld [vmem:[%s3 + $0x17c] sm:$0xf]
        %v725 = vld [vmem:[%s3 + $0x180] sm:$0xf]
        %v726 = vld [vmem:[%s3 + $0x184] sm:$0xf]
        %v727 = vld [vmem:[%s3 + $0x188] sm:$0xf]
        %v728 = vld [vmem:[%s3 + $0x18c] sm:$0xf]
        %v729 = vld [vmem:[%s3 + $0x190] sm:$0xf]
        %v730 = vld [vmem:[%s3 + $0x194] sm:$0xf]
        %v731 = vld [vmem:[%s3 + $0x198] sm:$0xf]
        %v732 = vld [vmem:[%s3 + $0x19c] sm:$0xf]
        %v733 = vld [vmem:[%s3 + $0x1a0] sm:$0xf]
        %v734 = vld [vmem:[%s3 + $0x1a4] sm:$0xf]
        %v735 = vld [vmem:[%s3 + $0x1a8] sm:$0xf]
        %v736 = vld [vmem:[%s3 + $0x1ac] sm:$0xf]
        %v737 = vld [vmem:[%s3 + $0x1b0] sm:$0xf]
        %v738 = vld [vmem:[%s3 + $0x1b4] sm:$0xf]
        %v739 = vld [vmem:[%s3 + $0x1b8] sm:$0xf]
        %v740 = vld [vmem:[%s3 + $0x1bc] sm:$0xf]
        %v741 = vld [vmem:[%s3 + $0x1c0] sm:$0xf]
        %v742 = vld [vmem:[%s3 + $0x1c4] sm:$0xf]
        %v743 = vld [vmem:[%s3 + $0x1c8] sm:$0xf]
        %v744 = vld [vmem:[%s3 + $0x1cc] sm:$0xf]
        %v745 = vld [vmem:[%s3 + $0x1d0] sm:$0xf]
        %v746 = vld [vmem:[%s3 + $0x1d4] sm:$0xf]
        %v747 = vld [vmem:[%s3 + $0x1d8] sm:$0xf]
        %v748 = vld [vmem:[%s3 + $0x1dc] sm:$0xf]
        %v749 = vld [vmem:[%s3 + $0x1e0] sm:$0xf]
        %v750 = vld [vmem:[%s3 + $0x1e4] sm:$0xf]
        %v751 = vld [vmem:[%s3 + $0x1e8] sm:$0xf]
        %v752 = vld [vmem:[%s3 + $0x1ec] sm:$0xf]
        %v753 = vld [vmem:[%s3 + $0x1f0] sm:$0xf]
        %v754 = vld [vmem:[%s3 + $0x1f4] sm:$0xf]
        %v755 = vld [vmem:[%s3 + $0x1f8] sm:$0xf]
        %v756 = vld [vmem:[%s3 + $0x1fc] sm:$0xf]
        %v757 = vld [vmem:[%s3 + $0x200] sm:$0xf]
        %v758 = vld [vmem:[%s3 + $0x204] sm:$0xf]
        %v759 = vld [vmem:[%s3 + $0x208] sm:$0xf]
        %v760 = vld [vmem:[%s3 + $0x20c] sm:$0xf]
        %v761 = vld [vmem:[%s3 + $0x210] sm:$0xf]
        %v762 = vld [vmem:[%s3 + $0x214] sm:$0xf]
        %v763 = vld [vmem:[%s3 + $0x218] sm:$0xf]
        %v764 = vld [vmem:[%s3 + $0x21c] sm:$0xf]
        %v765 = vld [vmem:[%s3 + $0x220] sm:$0xf]
        %v766 = vld [vmem:[%s3 + $0x224] sm:$0xf]
        %v767 = vld [vmem:[%s3 + $0x228] sm:$0xf]
        %v768 = vld [vmem:[%s3 + $0x22c] sm:$0xf]
        %v769 = vld [vmem:[%s3 + $0x230] sm:$0xf]
        %v770 = vld [vmem:[%s3 + $0x234] sm:$0xf]
        %v771 = vld [vmem:[%s3 + $0x238] sm:$0xf]
        %v772 = vld [vmem:[%s3 + $0x23c] sm:$0xf]
        %v777 = vunpack.c.l.b16 %v625
        %v778 = vunpack.c.h.b16 %v625
        %v779 = vunpack.c.l.b16 %v626
        %v780 = vunpack.c.h.b16 %v626
        %v781 = vunpack.c.l.b16 %v627
        %v782 = vunpack.c.h.b16 %v627
        %v783 = vunpack.c.l.b16 %v628
        %v784 = vunpack.c.h.b16 %v628
        %v785 = vpack.c.b16 %v779, %v777
        %v786 = vpack.c.b16 %v780, %v778
        %v787 = vpack.c.b16 %v783, %v781
        %v788 = vpack.c.b16 %v784, %v782
        %v815 = vunpack.c.l.b16 %v629
        %v816 = vunpack.c.l.b16 %v630
        %v817 = vunpack.c.l.b16 %v631
        %v818 = vunpack.c.l.b16 %v632
        %v819 = vunpack.c.l.b16 %v633
        %v820 = vunpack.c.l.b16 %v634
        %v821 = vunpack.c.l.b16 %v635
        %v822 = vunpack.c.l.b16 %v636
        %v823 = vunpack.c.l.b16 %v637
        %v824 = vunpack.c.l.b16 %v638
        %v825 = vunpack.c.l.b16 %v639
        %v826 = vunpack.c.l.b16 %v640
        %v827 = vunpack.c.l.b16 %v641
        %v828 = vunpack.c.l.b16 %v642
        %v829 = vunpack.c.l.b16 %v643
        %v830 = vunpack.c.l.b16 %v644
        %v831 = vunpack.c.l.b16 %v645
        %v832 = vunpack.c.l.b16 %v646
        %v833 = vunpack.c.l.b16 %v647
        %v834 = vunpack.c.l.b16 %v648
        %v835 = vunpack.c.l.b16 %v649
        %v836 = vunpack.c.l.b16 %v650
        %v837 = vunpack.c.l.b16 %v651
        %v838 = vunpack.c.l.b16 %v652
        %v839 = vpack.c.b16 %v816, %v815
        %v840 = vpack.c.b16 %v818, %v817
        %v841 = vpack.c.b16 %v820, %v819
        %v842 = vpack.c.b16 %v822, %v821
        %v843 = vpack.c.b16 %v824, %v823
        %v844 = vpack.c.b16 %v826, %v825
        %v845 = vpack.c.b16 %v828, %v827
        %v846 = vpack.c.b16 %v830, %v829
        %v847 = vpack.c.b16 %v832, %v831
        %v848 = vpack.c.b16 %v834, %v833
        %v849 = vpack.c.b16 %v836, %v835
        %v850 = vpack.c.b16 %v838, %v837
        %v864 = vsel %vm483, %v786, 0
        %v867 = vsel %vm483, %v788, 0
        %869 = vmatpush.bf16.msra.mxu0 %v846
        %870 = vmatpush.bf16.msra.mxu0 %v845
        %871 = vmatpush.bf16.msra.mxu0 %v844
        %872 = vmatpush.bf16.msra.mxu0 %v843
        %873 = vmatpush.bf16.msra.mxu0 %v842
        %874 = vmatpush.bf16.msra.mxu0 %v841
        %875 = vmatpush.bf16.msra.mxu0 %v840
        %876 = vmatpush.bf16.msra.mxu0 %v839
        %877 = vmatmul.bf16.gmra.mxu0 %v785
        %v878 = vpop.f32.mrf.mxu0
        %v879 = vadd.f32 0.0, %v878
        %v880 = vpop.f32.mrf.mxu0
        %v881 = vadd.f32 0.0, %v880
        %882 = vmatmul.bf16.gmra.mxu0 %v787
        %v883 = vpop.f32.mrf.mxu0
        %v884 = vadd.f32 0.0, %v883
        %v885 = vpop.f32.mrf.mxu0
        %v886 = vadd.f32 0.0, %v885
        %887 = vdwg.mxu0
        %888 = vmatpush.bf16.msra.mxu0 0
        %889 = vmatpush.bf16.msra.mxu0 0
        %890 = vmatpush.bf16.msra.mxu0 0
        %891 = vmatpush.bf16.msra.mxu0 0
        %892 = vmatpush.bf16.msra.mxu0 %v850
        %893 = vmatpush.bf16.msra.mxu0 %v849
        %894 = vmatpush.bf16.msra.mxu0 %v848
        %895 = vmatpush.bf16.msra.mxu0 %v847
        %896 = vmatmul.bf16.gmra.mxu0 %v864
        %v897 = vpop.f32.mrf.mxu0
        %v898 = vadd.f32 %v879, %v897
        %v899 = vpop.f32.mrf.mxu0
        %v900 = vadd.f32 %v881, %v899
        %901 = vmatmul.bf16.gmra.mxu0 %v867
        %v902 = vpop.f32.mrf.mxu0
        %v903 = vadd.f32 %v884, %v902
        %v904 = vpop.f32.mrf.mxu0
        %v905 = vadd.f32 %v886, %v904
        %906 = vdwg.mxu0
        %v931 = vunpack.c.l.b16 %v653
        %v932 = vunpack.c.l.b16 %v654
        %v933 = vunpack.c.l.b16 %v655
        %v934 = vunpack.c.l.b16 %v656
        %v935 = vunpack.c.l.b16 %v657
        %v936 = vunpack.c.l.b16 %v658
        %v937 = vunpack.c.l.b16 %v659
        %v938 = vunpack.c.l.b16 %v660
        %v939 = vunpack.c.l.b16 %v661
        %v940 = vunpack.c.l.b16 %v662
        %v941 = vunpack.c.l.b16 %v663
        %v942 = vunpack.c.l.b16 %v664
        %v943 = vunpack.c.l.b16 %v665
        %v944 = vunpack.c.l.b16 %v666
        %v945 = vunpack.c.l.b16 %v667
        %v946 = vunpack.c.l.b16 %v668
        %v947 = vunpack.c.l.b16 %v669
        %v948 = vunpack.c.l.b16 %v670
        %v949 = vunpack.c.l.b16 %v671
        %v950 = vunpack.c.l.b16 %v672
        %v951 = vunpack.c.l.b16 %v673
        %v952 = vunpack.c.l.b16 %v674
        %v953 = vunpack.c.l.b16 %v675
        %v954 = vunpack.c.l.b16 %v676
        %v955 = vpack.c.b16 %v932, %v931
        %v956 = vpack.c.b16 %v934, %v933
        %v957 = vpack.c.b16 %v936, %v935
        %v958 = vpack.c.b16 %v938, %v937
        %v959 = vpack.c.b16 %v940, %v939
        %v960 = vpack.c.b16 %v942, %v941
        %v961 = vpack.c.b16 %v944, %v943
        %v962 = vpack.c.b16 %v946, %v945
        %v963 = vpack.c.b16 %v948, %v947
        %v964 = vpack.c.b16 %v950, %v949
        %v965 = vpack.c.b16 %v952, %v951
        %v966 = vpack.c.b16 %v954, %v953
        %979 = vmatpush.bf16.msra.mxu0 %v962
        %980 = vmatpush.bf16.msra.mxu0 %v961
        %981 = vmatpush.bf16.msra.mxu0 %v960
        %982 = vmatpush.bf16.msra.mxu0 %v959
        %983 = vmatpush.bf16.msra.mxu0 %v958
        %984 = vmatpush.bf16.msra.mxu0 %v957
        %985 = vmatpush.bf16.msra.mxu0 %v956
        %986 = vmatpush.bf16.msra.mxu0 %v955
        %987 = vmatmul.bf16.gmra.mxu0 %v785
        %v988 = vpop.f32.mrf.mxu0
        %v989 = vadd.f32 0.0, %v988
        %v990 = vpop.f32.mrf.mxu0
        %v991 = vadd.f32 0.0, %v990
        %992 = vmatmul.bf16.gmra.mxu0 %v787
        %v993 = vpop.f32.mrf.mxu0
        %v994 = vadd.f32 0.0, %v993
        %v995 = vpop.f32.mrf.mxu0
        %v996 = vadd.f32 0.0, %v995
        %997 = vdwg.mxu0
        %998 = vmatpush.bf16.msra.mxu0 0
        %999 = vmatpush.bf16.msra.mxu0 0
        %1000 = vmatpush.bf16.msra.mxu0 0
        %1001 = vmatpush.bf16.msra.mxu0 0
        %1002 = vmatpush.bf16.msra.mxu0 %v966
        %1003 = vmatpush.bf16.msra.mxu0 %v965
        %1004 = vmatpush.bf16.msra.mxu0 %v964
        %1005 = vmatpush.bf16.msra.mxu0 %v963
        %1006 = vmatmul.bf16.gmra.mxu0 %v864
        %v1007 = vpop.f32.mrf.mxu0
        %v1008 = vadd.f32 %v989, %v1007
        %v1009 = vpop.f32.mrf.mxu0
        %v1010 = vadd.f32 %v991, %v1009
        %1011 = vmatmul.bf16.gmra.mxu0 %v867
        %v1012 = vpop.f32.mrf.mxu0
        %v1013 = vadd.f32 %v994, %v1012
        %v1014 = vpop.f32.mrf.mxu0
        %v1015 = vadd.f32 %v996, %v1014
        %1016 = vdwg.mxu0
        %v1041 = vunpack.c.l.b16 %v677
        %v1042 = vunpack.c.l.b16 %v678
        %v1043 = vunpack.c.l.b16 %v679
        %v1044 = vunpack.c.l.b16 %v680
        %v1045 = vunpack.c.l.b16 %v681
        %v1046 = vunpack.c.l.b16 %v682
        %v1047 = vunpack.c.l.b16 %v683
        %v1048 = vunpack.c.l.b16 %v684
        %v1049 = vunpack.c.l.b16 %v685
        %v1050 = vunpack.c.l.b16 %v686
        %v1051 = vunpack.c.l.b16 %v687
        %v1052 = vunpack.c.l.b16 %v688
        %v1053 = vunpack.c.l.b16 %v689
        %v1054 = vunpack.c.l.b16 %v690
        %v1055 = vunpack.c.l.b16 %v691
        %v1056 = vunpack.c.l.b16 %v692
        %v1057 = vunpack.c.l.b16 %v693
        %v1058 = vunpack.c.l.b16 %v694
        %v1059 = vunpack.c.l.b16 %v695
        %v1060 = vunpack.c.l.b16 %v696
        %v1061 = vunpack.c.l.b16 %v697
        %v1062 = vunpack.c.l.b16 %v698
        %v1063 = vunpack.c.l.b16 %v699
        %v1064 = vunpack.c.l.b16 %v700
        %v1065 = vpack.c.b16 %v1042, %v1041
        %v1066 = vpack.c.b16 %v1044, %v1043
        %v1067 = vpack.c.b16 %v1046, %v1045
        %v1068 = vpack.c.b16 %v1048, %v1047
        %v1069 = vpack.c.b16 %v1050, %v1049
        %v1070 = vpack.c.b16 %v1052, %v1051
        %v1071 = vpack.c.b16 %v1054, %v1053
        %v1072 = vpack.c.b16 %v1056, %v1055
        %v1073 = vpack.c.b16 %v1058, %v1057
        %v1074 = vpack.c.b16 %v1060, %v1059
        %v1075 = vpack.c.b16 %v1062, %v1061
        %v1076 = vpack.c.b16 %v1064, %v1063
        %1089 = vmatpush.bf16.msra.mxu0 %v1072
        %1090 = vmatpush.bf16.msra.mxu0 %v1071
        %1091 = vmatpush.bf16.msra.mxu0 %v1070
        %1092 = vmatpush.bf16.msra.mxu0 %v1069
        %1093 = vmatpush.bf16.msra.mxu0 %v1068
        %1094 = vmatpush.bf16.msra.mxu0 %v1067
        %1095 = vmatpush.bf16.msra.mxu0 %v1066
        %1096 = vmatpush.bf16.msra.mxu0 %v1065
        %1097 = vmatmul.bf16.gmra.mxu0 %v785
        %v1098 = vpop.f32.mrf.mxu0
        %v1099 = vadd.f32 0.0, %v1098
        %v1100 = vpop.f32.mrf.mxu0
        %v1101 = vadd.f32 0.0, %v1100
        %1102 = vmatmul.bf16.gmra.mxu0 %v787
        %v1103 = vpop.f32.mrf.mxu0
        %v1104 = vadd.f32 0.0, %v1103
        %v1105 = vpop.f32.mrf.mxu0
        %v1106 = vadd.f32 0.0, %v1105
        %1107 = vdwg.mxu0
        %1108 = vmatpush.bf16.msra.mxu0 0
        %1109 = vmatpush.bf16.msra.mxu0 0
        %1110 = vmatpush.bf16.msra.mxu0 0
        %1111 = vmatpush.bf16.msra.mxu0 0
        %1112 = vmatpush.bf16.msra.mxu0 %v1076
        %1113 = vmatpush.bf16.msra.mxu0 %v1075
        %1114 = vmatpush.bf16.msra.mxu0 %v1074
        %1115 = vmatpush.bf16.msra.mxu0 %v1073
        %1116 = vmatmul.bf16.gmra.mxu0 %v864
        %v1117 = vpop.f32.mrf.mxu0
        %v1118 = vadd.f32 %v1099, %v1117
        %v1119 = vpop.f32.mrf.mxu0
        %v1120 = vadd.f32 %v1101, %v1119
        %1121 = vmatmul.bf16.gmra.mxu0 %v867
        %v1122 = vpop.f32.mrf.mxu0
        %v1123 = vadd.f32 %v1104, %v1122
        %v1124 = vpop.f32.mrf.mxu0
        %v1125 = vadd.f32 %v1106, %v1124
        %1126 = vdwg.mxu0
        %v1151 = vunpack.c.l.b16 %v701
        %v1152 = vunpack.c.l.b16 %v702
        %v1153 = vunpack.c.l.b16 %v703
        %v1154 = vunpack.c.l.b16 %v704
        %v1155 = vunpack.c.l.b16 %v705
        %v1156 = vunpack.c.l.b16 %v706
        %v1157 = vunpack.c.l.b16 %v707
        %v1158 = vunpack.c.l.b16 %v708
        %v1159 = vunpack.c.l.b16 %v709
        %v1160 = vunpack.c.l.b16 %v710
        %v1161 = vunpack.c.l.b16 %v711
        %v1162 = vunpack.c.l.b16 %v712
        %v1163 = vunpack.c.l.b16 %v713
        %v1164 = vunpack.c.l.b16 %v714
        %v1165 = vunpack.c.l.b16 %v715
        %v1166 = vunpack.c.l.b16 %v716
        %v1167 = vunpack.c.l.b16 %v717
        %v1168 = vunpack.c.l.b16 %v718
        %v1169 = vunpack.c.l.b16 %v719
        %v1170 = vunpack.c.l.b16 %v720
        %v1171 = vunpack.c.l.b16 %v721
        %v1172 = vunpack.c.l.b16 %v722
        %v1173 = vunpack.c.l.b16 %v723
        %v1174 = vunpack.c.l.b16 %v724
        %v1175 = vpack.c.b16 %v1152, %v1151
        %v1176 = vpack.c.b16 %v1154, %v1153
        %v1177 = vpack.c.b16 %v1156, %v1155
        %v1178 = vpack.c.b16 %v1158, %v1157
        %v1179 = vpack.c.b16 %v1160, %v1159
        %v1180 = vpack.c.b16 %v1162, %v1161
        %v1181 = vpack.c.b16 %v1164, %v1163
        %v1182 = vpack.c.b16 %v1166, %v1165
        %v1183 = vpack.c.b16 %v1168, %v1167
        %v1184 = vpack.c.b16 %v1170, %v1169
        %v1185 = vpack.c.b16 %v1172, %v1171
        %v1186 = vpack.c.b16 %v1174, %v1173
        %1199 = vmatpush.bf16.msra.mxu0 %v1182
        %1200 = vmatpush.bf16.msra.mxu0 %v1181
        %1201 = vmatpush.bf16.msra.mxu0 %v1180
        %1202 = vmatpush.bf16.msra.mxu0 %v1179
        %1203 = vmatpush.bf16.msra.mxu0 %v1178
        %1204 = vmatpush.bf16.msra.mxu0 %v1177
        %1205 = vmatpush.bf16.msra.mxu0 %v1176
        %1206 = vmatpush.bf16.msra.mxu0 %v1175
        %1207 = vmatmul.bf16.gmra.mxu0 %v785
        %v1208 = vpop.f32.mrf.mxu0
        %v1209 = vadd.f32 0.0, %v1208
        %v1210 = vpop.f32.mrf.mxu0
        %v1211 = vadd.f32 0.0, %v1210
        %1212 = vmatmul.bf16.gmra.mxu0 %v787
        %v1213 = vpop.f32.mrf.mxu0
        %v1214 = vadd.f32 0.0, %v1213
        %v1215 = vpop.f32.mrf.mxu0
        %v1216 = vadd.f32 0.0, %v1215
        %1217 = vdwg.mxu0
        %1218 = vmatpush.bf16.msra.mxu0 0
        %1219 = vmatpush.bf16.msra.mxu0 0
        %1220 = vmatpush.bf16.msra.mxu0 0
        %1221 = vmatpush.bf16.msra.mxu0 0
        %1222 = vmatpush.bf16.msra.mxu0 %v1186
        %1223 = vmatpush.bf16.msra.mxu0 %v1185
        %1224 = vmatpush.bf16.msra.mxu0 %v1184
        %1225 = vmatpush.bf16.msra.mxu0 %v1183
        %1226 = vmatmul.bf16.gmra.mxu0 %v864
        %v1227 = vpop.f32.mrf.mxu0
        %v1228 = vadd.f32 %v1209, %v1227
        %v1229 = vpop.f32.mrf.mxu0
        %v1230 = vadd.f32 %v1211, %v1229
        %1231 = vmatmul.bf16.gmra.mxu0 %v867
        %v1232 = vpop.f32.mrf.mxu0
        %v1233 = vadd.f32 %v1214, %v1232
        %v1234 = vpop.f32.mrf.mxu0
        %v1235 = vadd.f32 %v1216, %v1234
        %1236 = vdwg.mxu0
        %v1261 = vunpack.c.l.b16 %v725
        %v1262 = vunpack.c.l.b16 %v726
        %v1263 = vunpack.c.l.b16 %v727
        %v1264 = vunpack.c.l.b16 %v728
        %v1265 = vunpack.c.l.b16 %v729
        %v1266 = vunpack.c.l.b16 %v730
        %v1267 = vunpack.c.l.b16 %v731
        %v1268 = vunpack.c.l.b16 %v732
        %v1269 = vunpack.c.l.b16 %v733
        %v1270 = vunpack.c.l.b16 %v734
        %v1271 = vunpack.c.l.b16 %v735
        %v1272 = vunpack.c.l.b16 %v736
        %v1273 = vunpack.c.l.b16 %v737
        %v1274 = vunpack.c.l.b16 %v738
        %v1275 = vunpack.c.l.b16 %v739
        %v1276 = vunpack.c.l.b16 %v740
        %v1277 = vunpack.c.l.b16 %v741
        %v1278 = vunpack.c.l.b16 %v742
        %v1279 = vunpack.c.l.b16 %v743
        %v1280 = vunpack.c.l.b16 %v744
        %v1281 = vunpack.c.l.b16 %v745
        %v1282 = vunpack.c.l.b16 %v746
        %v1283 = vunpack.c.l.b16 %v747
        %v1284 = vunpack.c.l.b16 %v748
        %v1285 = vpack.c.b16 %v1262, %v1261
        %v1286 = vpack.c.b16 %v1264, %v1263
        %v1287 = vpack.c.b16 %v1266, %v1265
        %v1288 = vpack.c.b16 %v1268, %v1267
        %v1289 = vpack.c.b16 %v1270, %v1269
        %v1290 = vpack.c.b16 %v1272, %v1271
        %v1291 = vpack.c.b16 %v1274, %v1273
        %v1292 = vpack.c.b16 %v1276, %v1275
        %v1293 = vpack.c.b16 %v1278, %v1277
        %v1294 = vpack.c.b16 %v1280, %v1279
        %v1295 = vpack.c.b16 %v1282, %v1281
        %v1296 = vpack.c.b16 %v1284, %v1283
        %1309 = vmatpush.bf16.msra.mxu0 %v1292
        %1310 = vmatpush.bf16.msra.mxu0 %v1291
        %1311 = vmatpush.bf16.msra.mxu0 %v1290
        %1312 = vmatpush.bf16.msra.mxu0 %v1289
        %1313 = vmatpush.bf16.msra.mxu0 %v1288
        %1314 = vmatpush.bf16.msra.mxu0 %v1287
        %1315 = vmatpush.bf16.msra.mxu0 %v1286
        %1316 = vmatpush.bf16.msra.mxu0 %v1285
        %1317 = vmatmul.bf16.gmra.mxu0 %v785
        %v1318 = vpop.f32.mrf.mxu0
        %v1319 = vadd.f32 0.0, %v1318
        %v1320 = vpop.f32.mrf.mxu0
        %v1321 = vadd.f32 0.0, %v1320
        %1322 = vmatmul.bf16.gmra.mxu0 %v787
        %v1323 = vpop.f32.mrf.mxu0
        %v1324 = vadd.f32 0.0, %v1323
        %v1325 = vpop.f32.mrf.mxu0
        %v1326 = vadd.f32 0.0, %v1325
        %1327 = vdwg.mxu0
        %1328 = vmatpush.bf16.msra.mxu0 0
        %1329 = vmatpush.bf16.msra.mxu0 0
        %1330 = vmatpush.bf16.msra.mxu0 0
        %1331 = vmatpush.bf16.msra.mxu0 0
        %1332 = vmatpush.bf16.msra.mxu0 %v1296
        %1333 = vmatpush.bf16.msra.mxu0 %v1295
        %1334 = vmatpush.bf16.msra.mxu0 %v1294
        %1335 = vmatpush.bf16.msra.mxu0 %v1293
        %1336 = vmatmul.bf16.gmra.mxu0 %v864
        %v1337 = vpop.f32.mrf.mxu0
        %v1338 = vadd.f32 %v1319, %v1337
        %v1339 = vpop.f32.mrf.mxu0
        %v1340 = vadd.f32 %v1321, %v1339
        %1341 = vmatmul.bf16.gmra.mxu0 %v867
        %v1342 = vpop.f32.mrf.mxu0
        %v1343 = vadd.f32 %v1324, %v1342
        %v1344 = vpop.f32.mrf.mxu0
        %v1345 = vadd.f32 %v1326, %v1344
        %1346 = vdwg.mxu0
        %v1371 = vunpack.c.l.b16 %v749
        %v1372 = vunpack.c.l.b16 %v750
        %v1373 = vunpack.c.l.b16 %v751
        %v1374 = vunpack.c.l.b16 %v752
        %v1375 = vunpack.c.l.b16 %v753
        %v1376 = vunpack.c.l.b16 %v754
        %v1377 = vunpack.c.l.b16 %v755
        %v1378 = vunpack.c.l.b16 %v756
        %v1379 = vunpack.c.l.b16 %v757
        %v1380 = vunpack.c.l.b16 %v758
        %v1381 = vunpack.c.l.b16 %v759
        %v1382 = vunpack.c.l.b16 %v760
        %v1383 = vunpack.c.l.b16 %v761
        %v1384 = vunpack.c.l.b16 %v762
        %v1385 = vunpack.c.l.b16 %v763
        %v1386 = vunpack.c.l.b16 %v764
        %v1387 = vunpack.c.l.b16 %v765
        %v1388 = vunpack.c.l.b16 %v766
        %v1389 = vunpack.c.l.b16 %v767
        %v1390 = vunpack.c.l.b16 %v768
        %v1391 = vunpack.c.l.b16 %v769
        %v1392 = vunpack.c.l.b16 %v770
        %v1393 = vunpack.c.l.b16 %v771
        %v1394 = vunpack.c.l.b16 %v772
        %v1395 = vpack.c.b16 %v1372, %v1371
        %v1396 = vpack.c.b16 %v1374, %v1373
        %v1397 = vpack.c.b16 %v1376, %v1375
        %v1398 = vpack.c.b16 %v1378, %v1377
        %v1399 = vpack.c.b16 %v1380, %v1379
        %v1400 = vpack.c.b16 %v1382, %v1381
        %v1401 = vpack.c.b16 %v1384, %v1383
        %v1402 = vpack.c.b16 %v1386, %v1385
        %v1403 = vpack.c.b16 %v1388, %v1387
        %v1404 = vpack.c.b16 %v1390, %v1389
        %v1405 = vpack.c.b16 %v1392, %v1391
        %v1406 = vpack.c.b16 %v1394, %v1393
        %1419 = vmatpush.bf16.msra.mxu0 %v1402
        %1420 = vmatpush.bf16.msra.mxu0 %v1401
        %1421 = vmatpush.bf16.msra.mxu0 %v1400
        %1422 = vmatpush.bf16.msra.mxu0 %v1399
        %1423 = vmatpush.bf16.msra.mxu0 %v1398
        %1424 = vmatpush.bf16.msra.mxu0 %v1397
        %1425 = vmatpush.bf16.msra.mxu0 %v1396
        %1426 = vmatpush.bf16.msra.mxu0 %v1395
        %1427 = vmatmul.bf16.gmra.mxu0 %v785
        %v1428 = vpop.f32.mrf.mxu0
        %v1429 = vadd.f32 0.0, %v1428
        %v1430 = vpop.f32.mrf.mxu0
        %v1431 = vadd.f32 0.0, %v1430
        %1432 = vmatmul.bf16.gmra.mxu0 %v787
        %v1433 = vpop.f32.mrf.mxu0
        %v1434 = vadd.f32 0.0, %v1433
        %v1435 = vpop.f32.mrf.mxu0
        %v1436 = vadd.f32 0.0, %v1435
        %1437 = vdwg.mxu0
        %1438 = vmatpush.bf16.msra.mxu0 0
        %1439 = vmatpush.bf16.msra.mxu0 0
        %1440 = vmatpush.bf16.msra.mxu0 0
        %1441 = vmatpush.bf16.msra.mxu0 0
        %1442 = vmatpush.bf16.msra.mxu0 %v1406
        %1443 = vmatpush.bf16.msra.mxu0 %v1405
        %1444 = vmatpush.bf16.msra.mxu0 %v1404
        %1445 = vmatpush.bf16.msra.mxu0 %v1403
        %1446 = vmatmul.bf16.gmra.mxu0 %v864
        %v1447 = vpop.f32.mrf.mxu0
        %v1448 = vadd.f32 %v1429, %v1447
        %v1449 = vpop.f32.mrf.mxu0
        %v1450 = vadd.f32 %v1431, %v1449
        %1451 = vmatmul.bf16.gmra.mxu0 %v867
        %v1452 = vpop.f32.mrf.mxu0
        %v1453 = vadd.f32 %v1434, %v1452
        %v1454 = vpop.f32.mrf.mxu0
        %v1455 = vadd.f32 %v1436, %v1454
        %1456 = vdwg.mxu0
        %v1457 = vpack.c.bf16 %v898, %v898
        %v1458 = vpack.c.bf16 %v900, %v900
        %v1459 = vpack.c.bf16 %v903, %v903
        %v1460 = vpack.c.bf16 %v905, %v905
        %v1461 = vpack.c.bf16 %v1008, %v1008
        %v1462 = vpack.c.bf16 %v1010, %v1010
        %v1463 = vpack.c.bf16 %v1013, %v1013
        %v1464 = vpack.c.bf16 %v1015, %v1015
        %v1465 = vpack.c.bf16 %v1118, %v1118
        %v1466 = vpack.c.bf16 %v1120, %v1120
        %v1467 = vpack.c.bf16 %v1123, %v1123
        %v1468 = vpack.c.bf16 %v1125, %v1125
        %v1469 = vpack.c.bf16 %v1228, %v1228
        %v1470 = vpack.c.bf16 %v1230, %v1230
        %v1471 = vpack.c.bf16 %v1233, %v1233
        %v1472 = vpack.c.bf16 %v1235, %v1235
        %v1473 = vpack.c.bf16 %v1338, %v1338
        %v1474 = vpack.c.bf16 %v1340, %v1340
        %v1475 = vpack.c.bf16 %v1343, %v1343
        %v1476 = vpack.c.bf16 %v1345, %v1345
        %v1477 = vpack.c.bf16 %v1448, %v1448
        %v1478 = vpack.c.bf16 %v1450, %v1450
        %v1479 = vpack.c.bf16 %v1453, %v1453
        %v1480 = vpack.c.bf16 %v1455, %v1455
        %v1481 = vld [vmem:[%s4] sm:$0xf]
        %v1482 = vld [vmem:[%s4 + $0x4] sm:$0xf]
        %v1483 = vld [vmem:[%s4 + $0x8] sm:$0xf]
        %v1484 = vld [vmem:[%s4 + $0xc] sm:$0xf]
        %v1485 = vld [vmem:[%s4 + $0x10] sm:$0xf]
        %v1486 = vld [vmem:[%s4 + $0x14] sm:$0xf]
        %v1487 = vld [vmem:[%s4 + $0x18] sm:$0xf]
        %v1488 = vld [vmem:[%s4 + $0x1c] sm:$0xf]
        %v1489 = vld [vmem:[%s4 + $0x20] sm:$0xf]
        %v1490 = vld [vmem:[%s4 + $0x24] sm:$0xf]
        %v1491 = vld [vmem:[%s4 + $0x28] sm:$0xf]
        %v1492 = vld [vmem:[%s4 + $0x2c] sm:$0xf]
        %v1493 = vld [vmem:[%s4 + $0x30] sm:$0xf]
        %v1494 = vld [vmem:[%s4 + $0x34] sm:$0xf]
        %v1495 = vld [vmem:[%s4 + $0x38] sm:$0xf]
        %v1496 = vld [vmem:[%s4 + $0x3c] sm:$0xf]
        %v1497 = vld [vmem:[%s4 + $0x40] sm:$0xf]
        %v1498 = vld [vmem:[%s4 + $0x44] sm:$0xf]
        %v1499 = vld [vmem:[%s4 + $0x48] sm:$0xf]
        %v1500 = vld [vmem:[%s4 + $0x4c] sm:$0xf]
        %v1501 = vld [vmem:[%s4 + $0x50] sm:$0xf]
        %v1502 = vld [vmem:[%s4 + $0x54] sm:$0xf]
        %v1503 = vld [vmem:[%s4 + $0x58] sm:$0xf]
        %v1504 = vld [vmem:[%s4 + $0x5c] sm:$0xf]
        %v1505 = vld [vmem:[%s4 + $0x60] sm:$0xf]
        %v1506 = vld [vmem:[%s4 + $0x64] sm:$0xf]
        %v1507 = vld [vmem:[%s4 + $0x68] sm:$0xf]
        %v1508 = vld [vmem:[%s4 + $0x6c] sm:$0xf]
        %v1509 = vld [vmem:[%s4 + $0x70] sm:$0xf]
        %v1510 = vld [vmem:[%s4 + $0x74] sm:$0xf]
        %v1511 = vld [vmem:[%s4 + $0x78] sm:$0xf]
        %v1512 = vld [vmem:[%s4 + $0x7c] sm:$0xf]
        %v1513 = vld [vmem:[%s4 + $0x80] sm:$0xf]
        %v1514 = vld [vmem:[%s4 + $0x84] sm:$0xf]
        %v1515 = vld [vmem:[%s4 + $0x88] sm:$0xf]
        %v1516 = vld [vmem:[%s4 + $0x8c] sm:$0xf]
        %v1517 = vld [vmem:[%s4 + $0x90] sm:$0xf]
        %v1518 = vld [vmem:[%s4 + $0x94] sm:$0xf]
        %v1519 = vld [vmem:[%s4 + $0x98] sm:$0xf]
        %v1520 = vld [vmem:[%s4 + $0x9c] sm:$0xf]
        %v1521 = vld [vmem:[%s4 + $0xa0] sm:$0xf]
        %v1522 = vld [vmem:[%s4 + $0xa4] sm:$0xf]
        %v1523 = vld [vmem:[%s4 + $0xa8] sm:$0xf]
        %v1524 = vld [vmem:[%s4 + $0xac] sm:$0xf]
        %v1525 = vld [vmem:[%s4 + $0xb0] sm:$0xf]
        %v1526 = vld [vmem:[%s4 + $0xb4] sm:$0xf]
        %v1527 = vld [vmem:[%s4 + $0xb8] sm:$0xf]
        %v1528 = vld [vmem:[%s4 + $0xbc] sm:$0xf]
        %v1529 = vld [vmem:[%s4 + $0xc0] sm:$0xf]
        %v1530 = vld [vmem:[%s4 + $0xc4] sm:$0xf]
        %v1531 = vld [vmem:[%s4 + $0xc8] sm:$0xf]
        %v1532 = vld [vmem:[%s4 + $0xcc] sm:$0xf]
        %v1533 = vld [vmem:[%s4 + $0xd0] sm:$0xf]
        %v1534 = vld [vmem:[%s4 + $0xd4] sm:$0xf]
        %v1535 = vld [vmem:[%s4 + $0xd8] sm:$0xf]
        %v1536 = vld [vmem:[%s4 + $0xdc] sm:$0xf]
        %v1537 = vld [vmem:[%s4 + $0xe0] sm:$0xf]
        %v1538 = vld [vmem:[%s4 + $0xe4] sm:$0xf]
        %v1539 = vld [vmem:[%s4 + $0xe8] sm:$0xf]
        %v1540 = vld [vmem:[%s4 + $0xec] sm:$0xf]
        %v1541 = vld [vmem:[%s4 + $0xf0] sm:$0xf]
        %v1542 = vld [vmem:[%s4 + $0xf4] sm:$0xf]
        %v1543 = vld [vmem:[%s4 + $0xf8] sm:$0xf]
        %v1544 = vld [vmem:[%s4 + $0xfc] sm:$0xf]
        %v1545 = vld [vmem:[%s4 + $0x100] sm:$0xf]
        %v1546 = vld [vmem:[%s4 + $0x104] sm:$0xf]
        %v1547 = vld [vmem:[%s4 + $0x108] sm:$0xf]
        %v1548 = vld [vmem:[%s4 + $0x10c] sm:$0xf]
        %v1549 = vld [vmem:[%s4 + $0x110] sm:$0xf]
        %v1550 = vld [vmem:[%s4 + $0x114] sm:$0xf]
        %v1551 = vld [vmem:[%s4 + $0x118] sm:$0xf]
        %v1552 = vld [vmem:[%s4 + $0x11c] sm:$0xf]
        %v1553 = vld [vmem:[%s4 + $0x120] sm:$0xf]
        %v1554 = vld [vmem:[%s4 + $0x124] sm:$0xf]
        %v1555 = vld [vmem:[%s4 + $0x128] sm:$0xf]
        %v1556 = vld [vmem:[%s4 + $0x12c] sm:$0xf]
        %v1557 = vld [vmem:[%s4 + $0x130] sm:$0xf]
        %v1558 = vld [vmem:[%s4 + $0x134] sm:$0xf]
        %v1559 = vld [vmem:[%s4 + $0x138] sm:$0xf]
        %v1560 = vld [vmem:[%s4 + $0x13c] sm:$0xf]
        %v1561 = vld [vmem:[%s4 + $0x140] sm:$0xf]
        %v1562 = vld [vmem:[%s4 + $0x144] sm:$0xf]
        %v1563 = vld [vmem:[%s4 + $0x148] sm:$0xf]
        %v1564 = vld [vmem:[%s4 + $0x14c] sm:$0xf]
        %v1565 = vld [vmem:[%s4 + $0x150] sm:$0xf]
        %v1566 = vld [vmem:[%s4 + $0x154] sm:$0xf]
        %v1567 = vld [vmem:[%s4 + $0x158] sm:$0xf]
        %v1568 = vld [vmem:[%s4 + $0x15c] sm:$0xf]
        %v1569 = vld [vmem:[%s4 + $0x160] sm:$0xf]
        %v1570 = vld [vmem:[%s4 + $0x164] sm:$0xf]
        %v1571 = vld [vmem:[%s4 + $0x168] sm:$0xf]
        %v1572 = vld [vmem:[%s4 + $0x16c] sm:$0xf]
        %v1573 = vld [vmem:[%s4 + $0x170] sm:$0xf]
        %v1574 = vld [vmem:[%s4 + $0x174] sm:$0xf]
        %v1575 = vld [vmem:[%s4 + $0x178] sm:$0xf]
        %v1576 = vld [vmem:[%s4 + $0x17c] sm:$0xf]
        %v1577 = vld [vmem:[%s4 + $0x180] sm:$0xf]
        %v1578 = vld [vmem:[%s4 + $0x184] sm:$0xf]
        %v1579 = vld [vmem:[%s4 + $0x188] sm:$0xf]
        %v1580 = vld [vmem:[%s4 + $0x18c] sm:$0xf]
        %v1581 = vld [vmem:[%s4 + $0x190] sm:$0xf]
        %v1582 = vld [vmem:[%s4 + $0x194] sm:$0xf]
        %v1583 = vld [vmem:[%s4 + $0x198] sm:$0xf]
        %v1584 = vld [vmem:[%s4 + $0x19c] sm:$0xf]
        %v1585 = vld [vmem:[%s4 + $0x1a0] sm:$0xf]
        %v1586 = vld [vmem:[%s4 + $0x1a4] sm:$0xf]
        %v1587 = vld [vmem:[%s4 + $0x1a8] sm:$0xf]
        %v1588 = vld [vmem:[%s4 + $0x1ac] sm:$0xf]
        %v1589 = vld [vmem:[%s4 + $0x1b0] sm:$0xf]
        %v1590 = vld [vmem:[%s4 + $0x1b4] sm:$0xf]
        %v1591 = vld [vmem:[%s4 + $0x1b8] sm:$0xf]
        %v1592 = vld [vmem:[%s4 + $0x1bc] sm:$0xf]
        %v1593 = vld [vmem:[%s4 + $0x1c0] sm:$0xf]
        %v1594 = vld [vmem:[%s4 + $0x1c4] sm:$0xf]
        %v1595 = vld [vmem:[%s4 + $0x1c8] sm:$0xf]
        %v1596 = vld [vmem:[%s4 + $0x1cc] sm:$0xf]
        %v1597 = vld [vmem:[%s4 + $0x1d0] sm:$0xf]
        %v1598 = vld [vmem:[%s4 + $0x1d4] sm:$0xf]
        %v1599 = vld [vmem:[%s4 + $0x1d8] sm:$0xf]
        %v1600 = vld [vmem:[%s4 + $0x1dc] sm:$0xf]
        %v1601 = vld [vmem:[%s4 + $0x1e0] sm:$0xf]
        %v1602 = vld [vmem:[%s4 + $0x1e4] sm:$0xf]
        %v1603 = vld [vmem:[%s4 + $0x1e8] sm:$0xf]
        %v1604 = vld [vmem:[%s4 + $0x1ec] sm:$0xf]
        %v1605 = vld [vmem:[%s4 + $0x1f0] sm:$0xf]
        %v1606 = vld [vmem:[%s4 + $0x1f4] sm:$0xf]
        %v1607 = vld [vmem:[%s4 + $0x1f8] sm:$0xf]
        %v1608 = vld [vmem:[%s4 + $0x1fc] sm:$0xf]
        %v1609 = vld [vmem:[%s4 + $0x200] sm:$0xf]
        %v1610 = vld [vmem:[%s4 + $0x204] sm:$0xf]
        %v1611 = vld [vmem:[%s4 + $0x208] sm:$0xf]
        %v1612 = vld [vmem:[%s4 + $0x20c] sm:$0xf]
        %v1613 = vld [vmem:[%s4 + $0x210] sm:$0xf]
        %v1614 = vld [vmem:[%s4 + $0x214] sm:$0xf]
        %v1615 = vld [vmem:[%s4 + $0x218] sm:$0xf]
        %v1616 = vld [vmem:[%s4 + $0x21c] sm:$0xf]
        %v1617 = vld [vmem:[%s4 + $0x220] sm:$0xf]
        %v1618 = vld [vmem:[%s4 + $0x224] sm:$0xf]
        %v1619 = vld [vmem:[%s4 + $0x228] sm:$0xf]
        %v1620 = vld [vmem:[%s4 + $0x22c] sm:$0xf]
        %v1621 = vld [vmem:[%s4 + $0x230] sm:$0xf]
        %v1622 = vld [vmem:[%s4 + $0x234] sm:$0xf]
        %v1623 = vld [vmem:[%s4 + $0x238] sm:$0xf]
        %v1624 = vld [vmem:[%s4 + $0x23c] sm:$0xf]
        %v1649 = vunpack.c.l.b16 %v1481
        %v1650 = vunpack.c.l.b16 %v1482
        %v1651 = vunpack.c.l.b16 %v1483
        %v1652 = vunpack.c.l.b16 %v1484
        %v1653 = vunpack.c.l.b16 %v1485
        %v1654 = vunpack.c.l.b16 %v1486
        %v1655 = vunpack.c.l.b16 %v1487
        %v1656 = vunpack.c.l.b16 %v1488
        %v1657 = vunpack.c.l.b16 %v1489
        %v1658 = vunpack.c.l.b16 %v1490
        %v1659 = vunpack.c.l.b16 %v1491
        %v1660 = vunpack.c.l.b16 %v1492
        %v1661 = vunpack.c.l.b16 %v1493
        %v1662 = vunpack.c.l.b16 %v1494
        %v1663 = vunpack.c.l.b16 %v1495
        %v1664 = vunpack.c.l.b16 %v1496
        %v1665 = vunpack.c.l.b16 %v1497
        %v1666 = vunpack.c.l.b16 %v1498
        %v1667 = vunpack.c.l.b16 %v1499
        %v1668 = vunpack.c.l.b16 %v1500
        %v1669 = vunpack.c.l.b16 %v1501
        %v1670 = vunpack.c.l.b16 %v1502
        %v1671 = vunpack.c.l.b16 %v1503
        %v1672 = vunpack.c.l.b16 %v1504
        %v1673 = vpack.c.b16 %v1650, %v1649
        %v1674 = vpack.c.b16 %v1652, %v1651
        %v1675 = vpack.c.b16 %v1654, %v1653
        %v1676 = vpack.c.b16 %v1656, %v1655
        %v1677 = vpack.c.b16 %v1658, %v1657
        %v1678 = vpack.c.b16 %v1660, %v1659
        %v1679 = vpack.c.b16 %v1662, %v1661
        %v1680 = vpack.c.b16 %v1664, %v1663
        %v1681 = vpack.c.b16 %v1666, %v1665
        %v1682 = vpack.c.b16 %v1668, %v1667
        %v1683 = vpack.c.b16 %v1670, %v1669
        %v1684 = vpack.c.b16 %v1672, %v1671
        %1697 = vmatpush.bf16.msra.mxu0 %v1680
        %1698 = vmatpush.bf16.msra.mxu0 %v1679
        %1699 = vmatpush.bf16.msra.mxu0 %v1678
        %1700 = vmatpush.bf16.msra.mxu0 %v1677
        %1701 = vmatpush.bf16.msra.mxu0 %v1676
        %1702 = vmatpush.bf16.msra.mxu0 %v1675
        %1703 = vmatpush.bf16.msra.mxu0 %v1674
        %1704 = vmatpush.bf16.msra.mxu0 %v1673
        %1705 = vmatmul.bf16.gmra.mxu0 %v785
        %v1706 = vpop.f32.mrf.mxu0
        %v1707 = vadd.f32 0.0, %v1706
        %v1708 = vpop.f32.mrf.mxu0
        %v1709 = vadd.f32 0.0, %v1708
        %1710 = vmatmul.bf16.gmra.mxu0 %v787
        %v1711 = vpop.f32.mrf.mxu0
        %v1712 = vadd.f32 0.0, %v1711
        %v1713 = vpop.f32.mrf.mxu0
        %v1714 = vadd.f32 0.0, %v1713
        %1715 = vdwg.mxu0
        %1716 = vmatpush.bf16.msra.mxu0 0
        %1717 = vmatpush.bf16.msra.mxu0 0
        %1718 = vmatpush.bf16.msra.mxu0 0
        %1719 = vmatpush.bf16.msra.mxu0 0
        %1720 = vmatpush.bf16.msra.mxu0 %v1684
        %1721 = vmatpush.bf16.msra.mxu0 %v1683
        %1722 = vmatpush.bf16.msra.mxu0 %v1682
        %1723 = vmatpush.bf16.msra.mxu0 %v1681
        %1724 = vmatmul.bf16.gmra.mxu0 %v864
        %v1725 = vpop.f32.mrf.mxu0
        %v1726 = vadd.f32 %v1707, %v1725
        %v1727 = vpop.f32.mrf.mxu0
        %v1728 = vadd.f32 %v1709, %v1727
        %1729 = vmatmul.bf16.gmra.mxu0 %v867
        %v1730 = vpop.f32.mrf.mxu0
        %v1731 = vadd.f32 %v1712, %v1730
        %v1732 = vpop.f32.mrf.mxu0
        %v1733 = vadd.f32 %v1714, %v1732
        %1734 = vdwg.mxu0
        %v1759 = vunpack.c.l.b16 %v1505
        %v1760 = vunpack.c.l.b16 %v1506
        %v1761 = vunpack.c.l.b16 %v1507
        %v1762 = vunpack.c.l.b16 %v1508
        %v1763 = vunpack.c.l.b16 %v1509
        %v1764 = vunpack.c.l.b16 %v1510
        %v1765 = vunpack.c.l.b16 %v1511
        %v1766 = vunpack.c.l.b16 %v1512
        %v1767 = vunpack.c.l.b16 %v1513
        %v1768 = vunpack.c.l.b16 %v1514
        %v1769 = vunpack.c.l.b16 %v1515
        %v1770 = vunpack.c.l.b16 %v1516
        %v1771 = vunpack.c.l.b16 %v1517
        %v1772 = vunpack.c.l.b16 %v1518
        %v1773 = vunpack.c.l.b16 %v1519
        %v1774 = vunpack.c.l.b16 %v1520
        %v1775 = vunpack.c.l.b16 %v1521
        %v1776 = vunpack.c.l.b16 %v1522
        %v1777 = vunpack.c.l.b16 %v1523
        %v1778 = vunpack.c.l.b16 %v1524
        %v1779 = vunpack.c.l.b16 %v1525
        %v1780 = vunpack.c.l.b16 %v1526
        %v1781 = vunpack.c.l.b16 %v1527
        %v1782 = vunpack.c.l.b16 %v1528
        %v1783 = vpack.c.b16 %v1760, %v1759
        %v1784 = vpack.c.b16 %v1762, %v1761
        %v1785 = vpack.c.b16 %v1764, %v1763
        %v1786 = vpack.c.b16 %v1766, %v1765
        %v1787 = vpack.c.b16 %v1768, %v1767
        %v1788 = vpack.c.b16 %v1770, %v1769
        %v1789 = vpack.c.b16 %v1772, %v1771
        %v1790 = vpack.c.b16 %v1774, %v1773
        %v1791 = vpack.c.b16 %v1776, %v1775
        %v1792 = vpack.c.b16 %v1778, %v1777
        %v1793 = vpack.c.b16 %v1780, %v1779
        %v1794 = vpack.c.b16 %v1782, %v1781
        %1807 = vmatpush.bf16.msra.mxu0 %v1790
        %1808 = vmatpush.bf16.msra.mxu0 %v1789
        %1809 = vmatpush.bf16.msra.mxu0 %v1788
        %1810 = vmatpush.bf16.msra.mxu0 %v1787
        %1811 = vmatpush.bf16.msra.mxu0 %v1786
        %1812 = vmatpush.bf16.msra.mxu0 %v1785
        %1813 = vmatpush.bf16.msra.mxu0 %v1784
        %1814 = vmatpush.bf16.msra.mxu0 %v1783
        %1815 = vmatmul.bf16.gmra.mxu0 %v785
        %v1816 = vpop.f32.mrf.mxu0
        %v1817 = vadd.f32 0.0, %v1816
        %v1818 = vpop.f32.mrf.mxu0
        %v1819 = vadd.f32 0.0, %v1818
        %1820 = vmatmul.bf16.gmra.mxu0 %v787
        %v1821 = vpop.f32.mrf.mxu0
        %v1822 = vadd.f32 0.0, %v1821
        %v1823 = vpop.f32.mrf.mxu0
        %v1824 = vadd.f32 0.0, %v1823
        %1825 = vdwg.mxu0
        %1826 = vmatpush.bf16.msra.mxu0 0
        %1827 = vmatpush.bf16.msra.mxu0 0
        %1828 = vmatpush.bf16.msra.mxu0 0
        %1829 = vmatpush.bf16.msra.mxu0 0
        %1830 = vmatpush.bf16.msra.mxu0 %v1794
        %1831 = vmatpush.bf16.msra.mxu0 %v1793
        %1832 = vmatpush.bf16.msra.mxu0 %v1792
        %1833 = vmatpush.bf16.msra.mxu0 %v1791
        %1834 = vmatmul.bf16.gmra.mxu0 %v864
        %v1835 = vpop.f32.mrf.mxu0
        %v1836 = vadd.f32 %v1817, %v1835
        %v1837 = vpop.f32.mrf.mxu0
        %v1838 = vadd.f32 %v1819, %v1837
        %1839 = vmatmul.bf16.gmra.mxu0 %v867
        %v1840 = vpop.f32.mrf.mxu0
        %v1841 = vadd.f32 %v1822, %v1840
        %v1842 = vpop.f32.mrf.mxu0
        %v1843 = vadd.f32 %v1824, %v1842
        %1844 = vdwg.mxu0
        %v1869 = vunpack.c.l.b16 %v1529
        %v1870 = vunpack.c.l.b16 %v1530
        %v1871 = vunpack.c.l.b16 %v1531
        %v1872 = vunpack.c.l.b16 %v1532
        %v1873 = vunpack.c.l.b16 %v1533
        %v1874 = vunpack.c.l.b16 %v1534
        %v1875 = vunpack.c.l.b16 %v1535
        %v1876 = vunpack.c.l.b16 %v1536
        %v1877 = vunpack.c.l.b16 %v1537
        %v1878 = vunpack.c.l.b16 %v1538
        %v1879 = vunpack.c.l.b16 %v1539
        %v1880 = vunpack.c.l.b16 %v1540
        %v1881 = vunpack.c.l.b16 %v1541
        %v1882 = vunpack.c.l.b16 %v1542
        %v1883 = vunpack.c.l.b16 %v1543
        %v1884 = vunpack.c.l.b16 %v1544
        %v1885 = vunpack.c.l.b16 %v1545
        %v1886 = vunpack.c.l.b16 %v1546
        %v1887 = vunpack.c.l.b16 %v1547
        %v1888 = vunpack.c.l.b16 %v1548
        %v1889 = vunpack.c.l.b16 %v1549
        %v1890 = vunpack.c.l.b16 %v1550
        %v1891 = vunpack.c.l.b16 %v1551
        %v1892 = vunpack.c.l.b16 %v1552
        %v1893 = vpack.c.b16 %v1870, %v1869
        %v1894 = vpack.c.b16 %v1872, %v1871
        %v1895 = vpack.c.b16 %v1874, %v1873
        %v1896 = vpack.c.b16 %v1876, %v1875
        %v1897 = vpack.c.b16 %v1878, %v1877
        %v1898 = vpack.c.b16 %v1880, %v1879
        %v1899 = vpack.c.b16 %v1882, %v1881
        %v1900 = vpack.c.b16 %v1884, %v1883
        %v1901 = vpack.c.b16 %v1886, %v1885
        %v1902 = vpack.c.b16 %v1888, %v1887
        %v1903 = vpack.c.b16 %v1890, %v1889
        %v1904 = vpack.c.b16 %v1892, %v1891
        %1917 = vmatpush.bf16.msra.mxu0 %v1900
        %1918 = vmatpush.bf16.msra.mxu0 %v1899
        %1919 = vmatpush.bf16.msra.mxu0 %v1898
        %1920 = vmatpush.bf16.msra.mxu0 %v1897
        %1921 = vmatpush.bf16.msra.mxu0 %v1896
        %1922 = vmatpush.bf16.msra.mxu0 %v1895
        %1923 = vmatpush.bf16.msra.mxu0 %v1894
        %1924 = vmatpush.bf16.msra.mxu0 %v1893
        %1925 = vmatmul.bf16.gmra.mxu0 %v785
        %v1926 = vpop.f32.mrf.mxu0
        %v1927 = vadd.f32 0.0, %v1926
        %v1928 = vpop.f32.mrf.mxu0
        %v1929 = vadd.f32 0.0, %v1928
        %1930 = vmatmul.bf16.gmra.mxu0 %v787
        %v1931 = vpop.f32.mrf.mxu0
        %v1932 = vadd.f32 0.0, %v1931
        %v1933 = vpop.f32.mrf.mxu0
        %v1934 = vadd.f32 0.0, %v1933
        %1935 = vdwg.mxu0
        %1936 = vmatpush.bf16.msra.mxu0 0
        %1937 = vmatpush.bf16.msra.mxu0 0
        %1938 = vmatpush.bf16.msra.mxu0 0
        %1939 = vmatpush.bf16.msra.mxu0 0
        %1940 = vmatpush.bf16.msra.mxu0 %v1904
        %1941 = vmatpush.bf16.msra.mxu0 %v1903
        %1942 = vmatpush.bf16.msra.mxu0 %v1902
        %1943 = vmatpush.bf16.msra.mxu0 %v1901
        %1944 = vmatmul.bf16.gmra.mxu0 %v864
        %v1945 = vpop.f32.mrf.mxu0
        %v1946 = vadd.f32 %v1927, %v1945
        %v1947 = vpop.f32.mrf.mxu0
        %v1948 = vadd.f32 %v1929, %v1947
        %1949 = vmatmul.bf16.gmra.mxu0 %v867
        %v1950 = vpop.f32.mrf.mxu0
        %v1951 = vadd.f32 %v1932, %v1950
        %v1952 = vpop.f32.mrf.mxu0
        %v1953 = vadd.f32 %v1934, %v1952
        %1954 = vdwg.mxu0
        %v1979 = vunpack.c.l.b16 %v1553
        %v1980 = vunpack.c.l.b16 %v1554
        %v1981 = vunpack.c.l.b16 %v1555
        %v1982 = vunpack.c.l.b16 %v1556
        %v1983 = vunpack.c.l.b16 %v1557
        %v1984 = vunpack.c.l.b16 %v1558
        %v1985 = vunpack.c.l.b16 %v1559
        %v1986 = vunpack.c.l.b16 %v1560
        %v1987 = vunpack.c.l.b16 %v1561
        %v1988 = vunpack.c.l.b16 %v1562
        %v1989 = vunpack.c.l.b16 %v1563
        %v1990 = vunpack.c.l.b16 %v1564
        %v1991 = vunpack.c.l.b16 %v1565
        %v1992 = vunpack.c.l.b16 %v1566
        %v1993 = vunpack.c.l.b16 %v1567
        %v1994 = vunpack.c.l.b16 %v1568
        %v1995 = vunpack.c.l.b16 %v1569
        %v1996 = vunpack.c.l.b16 %v1570
        %v1997 = vunpack.c.l.b16 %v1571
        %v1998 = vunpack.c.l.b16 %v1572
        %v1999 = vunpack.c.l.b16 %v1573
        %v2000 = vunpack.c.l.b16 %v1574
        %v2001 = vunpack.c.l.b16 %v1575
        %v2002 = vunpack.c.l.b16 %v1576
        %v2003 = vpack.c.b16 %v1980, %v1979
        %v2004 = vpack.c.b16 %v1982, %v1981
        %v2005 = vpack.c.b16 %v1984, %v1983
        %v2006 = vpack.c.b16 %v1986, %v1985
        %v2007 = vpack.c.b16 %v1988, %v1987
        %v2008 = vpack.c.b16 %v1990, %v1989
        %v2009 = vpack.c.b16 %v1992, %v1991
        %v2010 = vpack.c.b16 %v1994, %v1993
        %v2011 = vpack.c.b16 %v1996, %v1995
        %v2012 = vpack.c.b16 %v1998, %v1997
        %v2013 = vpack.c.b16 %v2000, %v1999
        %v2014 = vpack.c.b16 %v2002, %v2001
        %2027 = vmatpush.bf16.msra.mxu0 %v2010
        %2028 = vmatpush.bf16.msra.mxu0 %v2009
        %2029 = vmatpush.bf16.msra.mxu0 %v2008
        %2030 = vmatpush.bf16.msra.mxu0 %v2007
        %2031 = vmatpush.bf16.msra.mxu0 %v2006
        %2032 = vmatpush.bf16.msra.mxu0 %v2005
        %2033 = vmatpush.bf16.msra.mxu0 %v2004
        %2034 = vmatpush.bf16.msra.mxu0 %v2003
        %2035 = vmatmul.bf16.gmra.mxu0 %v785
        %v2036 = vpop.f32.mrf.mxu0
        %v2037 = vadd.f32 0.0, %v2036
        %v2038 = vpop.f32.mrf.mxu0
        %v2039 = vadd.f32 0.0, %v2038
        %2040 = vmatmul.bf16.gmra.mxu0 %v787
        %v2041 = vpop.f32.mrf.mxu0
        %v2042 = vadd.f32 0.0, %v2041
        %v2043 = vpop.f32.mrf.mxu0
        %v2044 = vadd.f32 0.0, %v2043
        %2045 = vdwg.mxu0
        %2046 = vmatpush.bf16.msra.mxu0 0
        %2047 = vmatpush.bf16.msra.mxu0 0
        %2048 = vmatpush.bf16.msra.mxu0 0
        %2049 = vmatpush.bf16.msra.mxu0 0
        %2050 = vmatpush.bf16.msra.mxu0 %v2014
        %2051 = vmatpush.bf16.msra.mxu0 %v2013
        %2052 = vmatpush.bf16.msra.mxu0 %v2012
        %2053 = vmatpush.bf16.msra.mxu0 %v2011
        %2054 = vmatmul.bf16.gmra.mxu0 %v864
        %v2055 = vpop.f32.mrf.mxu0
        %v2056 = vadd.f32 %v2037, %v2055
        %v2057 = vpop.f32.mrf.mxu0
        %v2058 = vadd.f32 %v2039, %v2057
        %2059 = vmatmul.bf16.gmra.mxu0 %v867
        %v2060 = vpop.f32.mrf.mxu0
        %v2061 = vadd.f32 %v2042, %v2060
        %v2062 = vpop.f32.mrf.mxu0
        %v2063 = vadd.f32 %v2044, %v2062
        %2064 = vdwg.mxu0
        %v2089 = vunpack.c.l.b16 %v1577
        %v2090 = vunpack.c.l.b16 %v1578
        %v2091 = vunpack.c.l.b16 %v1579
        %v2092 = vunpack.c.l.b16 %v1580
        %v2093 = vunpack.c.l.b16 %v1581
        %v2094 = vunpack.c.l.b16 %v1582
        %v2095 = vunpack.c.l.b16 %v1583
        %v2096 = vunpack.c.l.b16 %v1584
        %v2097 = vunpack.c.l.b16 %v1585
        %v2098 = vunpack.c.l.b16 %v1586
        %v2099 = vunpack.c.l.b16 %v1587
        %v2100 = vunpack.c.l.b16 %v1588
        %v2101 = vunpack.c.l.b16 %v1589
        %v2102 = vunpack.c.l.b16 %v1590
        %v2103 = vunpack.c.l.b16 %v1591
        %v2104 = vunpack.c.l.b16 %v1592
        %v2105 = vunpack.c.l.b16 %v1593
        %v2106 = vunpack.c.l.b16 %v1594
        %v2107 = vunpack.c.l.b16 %v1595
        %v2108 = vunpack.c.l.b16 %v1596
        %v2109 = vunpack.c.l.b16 %v1597
        %v2110 = vunpack.c.l.b16 %v1598
        %v2111 = vunpack.c.l.b16 %v1599
        %v2112 = vunpack.c.l.b16 %v1600
        %v2113 = vpack.c.b16 %v2090, %v2089
        %v2114 = vpack.c.b16 %v2092, %v2091
        %v2115 = vpack.c.b16 %v2094, %v2093
        %v2116 = vpack.c.b16 %v2096, %v2095
        %v2117 = vpack.c.b16 %v2098, %v2097
        %v2118 = vpack.c.b16 %v2100, %v2099
        %v2119 = vpack.c.b16 %v2102, %v2101
        %v2120 = vpack.c.b16 %v2104, %v2103
        %v2121 = vpack.c.b16 %v2106, %v2105
        %v2122 = vpack.c.b16 %v2108, %v2107
        %v2123 = vpack.c.b16 %v2110, %v2109
        %v2124 = vpack.c.b16 %v2112, %v2111
        %2137 = vmatpush.bf16.msra.mxu0 %v2120
        %2138 = vmatpush.bf16.msra.mxu0 %v2119
        %2139 = vmatpush.bf16.msra.mxu0 %v2118
        %2140 = vmatpush.bf16.msra.mxu0 %v2117
        %2141 = vmatpush.bf16.msra.mxu0 %v2116
        %2142 = vmatpush.bf16.msra.mxu0 %v2115
        %2143 = vmatpush.bf16.msra.mxu0 %v2114
        %2144 = vmatpush.bf16.msra.mxu0 %v2113
        %2145 = vmatmul.bf16.gmra.mxu0 %v785
        %v2146 = vpop.f32.mrf.mxu0
        %v2147 = vadd.f32 0.0, %v2146
        %v2148 = vpop.f32.mrf.mxu0
        %v2149 = vadd.f32 0.0, %v2148
        %2150 = vmatmul.bf16.gmra.mxu0 %v787
        %v2151 = vpop.f32.mrf.mxu0
        %v2152 = vadd.f32 0.0, %v2151
        %v2153 = vpop.f32.mrf.mxu0
        %v2154 = vadd.f32 0.0, %v2153
        %2155 = vdwg.mxu0
        %2156 = vmatpush.bf16.msra.mxu0 0
        %2157 = vmatpush.bf16.msra.mxu0 0
        %2158 = vmatpush.bf16.msra.mxu0 0
        %2159 = vmatpush.bf16.msra.mxu0 0
        %2160 = vmatpush.bf16.msra.mxu0 %v2124
        %2161 = vmatpush.bf16.msra.mxu0 %v2123
        %2162 = vmatpush.bf16.msra.mxu0 %v2122
        %2163 = vmatpush.bf16.msra.mxu0 %v2121
        %2164 = vmatmul.bf16.gmra.mxu0 %v864
        %v2165 = vpop.f32.mrf.mxu0
        %v2166 = vadd.f32 %v2147, %v2165
        %v2167 = vpop.f32.mrf.mxu0
        %v2168 = vadd.f32 %v2149, %v2167
        %2169 = vmatmul.bf16.gmra.mxu0 %v867
        %v2170 = vpop.f32.mrf.mxu0
        %v2171 = vadd.f32 %v2152, %v2170
        %v2172 = vpop.f32.mrf.mxu0
        %v2173 = vadd.f32 %v2154, %v2172
        %2174 = vdwg.mxu0
        %v2199 = vunpack.c.l.b16 %v1601
        %v2200 = vunpack.c.l.b16 %v1602
        %v2201 = vunpack.c.l.b16 %v1603
        %v2202 = vunpack.c.l.b16 %v1604
        %v2203 = vunpack.c.l.b16 %v1605
        %v2204 = vunpack.c.l.b16 %v1606
        %v2205 = vunpack.c.l.b16 %v1607
        %v2206 = vunpack.c.l.b16 %v1608
        %v2207 = vunpack.c.l.b16 %v1609
        %v2208 = vunpack.c.l.b16 %v1610
        %v2209 = vunpack.c.l.b16 %v1611
        %v2210 = vunpack.c.l.b16 %v1612
        %v2211 = vunpack.c.l.b16 %v1613
        %v2212 = vunpack.c.l.b16 %v1614
        %v2213 = vunpack.c.l.b16 %v1615
        %v2214 = vunpack.c.l.b16 %v1616
        %v2215 = vunpack.c.l.b16 %v1617
        %v2216 = vunpack.c.l.b16 %v1618
        %v2217 = vunpack.c.l.b16 %v1619
        %v2218 = vunpack.c.l.b16 %v1620
        %v2219 = vunpack.c.l.b16 %v1621
        %v2220 = vunpack.c.l.b16 %v1622
        %v2221 = vunpack.c.l.b16 %v1623
        %v2222 = vunpack.c.l.b16 %v1624
        %v2223 = vpack.c.b16 %v2200, %v2199
        %v2224 = vpack.c.b16 %v2202, %v2201
        %v2225 = vpack.c.b16 %v2204, %v2203
        %v2226 = vpack.c.b16 %v2206, %v2205
        %v2227 = vpack.c.b16 %v2208, %v2207
        %v2228 = vpack.c.b16 %v2210, %v2209
        %v2229 = vpack.c.b16 %v2212, %v2211
        %v2230 = vpack.c.b16 %v2214, %v2213
        %v2231 = vpack.c.b16 %v2216, %v2215
        %v2232 = vpack.c.b16 %v2218, %v2217
        %v2233 = vpack.c.b16 %v2220, %v2219
        %v2234 = vpack.c.b16 %v2222, %v2221
        %2247 = vmatpush.bf16.msra.mxu0 %v2230
        %2248 = vmatpush.bf16.msra.mxu0 %v2229
        %2249 = vmatpush.bf16.msra.mxu0 %v2228
        %2250 = vmatpush.bf16.msra.mxu0 %v2227
        %2251 = vmatpush.bf16.msra.mxu0 %v2226
        %2252 = vmatpush.bf16.msra.mxu0 %v2225
        %2253 = vmatpush.bf16.msra.mxu0 %v2224
        %2254 = vmatpush.bf16.msra.mxu0 %v2223
        %2255 = vmatmul.bf16.gmra.mxu0 %v785
        %v2256 = vpop.f32.mrf.mxu0
        %v2257 = vadd.f32 0.0, %v2256
        %v2258 = vpop.f32.mrf.mxu0
        %v2259 = vadd.f32 0.0, %v2258
        %2260 = vmatmul.bf16.gmra.mxu0 %v787
        %v2261 = vpop.f32.mrf.mxu0
        %v2262 = vadd.f32 0.0, %v2261
        %v2263 = vpop.f32.mrf.mxu0
        %v2264 = vadd.f32 0.0, %v2263
        %2265 = vdwg.mxu0
        %2266 = vmatpush.bf16.msra.mxu0 0
        %2267 = vmatpush.bf16.msra.mxu0 0
        %2268 = vmatpush.bf16.msra.mxu0 0
        %2269 = vmatpush.bf16.msra.mxu0 0
        %2270 = vmatpush.bf16.msra.mxu0 %v2234
        %2271 = vmatpush.bf16.msra.mxu0 %v2233
        %2272 = vmatpush.bf16.msra.mxu0 %v2232
        %2273 = vmatpush.bf16.msra.mxu0 %v2231
        %2274 = vmatmul.bf16.gmra.mxu0 %v864
        %v2275 = vpop.f32.mrf.mxu0
        %v2276 = vadd.f32 %v2257, %v2275
        %v2277 = vpop.f32.mrf.mxu0
        %v2278 = vadd.f32 %v2259, %v2277
        %2279 = vmatmul.bf16.gmra.mxu0 %v867
        %v2280 = vpop.f32.mrf.mxu0
        %v2281 = vadd.f32 %v2262, %v2280
        %v2282 = vpop.f32.mrf.mxu0
        %v2283 = vadd.f32 %v2264, %v2282
        %2284 = vdwg.mxu0
        %v2285 = vpack.c.bf16 %v1726, %v1726
        %v2286 = vpack.c.bf16 %v1728, %v1728
        %v2287 = vpack.c.bf16 %v1731, %v1731
        %v2288 = vpack.c.bf16 %v1733, %v1733
        %v2289 = vpack.c.bf16 %v1836, %v1836
        %v2290 = vpack.c.bf16 %v1838, %v1838
        %v2291 = vpack.c.bf16 %v1841, %v1841
        %v2292 = vpack.c.bf16 %v1843, %v1843
        %v2293 = vpack.c.bf16 %v1946, %v1946
        %v2294 = vpack.c.bf16 %v1948, %v1948
        %v2295 = vpack.c.bf16 %v1951, %v1951
        %v2296 = vpack.c.bf16 %v1953, %v1953
        %v2297 = vpack.c.bf16 %v2056, %v2056
        %v2298 = vpack.c.bf16 %v2058, %v2058
        %v2299 = vpack.c.bf16 %v2061, %v2061
        %v2300 = vpack.c.bf16 %v2063, %v2063
        %v2301 = vpack.c.bf16 %v2166, %v2166
        %v2302 = vpack.c.bf16 %v2168, %v2168
        %v2303 = vpack.c.bf16 %v2171, %v2171
        %v2304 = vpack.c.bf16 %v2173, %v2173
        %v2305 = vpack.c.bf16 %v2276, %v2276
        %v2306 = vpack.c.bf16 %v2278, %v2278
        %v2307 = vpack.c.bf16 %v2281, %v2281
        %v2308 = vpack.c.bf16 %v2283, %v2283
        %v2309 = vld [vmem:[%s5] sm:$0xf]
        %v2310 = vld [vmem:[%s5 + $0x4] sm:$0xf]
        %v2311 = vld [vmem:[%s5 + $0x8] sm:$0xf]
        %v2312 = vld [vmem:[%s5 + $0xc] sm:$0xf]
        %v2313 = vld [vmem:[%s5 + $0x10] sm:$0xf]
        %v2314 = vld [vmem:[%s5 + $0x14] sm:$0xf]
        %v2315 = vld [vmem:[%s5 + $0x18] sm:$0xf]
        %v2316 = vld [vmem:[%s5 + $0x1c] sm:$0xf]
        %v2317 = vld [vmem:[%s5 + $0x20] sm:$0xf]
        %v2318 = vld [vmem:[%s5 + $0x24] sm:$0xf]
        %v2319 = vld [vmem:[%s5 + $0x28] sm:$0xf]
        %v2320 = vld [vmem:[%s5 + $0x2c] sm:$0xf]
        %v2321 = vld [vmem:[%s5 + $0x30] sm:$0xf]
        %v2322 = vld [vmem:[%s5 + $0x34] sm:$0xf]
        %v2323 = vld [vmem:[%s5 + $0x38] sm:$0xf]
        %v2324 = vld [vmem:[%s5 + $0x3c] sm:$0xf]
        %v2325 = vld [vmem:[%s5 + $0x40] sm:$0xf]
        %v2326 = vld [vmem:[%s5 + $0x44] sm:$0xf]
        %v2327 = vld [vmem:[%s5 + $0x48] sm:$0xf]
        %v2328 = vld [vmem:[%s5 + $0x4c] sm:$0xf]
        %v2329 = vld [vmem:[%s5 + $0x50] sm:$0xf]
        %v2330 = vld [vmem:[%s5 + $0x54] sm:$0xf]
        %v2331 = vld [vmem:[%s5 + $0x58] sm:$0xf]
        %v2332 = vld [vmem:[%s5 + $0x5c] sm:$0xf]
        %v2333 = vld [vmem:[%s5 + $0x60] sm:$0xf]
        %v2334 = vld [vmem:[%s5 + $0x64] sm:$0xf]
        %v2335 = vld [vmem:[%s5 + $0x68] sm:$0xf]
        %v2336 = vld [vmem:[%s5 + $0x6c] sm:$0xf]
        %v2337 = vld [vmem:[%s5 + $0x70] sm:$0xf]
        %v2338 = vld [vmem:[%s5 + $0x74] sm:$0xf]
        %v2339 = vld [vmem:[%s5 + $0x78] sm:$0xf]
        %v2340 = vld [vmem:[%s5 + $0x7c] sm:$0xf]
        %v2341 = vld [vmem:[%s5 + $0x80] sm:$0xf]
        %v2342 = vld [vmem:[%s5 + $0x84] sm:$0xf]
        %v2343 = vld [vmem:[%s5 + $0x88] sm:$0xf]
        %v2344 = vld [vmem:[%s5 + $0x8c] sm:$0xf]
        %v2345 = vld [vmem:[%s5 + $0x90] sm:$0xf]
        %v2346 = vld [vmem:[%s5 + $0x94] sm:$0xf]
        %v2347 = vld [vmem:[%s5 + $0x98] sm:$0xf]
        %v2348 = vld [vmem:[%s5 + $0x9c] sm:$0xf]
        %v2349 = vld [vmem:[%s5 + $0xa0] sm:$0xf]
        %v2350 = vld [vmem:[%s5 + $0xa4] sm:$0xf]
        %v2351 = vld [vmem:[%s5 + $0xa8] sm:$0xf]
        %v2352 = vld [vmem:[%s5 + $0xac] sm:$0xf]
        %v2353 = vld [vmem:[%s5 + $0xb0] sm:$0xf]
        %v2354 = vld [vmem:[%s5 + $0xb4] sm:$0xf]
        %v2355 = vld [vmem:[%s5 + $0xb8] sm:$0xf]
        %v2356 = vld [vmem:[%s5 + $0xbc] sm:$0xf]
        %v2357 = vld [vmem:[%s5 + $0xc0] sm:$0xf]
        %v2358 = vld [vmem:[%s5 + $0xc4] sm:$0xf]
        %v2359 = vld [vmem:[%s5 + $0xc8] sm:$0xf]
        %v2360 = vld [vmem:[%s5 + $0xcc] sm:$0xf]
        %v2361 = vld [vmem:[%s5 + $0xd0] sm:$0xf]
        %v2362 = vld [vmem:[%s5 + $0xd4] sm:$0xf]
        %v2363 = vld [vmem:[%s5 + $0xd8] sm:$0xf]
        %v2364 = vld [vmem:[%s5 + $0xdc] sm:$0xf]
        %v2365 = vld [vmem:[%s5 + $0xe0] sm:$0xf]
        %v2366 = vld [vmem:[%s5 + $0xe4] sm:$0xf]
        %v2367 = vld [vmem:[%s5 + $0xe8] sm:$0xf]
        %v2368 = vld [vmem:[%s5 + $0xec] sm:$0xf]
        %v2369 = vld [vmem:[%s5 + $0xf0] sm:$0xf]
        %v2370 = vld [vmem:[%s5 + $0xf4] sm:$0xf]
        %v2371 = vld [vmem:[%s5 + $0xf8] sm:$0xf]
        %v2372 = vld [vmem:[%s5 + $0xfc] sm:$0xf]
        %v2373 = vld [vmem:[%s5 + $0x100] sm:$0xf]
        %v2374 = vld [vmem:[%s5 + $0x104] sm:$0xf]
        %v2375 = vld [vmem:[%s5 + $0x108] sm:$0xf]
        %v2376 = vld [vmem:[%s5 + $0x10c] sm:$0xf]
        %v2377 = vld [vmem:[%s5 + $0x110] sm:$0xf]
        %v2378 = vld [vmem:[%s5 + $0x114] sm:$0xf]
        %v2379 = vld [vmem:[%s5 + $0x118] sm:$0xf]
        %v2380 = vld [vmem:[%s5 + $0x11c] sm:$0xf]
        %v2381 = vld [vmem:[%s5 + $0x120] sm:$0xf]
        %v2382 = vld [vmem:[%s5 + $0x124] sm:$0xf]
        %v2383 = vld [vmem:[%s5 + $0x128] sm:$0xf]
        %v2384 = vld [vmem:[%s5 + $0x12c] sm:$0xf]
        %v2385 = vld [vmem:[%s5 + $0x130] sm:$0xf]
        %v2386 = vld [vmem:[%s5 + $0x134] sm:$0xf]
        %v2387 = vld [vmem:[%s5 + $0x138] sm:$0xf]
        %v2388 = vld [vmem:[%s5 + $0x13c] sm:$0xf]
        %v2389 = vld [vmem:[%s5 + $0x140] sm:$0xf]
        %v2390 = vld [vmem:[%s5 + $0x144] sm:$0xf]
        %v2391 = vld [vmem:[%s5 + $0x148] sm:$0xf]
        %v2392 = vld [vmem:[%s5 + $0x14c] sm:$0xf]
        %v2393 = vld [vmem:[%s5 + $0x150] sm:$0xf]
        %v2394 = vld [vmem:[%s5 + $0x154] sm:$0xf]
        %v2395 = vld [vmem:[%s5 + $0x158] sm:$0xf]
        %v2396 = vld [vmem:[%s5 + $0x15c] sm:$0xf]
        %v2397 = vld [vmem:[%s5 + $0x160] sm:$0xf]
        %v2398 = vld [vmem:[%s5 + $0x164] sm:$0xf]
        %v2399 = vld [vmem:[%s5 + $0x168] sm:$0xf]
        %v2400 = vld [vmem:[%s5 + $0x16c] sm:$0xf]
        %v2401 = vld [vmem:[%s5 + $0x170] sm:$0xf]
        %v2402 = vld [vmem:[%s5 + $0x174] sm:$0xf]
        %v2403 = vld [vmem:[%s5 + $0x178] sm:$0xf]
        %v2404 = vld [vmem:[%s5 + $0x17c] sm:$0xf]
        %v2405 = vld [vmem:[%s5 + $0x180] sm:$0xf]
        %v2406 = vld [vmem:[%s5 + $0x184] sm:$0xf]
        %v2407 = vld [vmem:[%s5 + $0x188] sm:$0xf]
        %v2408 = vld [vmem:[%s5 + $0x18c] sm:$0xf]
        %v2409 = vld [vmem:[%s5 + $0x190] sm:$0xf]
        %v2410 = vld [vmem:[%s5 + $0x194] sm:$0xf]
        %v2411 = vld [vmem:[%s5 + $0x198] sm:$0xf]
        %v2412 = vld [vmem:[%s5 + $0x19c] sm:$0xf]
        %v2413 = vld [vmem:[%s5 + $0x1a0] sm:$0xf]
        %v2414 = vld [vmem:[%s5 + $0x1a4] sm:$0xf]
        %v2415 = vld [vmem:[%s5 + $0x1a8] sm:$0xf]
        %v2416 = vld [vmem:[%s5 + $0x1ac] sm:$0xf]
        %v2417 = vld [vmem:[%s5 + $0x1b0] sm:$0xf]
        %v2418 = vld [vmem:[%s5 + $0x1b4] sm:$0xf]
        %v2419 = vld [vmem:[%s5 + $0x1b8] sm:$0xf]
        %v2420 = vld [vmem:[%s5 + $0x1bc] sm:$0xf]
        %v2421 = vld [vmem:[%s5 + $0x1c0] sm:$0xf]
        %v2422 = vld [vmem:[%s5 + $0x1c4] sm:$0xf]
        %v2423 = vld [vmem:[%s5 + $0x1c8] sm:$0xf]
        %v2424 = vld [vmem:[%s5 + $0x1cc] sm:$0xf]
        %v2425 = vld [vmem:[%s5 + $0x1d0] sm:$0xf]
        %v2426 = vld [vmem:[%s5 + $0x1d4] sm:$0xf]
        %v2427 = vld [vmem:[%s5 + $0x1d8] sm:$0xf]
        %v2428 = vld [vmem:[%s5 + $0x1dc] sm:$0xf]
        %v2429 = vld [vmem:[%s5 + $0x1e0] sm:$0xf]
        %v2430 = vld [vmem:[%s5 + $0x1e4] sm:$0xf]
        %v2431 = vld [vmem:[%s5 + $0x1e8] sm:$0xf]
        %v2432 = vld [vmem:[%s5 + $0x1ec] sm:$0xf]
        %v2433 = vld [vmem:[%s5 + $0x1f0] sm:$0xf]
        %v2434 = vld [vmem:[%s5 + $0x1f4] sm:$0xf]
        %v2435 = vld [vmem:[%s5 + $0x1f8] sm:$0xf]
        %v2436 = vld [vmem:[%s5 + $0x1fc] sm:$0xf]
        %v2437 = vld [vmem:[%s5 + $0x200] sm:$0xf]
        %v2438 = vld [vmem:[%s5 + $0x204] sm:$0xf]
        %v2439 = vld [vmem:[%s5 + $0x208] sm:$0xf]
        %v2440 = vld [vmem:[%s5 + $0x20c] sm:$0xf]
        %v2441 = vld [vmem:[%s5 + $0x210] sm:$0xf]
        %v2442 = vld [vmem:[%s5 + $0x214] sm:$0xf]
        %v2443 = vld [vmem:[%s5 + $0x218] sm:$0xf]
        %v2444 = vld [vmem:[%s5 + $0x21c] sm:$0xf]
        %v2445 = vld [vmem:[%s5 + $0x220] sm:$0xf]
        %v2446 = vld [vmem:[%s5 + $0x224] sm:$0xf]
        %v2447 = vld [vmem:[%s5 + $0x228] sm:$0xf]
        %v2448 = vld [vmem:[%s5 + $0x22c] sm:$0xf]
        %v2449 = vld [vmem:[%s5 + $0x230] sm:$0xf]
        %v2450 = vld [vmem:[%s5 + $0x234] sm:$0xf]
        %v2451 = vld [vmem:[%s5 + $0x238] sm:$0xf]
        %v2452 = vld [vmem:[%s5 + $0x23c] sm:$0xf]
        %v2477 = vunpack.c.l.b16 %v2309
        %v2478 = vunpack.c.l.b16 %v2310
        %v2479 = vunpack.c.l.b16 %v2311
        %v2480 = vunpack.c.l.b16 %v2312
        %v2481 = vunpack.c.l.b16 %v2313
        %v2482 = vunpack.c.l.b16 %v2314
        %v2483 = vunpack.c.l.b16 %v2315
        %v2484 = vunpack.c.l.b16 %v2316
        %v2485 = vunpack.c.l.b16 %v2317
        %v2486 = vunpack.c.l.b16 %v2318
        %v2487 = vunpack.c.l.b16 %v2319
        %v2488 = vunpack.c.l.b16 %v2320
        %v2489 = vunpack.c.l.b16 %v2321
        %v2490 = vunpack.c.l.b16 %v2322
        %v2491 = vunpack.c.l.b16 %v2323
        %v2492 = vunpack.c.l.b16 %v2324
        %v2493 = vunpack.c.l.b16 %v2325
        %v2494 = vunpack.c.l.b16 %v2326
        %v2495 = vunpack.c.l.b16 %v2327
        %v2496 = vunpack.c.l.b16 %v2328
        %v2497 = vunpack.c.l.b16 %v2329
        %v2498 = vunpack.c.l.b16 %v2330
        %v2499 = vunpack.c.l.b16 %v2331
        %v2500 = vunpack.c.l.b16 %v2332
        %v2501 = vpack.c.b16 %v2478, %v2477
        %v2502 = vpack.c.b16 %v2480, %v2479
        %v2503 = vpack.c.b16 %v2482, %v2481
        %v2504 = vpack.c.b16 %v2484, %v2483
        %v2505 = vpack.c.b16 %v2486, %v2485
        %v2506 = vpack.c.b16 %v2488, %v2487
        %v2507 = vpack.c.b16 %v2490, %v2489
        %v2508 = vpack.c.b16 %v2492, %v2491
        %v2509 = vpack.c.b16 %v2494, %v2493
        %v2510 = vpack.c.b16 %v2496, %v2495
        %v2511 = vpack.c.b16 %v2498, %v2497
        %v2512 = vpack.c.b16 %v2500, %v2499
        %2525 = vmatpush.bf16.msra.mxu0 %v2508
        %2526 = vmatpush.bf16.msra.mxu0 %v2507
        %2527 = vmatpush.bf16.msra.mxu0 %v2506
        %2528 = vmatpush.bf16.msra.mxu0 %v2505
        %2529 = vmatpush.bf16.msra.mxu0 %v2504
        %2530 = vmatpush.bf16.msra.mxu0 %v2503
        %2531 = vmatpush.bf16.msra.mxu0 %v2502
        %2532 = vmatpush.bf16.msra.mxu0 %v2501
        %2533 = vmatmul.bf16.gmra.mxu0 %v785
        %v2534 = vpop.f32.mrf.mxu0
        %v2535 = vadd.f32 0.0, %v2534
        %v2536 = vpop.f32.mrf.mxu0
        %v2537 = vadd.f32 0.0, %v2536
        %2538 = vmatmul.bf16.gmra.mxu0 %v787
        %v2539 = vpop.f32.mrf.mxu0
        %v2540 = vadd.f32 0.0, %v2539
        %v2541 = vpop.f32.mrf.mxu0
        %v2542 = vadd.f32 0.0, %v2541
        %2543 = vdwg.mxu0
        %2544 = vmatpush.bf16.msra.mxu0 0
        %2545 = vmatpush.bf16.msra.mxu0 0
        %2546 = vmatpush.bf16.msra.mxu0 0
        %2547 = vmatpush.bf16.msra.mxu0 0
        %2548 = vmatpush.bf16.msra.mxu0 %v2512
        %2549 = vmatpush.bf16.msra.mxu0 %v2511
        %2550 = vmatpush.bf16.msra.mxu0 %v2510
        %2551 = vmatpush.bf16.msra.mxu0 %v2509
        %2552 = vmatmul.bf16.gmra.mxu0 %v864
        %v2553 = vpop.f32.mrf.mxu0
        %v2554 = vadd.f32 %v2535, %v2553
        %v2555 = vpop.f32.mrf.mxu0
        %v2556 = vadd.f32 %v2537, %v2555
        %2557 = vmatmul.bf16.gmra.mxu0 %v867
        %v2558 = vpop.f32.mrf.mxu0
        %v2559 = vadd.f32 %v2540, %v2558
        %v2560 = vpop.f32.mrf.mxu0
        %v2561 = vadd.f32 %v2542, %v2560
        %2562 = vdwg.mxu0
        %v2587 = vunpack.c.l.b16 %v2333
        %v2588 = vunpack.c.l.b16 %v2334
        %v2589 = vunpack.c.l.b16 %v2335
        %v2590 = vunpack.c.l.b16 %v2336
        %v2591 = vunpack.c.l.b16 %v2337
        %v2592 = vunpack.c.l.b16 %v2338
        %v2593 = vunpack.c.l.b16 %v2339
        %v2594 = vunpack.c.l.b16 %v2340
        %v2595 = vunpack.c.l.b16 %v2341
        %v2596 = vunpack.c.l.b16 %v2342
        %v2597 = vunpack.c.l.b16 %v2343
        %v2598 = vunpack.c.l.b16 %v2344
        %v2599 = vunpack.c.l.b16 %v2345
        %v2600 = vunpack.c.l.b16 %v2346
        %v2601 = vunpack.c.l.b16 %v2347
        %v2602 = vunpack.c.l.b16 %v2348
        %v2603 = vunpack.c.l.b16 %v2349
        %v2604 = vunpack.c.l.b16 %v2350
        %v2605 = vunpack.c.l.b16 %v2351
        %v2606 = vunpack.c.l.b16 %v2352
        %v2607 = vunpack.c.l.b16 %v2353
        %v2608 = vunpack.c.l.b16 %v2354
        %v2609 = vunpack.c.l.b16 %v2355
        %v2610 = vunpack.c.l.b16 %v2356
        %v2611 = vpack.c.b16 %v2588, %v2587
        %v2612 = vpack.c.b16 %v2590, %v2589
        %v2613 = vpack.c.b16 %v2592, %v2591
        %v2614 = vpack.c.b16 %v2594, %v2593
        %v2615 = vpack.c.b16 %v2596, %v2595
        %v2616 = vpack.c.b16 %v2598, %v2597
        %v2617 = vpack.c.b16 %v2600, %v2599
        %v2618 = vpack.c.b16 %v2602, %v2601
        %v2619 = vpack.c.b16 %v2604, %v2603
        %v2620 = vpack.c.b16 %v2606, %v2605
        %v2621 = vpack.c.b16 %v2608, %v2607
        %v2622 = vpack.c.b16 %v2610, %v2609
        %2635 = vmatpush.bf16.msra.mxu0 %v2618
        %2636 = vmatpush.bf16.msra.mxu0 %v2617
        %2637 = vmatpush.bf16.msra.mxu0 %v2616
        %2638 = vmatpush.bf16.msra.mxu0 %v2615
        %2639 = vmatpush.bf16.msra.mxu0 %v2614
        %2640 = vmatpush.bf16.msra.mxu0 %v2613
        %2641 = vmatpush.bf16.msra.mxu0 %v2612
        %2642 = vmatpush.bf16.msra.mxu0 %v2611
        %2643 = vmatmul.bf16.gmra.mxu0 %v785
        %v2644 = vpop.f32.mrf.mxu0
        %v2645 = vadd.f32 0.0, %v2644
        %v2646 = vpop.f32.mrf.mxu0
        %v2647 = vadd.f32 0.0, %v2646
        %2648 = vmatmul.bf16.gmra.mxu0 %v787
        %v2649 = vpop.f32.mrf.mxu0
        %v2650 = vadd.f32 0.0, %v2649
        %v2651 = vpop.f32.mrf.mxu0
        %v2652 = vadd.f32 0.0, %v2651
        %2653 = vdwg.mxu0
        %2654 = vmatpush.bf16.msra.mxu0 0
        %2655 = vmatpush.bf16.msra.mxu0 0
        %2656 = vmatpush.bf16.msra.mxu0 0
        %2657 = vmatpush.bf16.msra.mxu0 0
        %2658 = vmatpush.bf16.msra.mxu0 %v2622
        %2659 = vmatpush.bf16.msra.mxu0 %v2621
        %2660 = vmatpush.bf16.msra.mxu0 %v2620
        %2661 = vmatpush.bf16.msra.mxu0 %v2619
        %2662 = vmatmul.bf16.gmra.mxu0 %v864
        %v2663 = vpop.f32.mrf.mxu0
        %v2664 = vadd.f32 %v2645, %v2663
        %v2665 = vpop.f32.mrf.mxu0
        %v2666 = vadd.f32 %v2647, %v2665
        %2667 = vmatmul.bf16.gmra.mxu0 %v867
        %v2668 = vpop.f32.mrf.mxu0
        %v2669 = vadd.f32 %v2650, %v2668
        %v2670 = vpop.f32.mrf.mxu0
        %v2671 = vadd.f32 %v2652, %v2670
        %2672 = vdwg.mxu0
        %v2697 = vunpack.c.l.b16 %v2357
        %v2698 = vunpack.c.l.b16 %v2358
        %v2699 = vunpack.c.l.b16 %v2359
        %v2700 = vunpack.c.l.b16 %v2360
        %v2701 = vunpack.c.l.b16 %v2361
        %v2702 = vunpack.c.l.b16 %v2362
        %v2703 = vunpack.c.l.b16 %v2363
        %v2704 = vunpack.c.l.b16 %v2364
        %v2705 = vunpack.c.l.b16 %v2365
        %v2706 = vunpack.c.l.b16 %v2366
        %v2707 = vunpack.c.l.b16 %v2367
        %v2708 = vunpack.c.l.b16 %v2368
        %v2709 = vunpack.c.l.b16 %v2369
        %v2710 = vunpack.c.l.b16 %v2370
        %v2711 = vunpack.c.l.b16 %v2371
        %v2712 = vunpack.c.l.b16 %v2372
        %v2713 = vunpack.c.l.b16 %v2373
        %v2714 = vunpack.c.l.b16 %v2374
        %v2715 = vunpack.c.l.b16 %v2375
        %v2716 = vunpack.c.l.b16 %v2376
        %v2717 = vunpack.c.l.b16 %v2377
        %v2718 = vunpack.c.l.b16 %v2378
        %v2719 = vunpack.c.l.b16 %v2379
        %v2720 = vunpack.c.l.b16 %v2380
        %v2721 = vpack.c.b16 %v2698, %v2697
        %v2722 = vpack.c.b16 %v2700, %v2699
        %v2723 = vpack.c.b16 %v2702, %v2701
        %v2724 = vpack.c.b16 %v2704, %v2703
        %v2725 = vpack.c.b16 %v2706, %v2705
        %v2726 = vpack.c.b16 %v2708, %v2707
        %v2727 = vpack.c.b16 %v2710, %v2709
        %v2728 = vpack.c.b16 %v2712, %v2711
        %v2729 = vpack.c.b16 %v2714, %v2713
        %v2730 = vpack.c.b16 %v2716, %v2715
        %v2731 = vpack.c.b16 %v2718, %v2717
        %v2732 = vpack.c.b16 %v2720, %v2719
        %2745 = vmatpush.bf16.msra.mxu0 %v2728
        %2746 = vmatpush.bf16.msra.mxu0 %v2727
        %2747 = vmatpush.bf16.msra.mxu0 %v2726
        %2748 = vmatpush.bf16.msra.mxu0 %v2725
        %2749 = vmatpush.bf16.msra.mxu0 %v2724
        %2750 = vmatpush.bf16.msra.mxu0 %v2723
        %2751 = vmatpush.bf16.msra.mxu0 %v2722
        %2752 = vmatpush.bf16.msra.mxu0 %v2721
        %2753 = vmatmul.bf16.gmra.mxu0 %v785
        %v2754 = vpop.f32.mrf.mxu0
        %v2755 = vadd.f32 0.0, %v2754
        %v2756 = vpop.f32.mrf.mxu0
        %v2757 = vadd.f32 0.0, %v2756
        %2758 = vmatmul.bf16.gmra.mxu0 %v787
        %v2759 = vpop.f32.mrf.mxu0
        %v2760 = vadd.f32 0.0, %v2759
        %v2761 = vpop.f32.mrf.mxu0
        %v2762 = vadd.f32 0.0, %v2761
        %2763 = vdwg.mxu0
        %2764 = vmatpush.bf16.msra.mxu0 0
        %2765 = vmatpush.bf16.msra.mxu0 0
        %2766 = vmatpush.bf16.msra.mxu0 0
        %2767 = vmatpush.bf16.msra.mxu0 0
        %2768 = vmatpush.bf16.msra.mxu0 %v2732
        %2769 = vmatpush.bf16.msra.mxu0 %v2731
        %2770 = vmatpush.bf16.msra.mxu0 %v2730
        %2771 = vmatpush.bf16.msra.mxu0 %v2729
        %2772 = vmatmul.bf16.gmra.mxu0 %v864
        %v2773 = vpop.f32.mrf.mxu0
        %v2774 = vadd.f32 %v2755, %v2773
        %v2775 = vpop.f32.mrf.mxu0
        %v2776 = vadd.f32 %v2757, %v2775
        %2777 = vmatmul.bf16.gmra.mxu0 %v867
        %v2778 = vpop.f32.mrf.mxu0
        %v2779 = vadd.f32 %v2760, %v2778
        %v2780 = vpop.f32.mrf.mxu0
        %v2781 = vadd.f32 %v2762, %v2780
        %2782 = vdwg.mxu0
        %v2807 = vunpack.c.l.b16 %v2381
        %v2808 = vunpack.c.l.b16 %v2382
        %v2809 = vunpack.c.l.b16 %v2383
        %v2810 = vunpack.c.l.b16 %v2384
        %v2811 = vunpack.c.l.b16 %v2385
        %v2812 = vunpack.c.l.b16 %v2386
        %v2813 = vunpack.c.l.b16 %v2387
        %v2814 = vunpack.c.l.b16 %v2388
        %v2815 = vunpack.c.l.b16 %v2389
        %v2816 = vunpack.c.l.b16 %v2390
        %v2817 = vunpack.c.l.b16 %v2391
        %v2818 = vunpack.c.l.b16 %v2392
        %v2819 = vunpack.c.l.b16 %v2393
        %v2820 = vunpack.c.l.b16 %v2394
        %v2821 = vunpack.c.l.b16 %v2395
        %v2822 = vunpack.c.l.b16 %v2396
        %v2823 = vunpack.c.l.b16 %v2397
        %v2824 = vunpack.c.l.b16 %v2398
        %v2825 = vunpack.c.l.b16 %v2399
        %v2826 = vunpack.c.l.b16 %v2400
        %v2827 = vunpack.c.l.b16 %v2401
        %v2828 = vunpack.c.l.b16 %v2402
        %v2829 = vunpack.c.l.b16 %v2403
        %v2830 = vunpack.c.l.b16 %v2404
        %v2831 = vpack.c.b16 %v2808, %v2807
        %v2832 = vpack.c.b16 %v2810, %v2809
        %v2833 = vpack.c.b16 %v2812, %v2811
        %v2834 = vpack.c.b16 %v2814, %v2813
        %v2835 = vpack.c.b16 %v2816, %v2815
        %v2836 = vpack.c.b16 %v2818, %v2817
        %v2837 = vpack.c.b16 %v2820, %v2819
        %v2838 = vpack.c.b16 %v2822, %v2821
        %v2839 = vpack.c.b16 %v2824, %v2823
        %v2840 = vpack.c.b16 %v2826, %v2825
        %v2841 = vpack.c.b16 %v2828, %v2827
        %v2842 = vpack.c.b16 %v2830, %v2829
        %2855 = vmatpush.bf16.msra.mxu0 %v2838
        %2856 = vmatpush.bf16.msra.mxu0 %v2837
        %2857 = vmatpush.bf16.msra.mxu0 %v2836
        %2858 = vmatpush.bf16.msra.mxu0 %v2835
        %2859 = vmatpush.bf16.msra.mxu0 %v2834
        %2860 = vmatpush.bf16.msra.mxu0 %v2833
        %2861 = vmatpush.bf16.msra.mxu0 %v2832
        %2862 = vmatpush.bf16.msra.mxu0 %v2831
        %2863 = vmatmul.bf16.gmra.mxu0 %v785
        %v2864 = vpop.f32.mrf.mxu0
        %v2865 = vadd.f32 0.0, %v2864
        %v2866 = vpop.f32.mrf.mxu0
        %v2867 = vadd.f32 0.0, %v2866
        %2868 = vmatmul.bf16.gmra.mxu0 %v787
        %v2869 = vpop.f32.mrf.mxu0
        %v2870 = vadd.f32 0.0, %v2869
        %v2871 = vpop.f32.mrf.mxu0
        %v2872 = vadd.f32 0.0, %v2871
        %2873 = vdwg.mxu0
        %2874 = vmatpush.bf16.msra.mxu0 0
        %2875 = vmatpush.bf16.msra.mxu0 0
        %2876 = vmatpush.bf16.msra.mxu0 0
        %2877 = vmatpush.bf16.msra.mxu0 0
        %2878 = vmatpush.bf16.msra.mxu0 %v2842
        %2879 = vmatpush.bf16.msra.mxu0 %v2841
        %2880 = vmatpush.bf16.msra.mxu0 %v2840
        %2881 = vmatpush.bf16.msra.mxu0 %v2839
        %2882 = vmatmul.bf16.gmra.mxu0 %v864
        %v2883 = vpop.f32.mrf.mxu0
        %v2884 = vadd.f32 %v2865, %v2883
        %v2885 = vpop.f32.mrf.mxu0
        %v2886 = vadd.f32 %v2867, %v2885
        %2887 = vmatmul.bf16.gmra.mxu0 %v867
        %v2888 = vpop.f32.mrf.mxu0
        %v2889 = vadd.f32 %v2870, %v2888
        %v2890 = vpop.f32.mrf.mxu0
        %v2891 = vadd.f32 %v2872, %v2890
        %2892 = vdwg.mxu0
        %v2917 = vunpack.c.l.b16 %v2405
        %v2918 = vunpack.c.l.b16 %v2406
        %v2919 = vunpack.c.l.b16 %v2407
        %v2920 = vunpack.c.l.b16 %v2408
        %v2921 = vunpack.c.l.b16 %v2409
        %v2922 = vunpack.c.l.b16 %v2410
        %v2923 = vunpack.c.l.b16 %v2411
        %v2924 = vunpack.c.l.b16 %v2412
        %v2925 = vunpack.c.l.b16 %v2413
        %v2926 = vunpack.c.l.b16 %v2414
        %v2927 = vunpack.c.l.b16 %v2415
        %v2928 = vunpack.c.l.b16 %v2416
        %v2929 = vunpack.c.l.b16 %v2417
        %v2930 = vunpack.c.l.b16 %v2418
        %v2931 = vunpack.c.l.b16 %v2419
        %v2932 = vunpack.c.l.b16 %v2420
        %v2933 = vunpack.c.l.b16 %v2421
        %v2934 = vunpack.c.l.b16 %v2422
        %v2935 = vunpack.c.l.b16 %v2423
        %v2936 = vunpack.c.l.b16 %v2424
        %v2937 = vunpack.c.l.b16 %v2425
        %v2938 = vunpack.c.l.b16 %v2426
        %v2939 = vunpack.c.l.b16 %v2427
        %v2940 = vunpack.c.l.b16 %v2428
        %v2941 = vpack.c.b16 %v2918, %v2917
        %v2942 = vpack.c.b16 %v2920, %v2919
        %v2943 = vpack.c.b16 %v2922, %v2921
        %v2944 = vpack.c.b16 %v2924, %v2923
        %v2945 = vpack.c.b16 %v2926, %v2925
        %v2946 = vpack.c.b16 %v2928, %v2927
        %v2947 = vpack.c.b16 %v2930, %v2929
        %v2948 = vpack.c.b16 %v2932, %v2931
        %v2949 = vpack.c.b16 %v2934, %v2933
        %v2950 = vpack.c.b16 %v2936, %v2935
        %v2951 = vpack.c.b16 %v2938, %v2937
        %v2952 = vpack.c.b16 %v2940, %v2939
        %2965 = vmatpush.bf16.msra.mxu0 %v2948
        %2966 = vmatpush.bf16.msra.mxu0 %v2947
        %2967 = vmatpush.bf16.msra.mxu0 %v2946
        %2968 = vmatpush.bf16.msra.mxu0 %v2945
        %2969 = vmatpush.bf16.msra.mxu0 %v2944
        %2970 = vmatpush.bf16.msra.mxu0 %v2943
        %2971 = vmatpush.bf16.msra.mxu0 %v2942
        %2972 = vmatpush.bf16.msra.mxu0 %v2941
        %2973 = vmatmul.bf16.gmra.mxu0 %v785
        %v2974 = vpop.f32.mrf.mxu0
        %v2975 = vadd.f32 0.0, %v2974
        %v2976 = vpop.f32.mrf.mxu0
        %v2977 = vadd.f32 0.0, %v2976
        %2978 = vmatmul.bf16.gmra.mxu0 %v787
        %v2979 = vpop.f32.mrf.mxu0
        %v2980 = vadd.f32 0.0, %v2979
        %v2981 = vpop.f32.mrf.mxu0
        %v2982 = vadd.f32 0.0, %v2981
        %2983 = vdwg.mxu0
        %2984 = vmatpush.bf16.msra.mxu0 0
        %2985 = vmatpush.bf16.msra.mxu0 0
        %2986 = vmatpush.bf16.msra.mxu0 0
        %2987 = vmatpush.bf16.msra.mxu0 0
        %2988 = vmatpush.bf16.msra.mxu0 %v2952
        %2989 = vmatpush.bf16.msra.mxu0 %v2951
        %2990 = vmatpush.bf16.msra.mxu0 %v2950
        %2991 = vmatpush.bf16.msra.mxu0 %v2949
        %2992 = vmatmul.bf16.gmra.mxu0 %v864
        %v2993 = vpop.f32.mrf.mxu0
        %v2994 = vadd.f32 %v2975, %v2993
        %v2995 = vpop.f32.mrf.mxu0
        %v2996 = vadd.f32 %v2977, %v2995
        %2997 = vmatmul.bf16.gmra.mxu0 %v867
        %v2998 = vpop.f32.mrf.mxu0
        %v2999 = vadd.f32 %v2980, %v2998
        %v3000 = vpop.f32.mrf.mxu0
        %v3001 = vadd.f32 %v2982, %v3000
        %3002 = vdwg.mxu0
        %v3027 = vunpack.c.l.b16 %v2429
        %v3028 = vunpack.c.l.b16 %v2430
        %v3029 = vunpack.c.l.b16 %v2431
        %v3030 = vunpack.c.l.b16 %v2432
        %v3031 = vunpack.c.l.b16 %v2433
        %v3032 = vunpack.c.l.b16 %v2434
        %v3033 = vunpack.c.l.b16 %v2435
        %v3034 = vunpack.c.l.b16 %v2436
        %v3035 = vunpack.c.l.b16 %v2437
        %v3036 = vunpack.c.l.b16 %v2438
        %v3037 = vunpack.c.l.b16 %v2439
        %v3038 = vunpack.c.l.b16 %v2440
        %v3039 = vunpack.c.l.b16 %v2441
        %v3040 = vunpack.c.l.b16 %v2442
        %v3041 = vunpack.c.l.b16 %v2443
        %v3042 = vunpack.c.l.b16 %v2444
        %v3043 = vunpack.c.l.b16 %v2445
        %v3044 = vunpack.c.l.b16 %v2446
        %v3045 = vunpack.c.l.b16 %v2447
        %v3046 = vunpack.c.l.b16 %v2448
        %v3047 = vunpack.c.l.b16 %v2449
        %v3048 = vunpack.c.l.b16 %v2450
        %v3049 = vunpack.c.l.b16 %v2451
        %v3050 = vunpack.c.l.b16 %v2452
        %v3051 = vpack.c.b16 %v3028, %v3027
        %v3052 = vpack.c.b16 %v3030, %v3029
        %v3053 = vpack.c.b16 %v3032, %v3031
        %v3054 = vpack.c.b16 %v3034, %v3033
        %v3055 = vpack.c.b16 %v3036, %v3035
        %v3056 = vpack.c.b16 %v3038, %v3037
        %v3057 = vpack.c.b16 %v3040, %v3039
        %v3058 = vpack.c.b16 %v3042, %v3041
        %v3059 = vpack.c.b16 %v3044, %v3043
        %v3060 = vpack.c.b16 %v3046, %v3045
        %v3061 = vpack.c.b16 %v3048, %v3047
        %v3062 = vpack.c.b16 %v3050, %v3049
        %3075 = vmatpush.bf16.msra.mxu0 %v3058
        %3076 = vmatpush.bf16.msra.mxu0 %v3057
        %3077 = vmatpush.bf16.msra.mxu0 %v3056
        %3078 = vmatpush.bf16.msra.mxu0 %v3055
        %3079 = vmatpush.bf16.msra.mxu0 %v3054
        %3080 = vmatpush.bf16.msra.mxu0 %v3053
        %3081 = vmatpush.bf16.msra.mxu0 %v3052
        %3082 = vmatpush.bf16.msra.mxu0 %v3051
        %3083 = vmatmul.bf16.gmra.mxu0 %v785
        %v3084 = vpop.f32.mrf.mxu0
        %v3085 = vadd.f32 0.0, %v3084
        %v3086 = vpop.f32.mrf.mxu0
        %v3087 = vadd.f32 0.0, %v3086
        %3088 = vmatmul.bf16.gmra.mxu0 %v787
        %v3089 = vpop.f32.mrf.mxu0
        %v3090 = vadd.f32 0.0, %v3089
        %v3091 = vpop.f32.mrf.mxu0
        %v3092 = vadd.f32 0.0, %v3091
        %3093 = vdwg.mxu0
        %3094 = vmatpush.bf16.msra.mxu0 0
        %3095 = vmatpush.bf16.msra.mxu0 0
        %3096 = vmatpush.bf16.msra.mxu0 0
        %3097 = vmatpush.bf16.msra.mxu0 0
        %3098 = vmatpush.bf16.msra.mxu0 %v3062
        %3099 = vmatpush.bf16.msra.mxu0 %v3061
        %3100 = vmatpush.bf16.msra.mxu0 %v3060
        %3101 = vmatpush.bf16.msra.mxu0 %v3059
        %3102 = vmatmul.bf16.gmra.mxu0 %v864
        %v3103 = vpop.f32.mrf.mxu0
        %v3104 = vadd.f32 %v3085, %v3103
        %v3105 = vpop.f32.mrf.mxu0
        %v3106 = vadd.f32 %v3087, %v3105
        %3107 = vmatmul.bf16.gmra.mxu0 %v867
        %v3108 = vpop.f32.mrf.mxu0
        %v3109 = vadd.f32 %v3090, %v3108
        %v3110 = vpop.f32.mrf.mxu0
        %v3111 = vadd.f32 %v3092, %v3110
        %3112 = vdwg.mxu0
        %v3113 = vpack.c.bf16 %v2554, %v2554
        %v3114 = vpack.c.bf16 %v2556, %v2556
        %v3115 = vpack.c.bf16 %v2559, %v2559
        %v3116 = vpack.c.bf16 %v2561, %v2561
        %v3117 = vpack.c.bf16 %v2664, %v2664
        %v3118 = vpack.c.bf16 %v2666, %v2666
        %v3119 = vpack.c.bf16 %v2669, %v2669
        %v3120 = vpack.c.bf16 %v2671, %v2671
        %v3121 = vpack.c.bf16 %v2774, %v2774
        %v3122 = vpack.c.bf16 %v2776, %v2776
        %v3123 = vpack.c.bf16 %v2779, %v2779
        %v3124 = vpack.c.bf16 %v2781, %v2781
        %v3125 = vpack.c.bf16 %v2884, %v2884
        %v3126 = vpack.c.bf16 %v2886, %v2886
        %v3127 = vpack.c.bf16 %v2889, %v2889
        %v3128 = vpack.c.bf16 %v2891, %v2891
        %v3129 = vpack.c.bf16 %v2994, %v2994
        %v3130 = vpack.c.bf16 %v2996, %v2996
        %v3131 = vpack.c.bf16 %v2999, %v2999
        %v3132 = vpack.c.bf16 %v3001, %v3001
        %v3133 = vpack.c.bf16 %v3104, %v3104
        %v3134 = vpack.c.bf16 %v3106, %v3106
        %v3135 = vpack.c.bf16 %v3109, %v3109
        %v3136 = vpack.c.bf16 %v3111, %v3111
        %v3137 = vlaneseq
        %v3138 = vshrl.u32 %v3137, 7
        %v3139 = vadd.s32 %v3138, 8
        %v3140 = vlaneseq
        %v3141 = vand.u32 %v3140, 127
        %vm3142 = vcmp.le.s32.totalorder %v3141, %v3138
        %vm3143 = vcmp.le.s32.totalorder %v3141, %v3139
        %v3146 = vunpack.c.l.b16 %v1457
        %v3147 = vunpack.c.l.b16 %v1458
        %v3148 = vpack.c.b16 %v3147, %v3146
        %v3151 = vunpack.c.l.b16 %v2285
        %v3152 = vunpack.c.l.b16 %v2286
        %v3153 = vpack.c.b16 %v3152, %v3151
        %vm3154 = vcmask 261120
        %v3156 = vsel %vm3154, %v3148, 0
        %v3159 = vsel %vm3154, %v3153, 0
        %3161 = vmatpush.bf16.xpose.msra.mxu0 0
        %3162 = vmatpush.bf16.xpose.msra.mxu0 0
        %3163 = vmatpush.bf16.xpose.msra.mxu0 0
        %3164 = vmatpush.bf16.xpose.msra.mxu0 0
        %3165 = vmatpush.bf16.xpose.msra.mxu0 0
        %3166 = vmatpush.bf16.xpose.msra.mxu0 0
        %3167 = vmatpush.bf16.xpose.msra.mxu0 0
        %3168 = vmatpush.bf16.xpose.msra.mxu0 %v3159
        %3169 = vmatmul.bf16.gmra.mxu0 %v3156
        %v3170 = vpop.f32.mrf.mxu0
        %v3171 = vadd.f32 0.0, %v3170
        %v3172 = vpop.f32.mrf.mxu0
        %v3173 = vadd.f32 0.0, %v3172
        %3174 = vdwg.mxu0
        %v3177 = vunpack.c.l.b16 %v1461
        %v3178 = vunpack.c.l.b16 %v1462
        %v3179 = vpack.c.b16 %v3178, %v3177
        %v3182 = vunpack.c.l.b16 %v2289
        %v3183 = vunpack.c.l.b16 %v2290
        %v3184 = vpack.c.b16 %v3183, %v3182
        %v3186 = vsel %vm3154, %v3179, 0
        %v3189 = vsel %vm3154, %v3184, 0
        %3191 = vmatpush.bf16.xpose.msra.mxu0 0
        %3192 = vmatpush.bf16.xpose.msra.mxu0 0
        %3193 = vmatpush.bf16.xpose.msra.mxu0 0
        %3194 = vmatpush.bf16.xpose.msra.mxu0 0
        %3195 = vmatpush.bf16.xpose.msra.mxu0 0
        %3196 = vmatpush.bf16.xpose.msra.mxu0 0
        %3197 = vmatpush.bf16.xpose.msra.mxu0 0
        %3198 = vmatpush.bf16.xpose.msra.mxu0 %v3189
        %3199 = vmatmul.bf16.gmra.mxu0 %v3186
        %v3200 = vpop.f32.mrf.mxu0
        %v3201 = vadd.f32 0.0, %v3200
        %v3202 = vpop.f32.mrf.mxu0
        %v3203 = vadd.f32 0.0, %v3202
        %3204 = vdwg.mxu0
        %v3207 = vunpack.c.l.b16 %v1465
        %v3208 = vunpack.c.l.b16 %v1466
        %v3209 = vpack.c.b16 %v3208, %v3207
        %v3212 = vunpack.c.l.b16 %v2293
        %v3213 = vunpack.c.l.b16 %v2294
        %v3214 = vpack.c.b16 %v3213, %v3212
        %v3216 = vsel %vm3154, %v3209, 0
        %v3219 = vsel %vm3154, %v3214, 0
        %3221 = vmatpush.bf16.xpose.msra.mxu0 0
        %3222 = vmatpush.bf16.xpose.msra.mxu0 0
        %3223 = vmatpush.bf16.xpose.msra.mxu0 0
        %3224 = vmatpush.bf16.xpose.msra.mxu0 0
        %3225 = vmatpush.bf16.xpose.msra.mxu0 0
        %3226 = vmatpush.bf16.xpose.msra.mxu0 0
        %3227 = vmatpush.bf16.xpose.msra.mxu0 0
        %3228 = vmatpush.bf16.xpose.msra.mxu0 %v3219
        %3229 = vmatmul.bf16.gmra.mxu0 %v3216
        %v3230 = vpop.f32.mrf.mxu0
        %v3231 = vadd.f32 0.0, %v3230
        %v3232 = vpop.f32.mrf.mxu0
        %v3233 = vadd.f32 0.0, %v3232
        %3234 = vdwg.mxu0
        %v3237 = vunpack.c.l.b16 %v1469
        %v3238 = vunpack.c.l.b16 %v1470
        %v3239 = vpack.c.b16 %v3238, %v3237
        %v3242 = vunpack.c.l.b16 %v2297
        %v3243 = vunpack.c.l.b16 %v2298
        %v3244 = vpack.c.b16 %v3243, %v3242
        %v3246 = vsel %vm3154, %v3239, 0
        %v3249 = vsel %vm3154, %v3244, 0
        %3251 = vmatpush.bf16.xpose.msra.mxu0 0
        %3252 = vmatpush.bf16.xpose.msra.mxu0 0
        %3253 = vmatpush.bf16.xpose.msra.mxu0 0
        %3254 = vmatpush.bf16.xpose.msra.mxu0 0
        %3255 = vmatpush.bf16.xpose.msra.mxu0 0
        %3256 = vmatpush.bf16.xpose.msra.mxu0 0
        %3257 = vmatpush.bf16.xpose.msra.mxu0 0
        %3258 = vmatpush.bf16.xpose.msra.mxu0 %v3249
        %3259 = vmatmul.bf16.gmra.mxu0 %v3246
        %v3260 = vpop.f32.mrf.mxu0
        %v3261 = vadd.f32 0.0, %v3260
        %v3262 = vpop.f32.mrf.mxu0
        %v3263 = vadd.f32 0.0, %v3262
        %3264 = vdwg.mxu0
        %v3267 = vunpack.c.l.b16 %v1473
        %v3268 = vunpack.c.l.b16 %v1474
        %v3269 = vpack.c.b16 %v3268, %v3267
        %v3272 = vunpack.c.l.b16 %v2301
        %v3273 = vunpack.c.l.b16 %v2302
        %v3274 = vpack.c.b16 %v3273, %v3272
        %v3276 = vsel %vm3154, %v3269, 0
        %v3279 = vsel %vm3154, %v3274, 0
        %3281 = vmatpush.bf16.xpose.msra.mxu0 0
        %3282 = vmatpush.bf16.xpose.msra.mxu0 0
        %3283 = vmatpush.bf16.xpose.msra.mxu0 0
        %3284 = vmatpush.bf16.xpose.msra.mxu0 0
        %3285 = vmatpush.bf16.xpose.msra.mxu0 0
        %3286 = vmatpush.bf16.xpose.msra.mxu0 0
        %3287 = vmatpush.bf16.xpose.msra.mxu0 0
        %3288 = vmatpush.bf16.xpose.msra.mxu0 %v3279
        %3289 = vmatmul.bf16.gmra.mxu0 %v3276
        %v3290 = vpop.f32.mrf.mxu0
        %v3291 = vadd.f32 0.0, %v3290
        %v3292 = vpop.f32.mrf.mxu0
        %v3293 = vadd.f32 0.0, %v3292
        %3294 = vdwg.mxu0
        %v3297 = vunpack.c.l.b16 %v1477
        %v3298 = vunpack.c.l.b16 %v1478
        %v3299 = vpack.c.b16 %v3298, %v3297
        %v3302 = vunpack.c.l.b16 %v2305
        %v3303 = vunpack.c.l.b16 %v2306
        %v3304 = vpack.c.b16 %v3303, %v3302
        %v3306 = vsel %vm3154, %v3299, 0
        %v3309 = vsel %vm3154, %v3304, 0
        %3311 = vmatpush.bf16.xpose.msra.mxu0 0
        %3312 = vmatpush.bf16.xpose.msra.mxu0 0
        %3313 = vmatpush.bf16.xpose.msra.mxu0 0
        %3314 = vmatpush.bf16.xpose.msra.mxu0 0
        %3315 = vmatpush.bf16.xpose.msra.mxu0 0
        %3316 = vmatpush.bf16.xpose.msra.mxu0 0
        %3317 = vmatpush.bf16.xpose.msra.mxu0 0
        %3318 = vmatpush.bf16.xpose.msra.mxu0 %v3309
        %3319 = vmatmul.bf16.gmra.mxu0 %v3306
        %v3320 = vpop.f32.mrf.mxu0
        %v3321 = vadd.f32 0.0, %v3320
        %v3322 = vpop.f32.mrf.mxu0
        %v3323 = vadd.f32 0.0, %v3322
        %3324 = vdwg.mxu0
        %v3325 = vmul.f32 %v3171, 0.07216878
        %v3326 = vmul.f32 %v3173, 0.07216878
        %v3327 = vmul.f32 %v3201, 0.07216878
        %v3328 = vmul.f32 %v3203, 0.07216878
        %v3329 = vmul.f32 %v3231, 0.07216878
        %v3330 = vmul.f32 %v3233, 0.07216878
        %v3331 = vmul.f32 %v3261, 0.07216878
        %v3332 = vmul.f32 %v3263, 0.07216878
        %v3333 = vmul.f32 %v3291, 0.07216878
        %v3334 = vmul.f32 %v3293, 0.07216878
        %v3335 = vmul.f32 %v3321, 0.07216878
        %v3336 = vmul.f32 %v3323, 0.07216878
        %v3337 = vsel %vm3142, 1, 0
        %v3338 = vsel %vm3143, 1, 0
        %vm3339 = vcmp.eq.s32.totalorder %v3337, 1
        %vm3340 = vcmp.eq.s32.totalorder %v3338, 1
        %v3341 = vsel %vm3339, %v3325, -inf
        %v3342 = vsel %vm3340, %v3326, -inf
        %v3343 = vsel %vm3339, %v3327, -inf
        %v3344 = vsel %vm3340, %v3328, -inf
        %v3345 = vsel %vm3339, %v3329, -inf
        %v3346 = vsel %vm3340, %v3330, -inf
        %v3347 = vsel %vm3339, %v3331, -inf
        %v3348 = vsel %vm3340, %v3332, -inf
        %v3349 = vsel %vm3339, %v3333, -inf
        %v3350 = vsel %vm3340, %v3334, -inf
        %v3351 = vsel %vm3339, %v3335, -inf
        %v3352 = vsel %vm3340, %v3336, -inf
        %vm3353 = vcmask 130048
        %v3354 = vsel %vm3353, %v3341, -inf
        %v3355 = vsel %vm3353, %v3342, -inf
        %v3356 = vmax.f32 %v3354, %v3355
        %v3357 = vrot.slane %v3356, 4
        %v3358 = vmax.f32 %v3356, %v3357
        %v3359 = vrot.slane %v3358, 2
        %v3360 = vmax.f32 %v3358, %v3359
        %v3361 = vrot.slane %v3360, 1
        %v3362 = vmax.f32 %v3360, %v3361
        %v3363 = vsel %vm3353, %v3343, -inf
        %v3364 = vsel %vm3353, %v3344, -inf
        %v3365 = vmax.f32 %v3363, %v3364
        %v3366 = vrot.slane %v3365, 4
        %v3367 = vmax.f32 %v3365, %v3366
        %v3368 = vrot.slane %v3367, 2
        %v3369 = vmax.f32 %v3367, %v3368
        %v3370 = vrot.slane %v3369, 1
        %v3371 = vmax.f32 %v3369, %v3370
        %v3372 = vsel %vm3353, %v3345, -inf
        %v3373 = vsel %vm3353, %v3346, -inf
        %v3374 = vmax.f32 %v3372, %v3373
        %v3375 = vrot.slane %v3374, 4
        %v3376 = vmax.f32 %v3374, %v3375
        %v3377 = vrot.slane %v3376, 2
        %v3378 = vmax.f32 %v3376, %v3377
        %v3379 = vrot.slane %v3378, 1
        %v3380 = vmax.f32 %v3378, %v3379
        %v3381 = vsel %vm3353, %v3347, -inf
        %v3382 = vsel %vm3353, %v3348, -inf
        %v3383 = vmax.f32 %v3381, %v3382
        %v3384 = vrot.slane %v3383, 4
        %v3385 = vmax.f32 %v3383, %v3384
        %v3386 = vrot.slane %v3385, 2
        %v3387 = vmax.f32 %v3385, %v3386
        %v3388 = vrot.slane %v3387, 1
        %v3389 = vmax.f32 %v3387, %v3388
        %v3390 = vsel %vm3353, %v3349, -inf
        %v3391 = vsel %vm3353, %v3350, -inf
        %v3392 = vmax.f32 %v3390, %v3391
        %v3393 = vrot.slane %v3392, 4
        %v3394 = vmax.f32 %v3392, %v3393
        %v3395 = vrot.slane %v3394, 2
        %v3396 = vmax.f32 %v3394, %v3395
        %v3397 = vrot.slane %v3396, 1
        %v3398 = vmax.f32 %v3396, %v3397
        %v3399 = vsel %vm3353, %v3351, -inf
        %v3400 = vsel %vm3353, %v3352, -inf
        %v3401 = vmax.f32 %v3399, %v3400
        %v3402 = vrot.slane %v3401, 4
        %v3403 = vmax.f32 %v3401, %v3402
        %v3404 = vrot.slane %v3403, 2
        %v3405 = vmax.f32 %v3403, %v3404
        %v3406 = vrot.slane %v3405, 1
        %v3407 = vmax.f32 %v3405, %v3406
        %v3408 = vsub.f32 %v3341, %v3362
        %v3409 = vsub.f32 %v3342, %v3362
        %v3410 = vsub.f32 %v3343, %v3371
        %v3411 = vsub.f32 %v3344, %v3371
        %v3412 = vsub.f32 %v3345, %v3380
        %v3413 = vsub.f32 %v3346, %v3380
        %v3414 = vsub.f32 %v3347, %v3389
        %v3415 = vsub.f32 %v3348, %v3389
        %v3416 = vsub.f32 %v3349, %v3398
        %v3417 = vsub.f32 %v3350, %v3398
        %v3418 = vsub.f32 %v3351, %v3407
        %v3419 = vsub.f32 %v3352, %v3407
        %v3420 = vmul.f32 %v3408, 1.442695
        %v3421 = vpow.pop %v3420
        %v3422 = vmul.f32 %v3409, 1.442695
        %v3423 = vpow.pop %v3422
        %v3424 = vmul.f32 %v3410, 1.442695
        %v3425 = vpow.pop %v3424
        %v3426 = vmul.f32 %v3411, 1.442695
        %v3427 = vpow.pop %v3426
        %v3428 = vmul.f32 %v3412, 1.442695
        %v3429 = vpow.pop %v3428
        %v3430 = vmul.f32 %v3413, 1.442695
        %v3431 = vpow.pop %v3430
        %v3432 = vmul.f32 %v3414, 1.442695
        %v3433 = vpow.pop %v3432
        %v3434 = vmul.f32 %v3415, 1.442695
        %v3435 = vpow.pop %v3434
        %v3436 = vmul.f32 %v3416, 1.442695
        %v3437 = vpow.pop %v3436
        %v3438 = vmul.f32 %v3417, 1.442695
        %v3439 = vpow.pop %v3438
        %v3440 = vmul.f32 %v3418, 1.442695
        %v3441 = vpow.pop %v3440
        %v3442 = vmul.f32 %v3419, 1.442695
        %v3443 = vpow.pop %v3442
        %v3444 = vsel %vm3353, %v3421, 0.0
        %v3445 = vsel %vm3353, %v3423, 0.0
        %v3446 = vadd.f32 %v3444, %v3445
        %v3447 = vrot.slane %v3446, 4
        %v3448 = vadd.f32 %v3446, %v3447
        %v3449 = vrot.slane %v3448, 2
        %v3450 = vadd.f32 %v3448, %v3449
        %v3451 = vrot.slane %v3450, 1
        %v3452 = vadd.f32 %v3450, %v3451
        %v3453 = vsel %vm3353, %v3425, 0.0
        %v3454 = vsel %vm3353, %v3427, 0.0
        %v3455 = vadd.f32 %v3453, %v3454
        %v3456 = vrot.slane %v3455, 4
        %v3457 = vadd.f32 %v3455, %v3456
        %v3458 = vrot.slane %v3457, 2
        %v3459 = vadd.f32 %v3457, %v3458
        %v3460 = vrot.slane %v3459, 1
        %v3461 = vadd.f32 %v3459, %v3460
        %v3462 = vsel %vm3353, %v3429, 0.0
        %v3463 = vsel %vm3353, %v3431, 0.0
        %v3464 = vadd.f32 %v3462, %v3463
        %v3465 = vrot.slane %v3464, 4
        %v3466 = vadd.f32 %v3464, %v3465
        %v3467 = vrot.slane %v3466, 2
        %v3468 = vadd.f32 %v3466, %v3467
        %v3469 = vrot.slane %v3468, 1
        %v3470 = vadd.f32 %v3468, %v3469
        %v3471 = vsel %vm3353, %v3433, 0.0
        %v3472 = vsel %vm3353, %v3435, 0.0
        %v3473 = vadd.f32 %v3471, %v3472
        %v3474 = vrot.slane %v3473, 4
        %v3475 = vadd.f32 %v3473, %v3474
        %v3476 = vrot.slane %v3475, 2
        %v3477 = vadd.f32 %v3475, %v3476
        %v3478 = vrot.slane %v3477, 1
        %v3479 = vadd.f32 %v3477, %v3478
        %v3480 = vsel %vm3353, %v3437, 0.0
        %v3481 = vsel %vm3353, %v3439, 0.0
        %v3482 = vadd.f32 %v3480, %v3481
        %v3483 = vrot.slane %v3482, 4
        %v3484 = vadd.f32 %v3482, %v3483
        %v3485 = vrot.slane %v3484, 2
        %v3486 = vadd.f32 %v3484, %v3485
        %v3487 = vrot.slane %v3486, 1
        %v3488 = vadd.f32 %v3486, %v3487
        %v3489 = vsel %vm3353, %v3441, 0.0
        %v3490 = vsel %vm3353, %v3443, 0.0
        %v3491 = vadd.f32 %v3489, %v3490
        %v3492 = vrot.slane %v3491, 4
        %v3493 = vadd.f32 %v3491, %v3492
        %v3494 = vrot.slane %v3493, 2
        %v3495 = vadd.f32 %v3493, %v3494
        %v3496 = vrot.slane %v3495, 1
        %v3497 = vadd.f32 %v3495, %v3496
        %v3498 = vrcp.pop %v3452
        %v3499 = vrcp.pop %v3461
        %v3500 = vrcp.pop %v3470
        %v3501 = vrcp.pop %v3479
        %v3502 = vrcp.pop %v3488
        %v3503 = vrcp.pop %v3497
        %v3504 = vmul.f32 %v3421, %v3498
        %v3505 = vmul.f32 %v3423, %v3498
        %v3506 = vmul.f32 %v3425, %v3499
        %v3507 = vmul.f32 %v3427, %v3499
        %v3508 = vmul.f32 %v3429, %v3500
        %v3509 = vmul.f32 %v3431, %v3500
        %v3510 = vmul.f32 %v3433, %v3501
        %v3511 = vmul.f32 %v3435, %v3501
        %v3512 = vmul.f32 %v3437, %v3502
        %v3513 = vmul.f32 %v3439, %v3502
        %v3514 = vmul.f32 %v3441, %v3503
        %v3515 = vmul.f32 %v3443, %v3503
        %v3516 = vpack.c.bf16 %v3504, %v3504
        %v3517 = vpack.c.bf16 %v3505, %v3505
        %v3518 = vpack.c.bf16 %v3506, %v3506
        %v3519 = vpack.c.bf16 %v3507, %v3507
        %v3520 = vpack.c.bf16 %v3508, %v3508
        %v3521 = vpack.c.bf16 %v3509, %v3509
        %v3522 = vpack.c.bf16 %v3510, %v3510
        %v3523 = vpack.c.bf16 %v3511, %v3511
        %v3524 = vpack.c.bf16 %v3512, %v3512
        %v3525 = vpack.c.bf16 %v3513, %v3513
        %v3526 = vpack.c.bf16 %v3514, %v3514
        %v3527 = vpack.c.bf16 %v3515, %v3515
        %v3530 = vunpack.c.l.b16 %v3516
        %v3531 = vunpack.c.l.b16 %v3517
        %v3532 = vpack.c.b16 %v3531, %v3530
        %v3535 = vunpack.c.l.b16 %v3113
        %v3536 = vunpack.c.l.b16 %v3114
        %v3537 = vpack.c.b16 %v3536, %v3535
        %v3540 = vsel %vm3353, %v3532, 0
        %3542 = vmatpush.bf16.msra.mxu0 0
        %3543 = vmatpush.bf16.msra.mxu0 0
        %3544 = vmatpush.bf16.msra.mxu0 0
        %3545 = vmatpush.bf16.msra.mxu0 0
        %3546 = vmatpush.bf16.msra.mxu0 0
        %3547 = vmatpush.bf16.msra.mxu0 0
        %3548 = vmatpush.bf16.msra.mxu0 0
        %3549 = vmatpush.bf16.msra.mxu0 %v3537
        %3550 = vmatmul.bf16.gmra.mxu0 %v3540
        %v3551 = vpop.f32.mrf.mxu0
        %v3552 = vadd.f32 0.0, %v3551
        %v3553 = vpop.f32.mrf.mxu0
        %v3554 = vadd.f32 0.0, %v3553
        %3555 = vdwg.mxu0
        %v3558 = vunpack.c.l.b16 %v3518
        %v3559 = vunpack.c.l.b16 %v3519
        %v3560 = vpack.c.b16 %v3559, %v3558
        %v3563 = vunpack.c.l.b16 %v3117
        %v3564 = vunpack.c.l.b16 %v3118
        %v3565 = vpack.c.b16 %v3564, %v3563
        %v3568 = vsel %vm3353, %v3560, 0
        %3570 = vmatpush.bf16.msra.mxu0 0
        %3571 = vmatpush.bf16.msra.mxu0 0
        %3572 = vmatpush.bf16.msra.mxu0 0
        %3573 = vmatpush.bf16.msra.mxu0 0
        %3574 = vmatpush.bf16.msra.mxu0 0
        %3575 = vmatpush.bf16.msra.mxu0 0
        %3576 = vmatpush.bf16.msra.mxu0 0
        %3577 = vmatpush.bf16.msra.mxu0 %v3565
        %3578 = vmatmul.bf16.gmra.mxu0 %v3568
        %v3579 = vpop.f32.mrf.mxu0
        %v3580 = vadd.f32 0.0, %v3579
        %v3581 = vpop.f32.mrf.mxu0
        %v3582 = vadd.f32 0.0, %v3581
        %3583 = vdwg.mxu0
        %v3586 = vunpack.c.l.b16 %v3520
        %v3587 = vunpack.c.l.b16 %v3521
        %v3588 = vpack.c.b16 %v3587, %v3586
        %v3591 = vunpack.c.l.b16 %v3121
        %v3592 = vunpack.c.l.b16 %v3122
        %v3593 = vpack.c.b16 %v3592, %v3591
        %v3596 = vsel %vm3353, %v3588, 0
        %3598 = vmatpush.bf16.msra.mxu0 0
        %3599 = vmatpush.bf16.msra.mxu0 0
        %3600 = vmatpush.bf16.msra.mxu0 0
        %3601 = vmatpush.bf16.msra.mxu0 0
        %3602 = vmatpush.bf16.msra.mxu0 0
        %3603 = vmatpush.bf16.msra.mxu0 0
        %3604 = vmatpush.bf16.msra.mxu0 0
        %3605 = vmatpush.bf16.msra.mxu0 %v3593
        %3606 = vmatmul.bf16.gmra.mxu0 %v3596
        %v3607 = vpop.f32.mrf.mxu0
        %v3608 = vadd.f32 0.0, %v3607
        %v3609 = vpop.f32.mrf.mxu0
        %v3610 = vadd.f32 0.0, %v3609
        %3611 = vdwg.mxu0
        %v3614 = vunpack.c.l.b16 %v3522
        %v3615 = vunpack.c.l.b16 %v3523
        %v3616 = vpack.c.b16 %v3615, %v3614
        %v3619 = vunpack.c.l.b16 %v3125
        %v3620 = vunpack.c.l.b16 %v3126
        %v3621 = vpack.c.b16 %v3620, %v3619
        %v3624 = vsel %vm3353, %v3616, 0
        %3626 = vmatpush.bf16.msra.mxu0 0
        %3627 = vmatpush.bf16.msra.mxu0 0
        %3628 = vmatpush.bf16.msra.mxu0 0
        %3629 = vmatpush.bf16.msra.mxu0 0
        %3630 = vmatpush.bf16.msra.mxu0 0
        %3631 = vmatpush.bf16.msra.mxu0 0
        %3632 = vmatpush.bf16.msra.mxu0 0
        %3633 = vmatpush.bf16.msra.mxu0 %v3621
        %3634 = vmatmul.bf16.gmra.mxu0 %v3624
        %v3635 = vpop.f32.mrf.mxu0
        %v3636 = vadd.f32 0.0, %v3635
        %v3637 = vpop.f32.mrf.mxu0
        %v3638 = vadd.f32 0.0, %v3637
        %3639 = vdwg.mxu0
        %v3642 = vunpack.c.l.b16 %v3524
        %v3643 = vunpack.c.l.b16 %v3525
        %v3644 = vpack.c.b16 %v3643, %v3642
        %v3647 = vunpack.c.l.b16 %v3129
        %v3648 = vunpack.c.l.b16 %v3130
        %v3649 = vpack.c.b16 %v3648, %v3647
        %v3652 = vsel %vm3353, %v3644, 0
        %3654 = vmatpush.bf16.msra.mxu0 0
        %3655 = vmatpush.bf16.msra.mxu0 0
        %3656 = vmatpush.bf16.msra.mxu0 0
        %3657 = vmatpush.bf16.msra.mxu0 0
        %3658 = vmatpush.bf16.msra.mxu0 0
        %3659 = vmatpush.bf16.msra.mxu0 0
        %3660 = vmatpush.bf16.msra.mxu0 0
        %3661 = vmatpush.bf16.msra.mxu0 %v3649
        %3662 = vmatmul.bf16.gmra.mxu0 %v3652
        %v3663 = vpop.f32.mrf.mxu0
        %v3664 = vadd.f32 0.0, %v3663
        %v3665 = vpop.f32.mrf.mxu0
        %v3666 = vadd.f32 0.0, %v3665
        %3667 = vdwg.mxu0
        %v3670 = vunpack.c.l.b16 %v3526
        %v3671 = vunpack.c.l.b16 %v3527
        %v3672 = vpack.c.b16 %v3671, %v3670
        %v3675 = vunpack.c.l.b16 %v3133
        %v3676 = vunpack.c.l.b16 %v3134
        %v3677 = vpack.c.b16 %v3676, %v3675
        %v3680 = vsel %vm3353, %v3672, 0
        %3682 = vmatpush.bf16.msra.mxu0 0
        %3683 = vmatpush.bf16.msra.mxu0 0
        %3684 = vmatpush.bf16.msra.mxu0 0
        %3685 = vmatpush.bf16.msra.mxu0 0
        %3686 = vmatpush.bf16.msra.mxu0 0
        %3687 = vmatpush.bf16.msra.mxu0 0
        %3688 = vmatpush.bf16.msra.mxu0 0
        %3689 = vmatpush.bf16.msra.mxu0 %v3677
        %3690 = vmatmul.bf16.gmra.mxu0 %v3680
        %v3691 = vpop.f32.mrf.mxu0
        %v3692 = vadd.f32 0.0, %v3691
        %v3693 = vpop.f32.mrf.mxu0
        %v3694 = vadd.f32 0.0, %v3693
        %3695 = vdwg.mxu0
        %v3698 = vunpack.c.l.b16 %v1459
        %v3699 = vunpack.c.l.b16 %v1460
        %v3700 = vpack.c.b16 %v3699, %v3698
        %v3703 = vunpack.c.l.b16 %v2287
        %v3704 = vunpack.c.l.b16 %v2288
        %v3705 = vpack.c.b16 %v3704, %v3703
        %v3707 = vsel %vm3154, %v3700, 0
        %v3710 = vsel %vm3154, %v3705, 0
        %3712 = vmatpush.bf16.xpose.msra.mxu0 0
        %3713 = vmatpush.bf16.xpose.msra.mxu0 0
        %3714 = vmatpush.bf16.xpose.msra.mxu0 0
        %3715 = vmatpush.bf16.xpose.msra.mxu0 0
        %3716 = vmatpush.bf16.xpose.msra.mxu0 0
        %3717 = vmatpush.bf16.xpose.msra.mxu0 0
        %3718 = vmatpush.bf16.xpose.msra.mxu0 0
        %3719 = vmatpush.bf16.xpose.msra.mxu0 %v3710
        %3720 = vmatmul.bf16.gmra.mxu0 %v3707
        %v3721 = vpop.f32.mrf.mxu0
        %v3722 = vadd.f32 0.0, %v3721
        %v3723 = vpop.f32.mrf.mxu0
        %v3724 = vadd.f32 0.0, %v3723
        %3725 = vdwg.mxu0
        %v3728 = vunpack.c.l.b16 %v1463
        %v3729 = vunpack.c.l.b16 %v1464
        %v3730 = vpack.c.b16 %v3729, %v3728
        %v3733 = vunpack.c.l.b16 %v2291
        %v3734 = vunpack.c.l.b16 %v2292
        %v3735 = vpack.c.b16 %v3734, %v3733
        %v3737 = vsel %vm3154, %v3730, 0
        %v3740 = vsel %vm3154, %v3735, 0
        %3742 = vmatpush.bf16.xpose.msra.mxu0 0
        %3743 = vmatpush.bf16.xpose.msra.mxu0 0
        %3744 = vmatpush.bf16.xpose.msra.mxu0 0
        %3745 = vmatpush.bf16.xpose.msra.mxu0 0
        %3746 = vmatpush.bf16.xpose.msra.mxu0 0
        %3747 = vmatpush.bf16.xpose.msra.mxu0 0
        %3748 = vmatpush.bf16.xpose.msra.mxu0 0
        %3749 = vmatpush.bf16.xpose.msra.mxu0 %v3740
        %3750 = vmatmul.bf16.gmra.mxu0 %v3737
        %v3751 = vpop.f32.mrf.mxu0
        %v3752 = vadd.f32 0.0, %v3751
        %v3753 = vpop.f32.mrf.mxu0
        %v3754 = vadd.f32 0.0, %v3753
        %3755 = vdwg.mxu0
        %v3758 = vunpack.c.l.b16 %v1467
        %v3759 = vunpack.c.l.b16 %v1468
        %v3760 = vpack.c.b16 %v3759, %v3758
        %v3763 = vunpack.c.l.b16 %v2295
        %v3764 = vunpack.c.l.b16 %v2296
        %v3765 = vpack.c.b16 %v3764, %v3763
        %v3767 = vsel %vm3154, %v3760, 0
        %v3770 = vsel %vm3154, %v3765, 0
        %3772 = vmatpush.bf16.xpose.msra.mxu0 0
        %3773 = vmatpush.bf16.xpose.msra.mxu0 0
        %3774 = vmatpush.bf16.xpose.msra.mxu0 0
        %3775 = vmatpush.bf16.xpose.msra.mxu0 0
        %3776 = vmatpush.bf16.xpose.msra.mxu0 0
        %3777 = vmatpush.bf16.xpose.msra.mxu0 0
        %3778 = vmatpush.bf16.xpose.msra.mxu0 0
        %3779 = vmatpush.bf16.xpose.msra.mxu0 %v3770
        %3780 = vmatmul.bf16.gmra.mxu0 %v3767
        %v3781 = vpop.f32.mrf.mxu0
        %v3782 = vadd.f32 0.0, %v3781
        %v3783 = vpop.f32.mrf.mxu0
        %v3784 = vadd.f32 0.0, %v3783
        %3785 = vdwg.mxu0
        %v3788 = vunpack.c.l.b16 %v1471
        %v3789 = vunpack.c.l.b16 %v1472
        %v3790 = vpack.c.b16 %v3789, %v3788
        %v3793 = vunpack.c.l.b16 %v2299
        %v3794 = vunpack.c.l.b16 %v2300
        %v3795 = vpack.c.b16 %v3794, %v3793
        %v3797 = vsel %vm3154, %v3790, 0
        %v3800 = vsel %vm3154, %v3795, 0
        %3802 = vmatpush.bf16.xpose.msra.mxu0 0
        %3803 = vmatpush.bf16.xpose.msra.mxu0 0
        %3804 = vmatpush.bf16.xpose.msra.mxu0 0
        %3805 = vmatpush.bf16.xpose.msra.mxu0 0
        %3806 = vmatpush.bf16.xpose.msra.mxu0 0
        %3807 = vmatpush.bf16.xpose.msra.mxu0 0
        %3808 = vmatpush.bf16.xpose.msra.mxu0 0
        %3809 = vmatpush.bf16.xpose.msra.mxu0 %v3800
        %3810 = vmatmul.bf16.gmra.mxu0 %v3797
        %v3811 = vpop.f32.mrf.mxu0
        %v3812 = vadd.f32 0.0, %v3811
        %v3813 = vpop.f32.mrf.mxu0
        %v3814 = vadd.f32 0.0, %v3813
        %3815 = vdwg.mxu0
        %v3818 = vunpack.c.l.b16 %v1475
        %v3819 = vunpack.c.l.b16 %v1476
        %v3820 = vpack.c.b16 %v3819, %v3818
        %v3823 = vunpack.c.l.b16 %v2303
        %v3824 = vunpack.c.l.b16 %v2304
        %v3825 = vpack.c.b16 %v3824, %v3823
        %v3827 = vsel %vm3154, %v3820, 0
        %v3830 = vsel %vm3154, %v3825, 0
        %3832 = vmatpush.bf16.xpose.msra.mxu0 0
        %3833 = vmatpush.bf16.xpose.msra.mxu0 0
        %3834 = vmatpush.bf16.xpose.msra.mxu0 0
        %3835 = vmatpush.bf16.xpose.msra.mxu0 0
        %3836 = vmatpush.bf16.xpose.msra.mxu0 0
        %3837 = vmatpush.bf16.xpose.msra.mxu0 0
        %3838 = vmatpush.bf16.xpose.msra.mxu0 0
        %3839 = vmatpush.bf16.xpose.msra.mxu0 %v3830
        %3840 = vmatmul.bf16.gmra.mxu0 %v3827
        %v3841 = vpop.f32.mrf.mxu0
        %v3842 = vadd.f32 0.0, %v3841
        %v3843 = vpop.f32.mrf.mxu0
        %v3844 = vadd.f32 0.0, %v3843
        %3845 = vdwg.mxu0
        %v3848 = vunpack.c.l.b16 %v1479
        %v3849 = vunpack.c.l.b16 %v1480
        %v3850 = vpack.c.b16 %v3849, %v3848
        %v3853 = vunpack.c.l.b16 %v2307
        %v3854 = vunpack.c.l.b16 %v2308
        %v3855 = vpack.c.b16 %v3854, %v3853
        %v3857 = vsel %vm3154, %v3850, 0
        %v3860 = vsel %vm3154, %v3855, 0
        %3862 = vmatpush.bf16.xpose.msra.mxu0 0
        %3863 = vmatpush.bf16.xpose.msra.mxu0 0
        %3864 = vmatpush.bf16.xpose.msra.mxu0 0
        %3865 = vmatpush.bf16.xpose.msra.mxu0 0
        %3866 = vmatpush.bf16.xpose.msra.mxu0 0
        %3867 = vmatpush.bf16.xpose.msra.mxu0 0
        %3868 = vmatpush.bf16.xpose.msra.mxu0 0
        %3869 = vmatpush.bf16.xpose.msra.mxu0 %v3860
        %3870 = vmatmul.bf16.gmra.mxu0 %v3857
        %v3871 = vpop.f32.mrf.mxu0
        %v3872 = vadd.f32 0.0, %v3871
        %v3873 = vpop.f32.mrf.mxu0
        %v3874 = vadd.f32 0.0, %v3873
        %3875 = vdwg.mxu0
        %v3876 = vmul.f32 %v3722, 0.07216878
        %v3877 = vmul.f32 %v3724, 0.07216878
        %v3878 = vmul.f32 %v3752, 0.07216878
        %v3879 = vmul.f32 %v3754, 0.07216878
        %v3880 = vmul.f32 %v3782, 0.07216878
        %v3881 = vmul.f32 %v3784, 0.07216878
        %v3882 = vmul.f32 %v3812, 0.07216878
        %v3883 = vmul.f32 %v3814, 0.07216878
        %v3884 = vmul.f32 %v3842, 0.07216878
        %v3885 = vmul.f32 %v3844, 0.07216878
        %v3886 = vmul.f32 %v3872, 0.07216878
        %v3887 = vmul.f32 %v3874, 0.07216878
        %v3888 = vsel %vm3339, %v3876, -inf
        %v3889 = vsel %vm3340, %v3877, -inf
        %v3890 = vsel %vm3339, %v3878, -inf
        %v3891 = vsel %vm3340, %v3879, -inf
        %v3892 = vsel %vm3339, %v3880, -inf
        %v3893 = vsel %vm3340, %v3881, -inf
        %v3894 = vsel %vm3339, %v3882, -inf
        %v3895 = vsel %vm3340, %v3883, -inf
        %v3896 = vsel %vm3339, %v3884, -inf
        %v3897 = vsel %vm3340, %v3885, -inf
        %v3898 = vsel %vm3339, %v3886, -inf
        %v3899 = vsel %vm3340, %v3887, -inf
        %v3900 = vsel %vm3353, %v3888, -inf
        %v3901 = vsel %vm3353, %v3889, -inf
        %v3902 = vmax.f32 %v3900, %v3901
        %v3903 = vrot.slane %v3902, 4
        %v3904 = vmax.f32 %v3902, %v3903
        %v3905 = vrot.slane %v3904, 2
        %v3906 = vmax.f32 %v3904, %v3905
        %v3907 = vrot.slane %v3906, 1
        %v3908 = vmax.f32 %v3906, %v3907
        %v3909 = vsel %vm3353, %v3890, -inf
        %v3910 = vsel %vm3353, %v3891, -inf
        %v3911 = vmax.f32 %v3909, %v3910
        %v3912 = vrot.slane %v3911, 4
        %v3913 = vmax.f32 %v3911, %v3912
        %v3914 = vrot.slane %v3913, 2
        %v3915 = vmax.f32 %v3913, %v3914
        %v3916 = vrot.slane %v3915, 1
        %v3917 = vmax.f32 %v3915, %v3916
        %v3918 = vsel %vm3353, %v3892, -inf
        %v3919 = vsel %vm3353, %v3893, -inf
        %v3920 = vmax.f32 %v3918, %v3919
        %v3921 = vrot.slane %v3920, 4
        %v3922 = vmax.f32 %v3920, %v3921
        %v3923 = vrot.slane %v3922, 2
        %v3924 = vmax.f32 %v3922, %v3923
        %v3925 = vrot.slane %v3924, 1
        %v3926 = vmax.f32 %v3924, %v3925
        %v3927 = vsel %vm3353, %v3894, -inf
        %v3928 = vsel %vm3353, %v3895, -inf
        %v3929 = vmax.f32 %v3927, %v3928
        %v3930 = vrot.slane %v3929, 4
        %v3931 = vmax.f32 %v3929, %v3930
        %v3932 = vrot.slane %v3931, 2
        %v3933 = vmax.f32 %v3931, %v3932
        %v3934 = vrot.slane %v3933, 1
        %v3935 = vmax.f32 %v3933, %v3934
        %v3936 = vsel %vm3353, %v3896, -inf
        %v3937 = vsel %vm3353, %v3897, -inf
        %v3938 = vmax.f32 %v3936, %v3937
        %v3939 = vrot.slane %v3938, 4
        %v3940 = vmax.f32 %v3938, %v3939
        %v3941 = vrot.slane %v3940, 2
        %v3942 = vmax.f32 %v3940, %v3941
        %v3943 = vrot.slane %v3942, 1
        %v3944 = vmax.f32 %v3942, %v3943
        %v3945 = vsel %vm3353, %v3898, -inf
        %v3946 = vsel %vm3353, %v3899, -inf
        %v3947 = vmax.f32 %v3945, %v3946
        %v3948 = vrot.slane %v3947, 4
        %v3949 = vmax.f32 %v3947, %v3948
        %v3950 = vrot.slane %v3949, 2
        %v3951 = vmax.f32 %v3949, %v3950
        %v3952 = vrot.slane %v3951, 1
        %v3953 = vmax.f32 %v3951, %v3952
        %v3954 = vsub.f32 %v3888, %v3908
        %v3955 = vsub.f32 %v3889, %v3908
        %v3956 = vsub.f32 %v3890, %v3917
        %v3957 = vsub.f32 %v3891, %v3917
        %v3958 = vsub.f32 %v3892, %v3926
        %v3959 = vsub.f32 %v3893, %v3926
        %v3960 = vsub.f32 %v3894, %v3935
        %v3961 = vsub.f32 %v3895, %v3935
        %v3962 = vsub.f32 %v3896, %v3944
        %v3963 = vsub.f32 %v3897, %v3944
        %v3964 = vsub.f32 %v3898, %v3953
        %v3965 = vsub.f32 %v3899, %v3953
        %v3966 = vmul.f32 %v3954, 1.442695
        %v3967 = vpow.pop %v3966
        %v3968 = vmul.f32 %v3955, 1.442695
        %v3969 = vpow.pop %v3968
        %v3970 = vmul.f32 %v3956, 1.442695
        %v3971 = vpow.pop %v3970
        %v3972 = vmul.f32 %v3957, 1.442695
        %v3973 = vpow.pop %v3972
        %v3974 = vmul.f32 %v3958, 1.442695
        %v3975 = vpow.pop %v3974
        %v3976 = vmul.f32 %v3959, 1.442695
        %v3977 = vpow.pop %v3976
        %v3978 = vmul.f32 %v3960, 1.442695
        %v3979 = vpow.pop %v3978
        %v3980 = vmul.f32 %v3961, 1.442695
        %v3981 = vpow.pop %v3980
        %v3982 = vmul.f32 %v3962, 1.442695
        %v3983 = vpow.pop %v3982
        %v3984 = vmul.f32 %v3963, 1.442695
        %v3985 = vpow.pop %v3984
        %v3986 = vmul.f32 %v3964, 1.442695
        %v3987 = vpow.pop %v3986
        %v3988 = vmul.f32 %v3965, 1.442695
        %v3989 = vpow.pop %v3988
        %v3990 = vsel %vm3353, %v3967, 0.0
        %v3991 = vsel %vm3353, %v3969, 0.0
        %v3992 = vadd.f32 %v3990, %v3991
        %v3993 = vrot.slane %v3992, 4
        %v3994 = vadd.f32 %v3992, %v3993
        %v3995 = vrot.slane %v3994, 2
        %v3996 = vadd.f32 %v3994, %v3995
        %v3997 = vrot.slane %v3996, 1
        %v3998 = vadd.f32 %v3996, %v3997
        %v3999 = vsel %vm3353, %v3971, 0.0
        %v4000 = vsel %vm3353, %v3973, 0.0
        %v4001 = vadd.f32 %v3999, %v4000
        %v4002 = vrot.slane %v4001, 4
        %v4003 = vadd.f32 %v4001, %v4002
        %v4004 = vrot.slane %v4003, 2
        %v4005 = vadd.f32 %v4003, %v4004
        %v4006 = vrot.slane %v4005, 1
        %v4007 = vadd.f32 %v4005, %v4006
        %v4008 = vsel %vm3353, %v3975, 0.0
        %v4009 = vsel %vm3353, %v3977, 0.0
        %v4010 = vadd.f32 %v4008, %v4009
        %v4011 = vrot.slane %v4010, 4
        %v4012 = vadd.f32 %v4010, %v4011
        %v4013 = vrot.slane %v4012, 2
        %v4014 = vadd.f32 %v4012, %v4013
        %v4015 = vrot.slane %v4014, 1
        %v4016 = vadd.f32 %v4014, %v4015
        %v4017 = vsel %vm3353, %v3979, 0.0
        %v4018 = vsel %vm3353, %v3981, 0.0
        %v4019 = vadd.f32 %v4017, %v4018
        %v4020 = vrot.slane %v4019, 4
        %v4021 = vadd.f32 %v4019, %v4020
        %v4022 = vrot.slane %v4021, 2
        %v4023 = vadd.f32 %v4021, %v4022
        %v4024 = vrot.slane %v4023, 1
        %v4025 = vadd.f32 %v4023, %v4024
        %v4026 = vsel %vm3353, %v3983, 0.0
        %v4027 = vsel %vm3353, %v3985, 0.0
        %v4028 = vadd.f32 %v4026, %v4027
        %v4029 = vrot.slane %v4028, 4
        %v4030 = vadd.f32 %v4028, %v4029
        %v4031 = vrot.slane %v4030, 2
        %v4032 = vadd.f32 %v4030, %v4031
        %v4033 = vrot.slane %v4032, 1
        %v4034 = vadd.f32 %v4032, %v4033
        %v4035 = vsel %vm3353, %v3987, 0.0
        %v4036 = vsel %vm3353, %v3989, 0.0
        %v4037 = vadd.f32 %v4035, %v4036
        %v4038 = vrot.slane %v4037, 4
        %v4039 = vadd.f32 %v4037, %v4038
        %v4040 = vrot.slane %v4039, 2
        %v4041 = vadd.f32 %v4039, %v4040
        %v4042 = vrot.slane %v4041, 1
        %v4043 = vadd.f32 %v4041, %v4042
        %v4044 = vrcp.pop %v3998
        %v4045 = vrcp.pop %v4007
        %v4046 = vrcp.pop %v4016
        %v4047 = vrcp.pop %v4025
        %v4048 = vrcp.pop %v4034
        %v4049 = vrcp.pop %v4043
        %v4050 = vmul.f32 %v3967, %v4044
        %v4051 = vmul.f32 %v3969, %v4044
        %v4052 = vmul.f32 %v3971, %v4045
        %v4053 = vmul.f32 %v3973, %v4045
        %v4054 = vmul.f32 %v3975, %v4046
        %v4055 = vmul.f32 %v3977, %v4046
        %v4056 = vmul.f32 %v3979, %v4047
        %v4057 = vmul.f32 %v3981, %v4047
        %v4058 = vmul.f32 %v3983, %v4048
        %v4059 = vmul.f32 %v3985, %v4048
        %v4060 = vmul.f32 %v3987, %v4049
        %v4061 = vmul.f32 %v3989, %v4049
        %v4062 = vpack.c.bf16 %v4050, %v4050
        %v4063 = vpack.c.bf16 %v4051, %v4051
        %v4064 = vpack.c.bf16 %v4052, %v4052
        %v4065 = vpack.c.bf16 %v4053, %v4053
        %v4066 = vpack.c.bf16 %v4054, %v4054
        %v4067 = vpack.c.bf16 %v4055, %v4055
        %v4068 = vpack.c.bf16 %v4056, %v4056
        %v4069 = vpack.c.bf16 %v4057, %v4057
        %v4070 = vpack.c.bf16 %v4058, %v4058
        %v4071 = vpack.c.bf16 %v4059, %v4059
        %v4072 = vpack.c.bf16 %v4060, %v4060
        %v4073 = vpack.c.bf16 %v4061, %v4061
        %v4076 = vunpack.c.l.b16 %v4062
        %v4077 = vunpack.c.l.b16 %v4063
        %v4078 = vpack.c.b16 %v4077, %v4076
        %v4081 = vunpack.c.l.b16 %v3115
        %v4082 = vunpack.c.l.b16 %v3116
        %v4083 = vpack.c.b16 %v4082, %v4081
        %v4086 = vsel %vm3353, %v4078, 0
        %4088 = vmatpush.bf16.msra.mxu0 0
        %4089 = vmatpush.bf16.msra.mxu0 0
        %4090 = vmatpush.bf16.msra.mxu0 0
        %4091 = vmatpush.bf16.msra.mxu0 0
        %4092 = vmatpush.bf16.msra.mxu0 0
        %4093 = vmatpush.bf16.msra.mxu0 0
        %4094 = vmatpush.bf16.msra.mxu0 0
        %4095 = vmatpush.bf16.msra.mxu0 %v4083
        %4096 = vmatmul.bf16.gmra.mxu0 %v4086
        %v4097 = vpop.f32.mrf.mxu0
        %v4098 = vadd.f32 0.0, %v4097
        %v4099 = vpop.f32.mrf.mxu0
        %v4100 = vadd.f32 0.0, %v4099
        %4101 = vdwg.mxu0
        %v4104 = vunpack.c.l.b16 %v4064
        %v4105 = vunpack.c.l.b16 %v4065
        %v4106 = vpack.c.b16 %v4105, %v4104
        %v4109 = vunpack.c.l.b16 %v3119
        %v4110 = vunpack.c.l.b16 %v3120
        %v4111 = vpack.c.b16 %v4110, %v4109
        %v4114 = vsel %vm3353, %v4106, 0
        %4116 = vmatpush.bf16.msra.mxu0 0
        %4117 = vmatpush.bf16.msra.mxu0 0
        %4118 = vmatpush.bf16.msra.mxu0 0
        %4119 = vmatpush.bf16.msra.mxu0 0
        %4120 = vmatpush.bf16.msra.mxu0 0
        %4121 = vmatpush.bf16.msra.mxu0 0
        %4122 = vmatpush.bf16.msra.mxu0 0
        %4123 = vmatpush.bf16.msra.mxu0 %v4111
        %4124 = vmatmul.bf16.gmra.mxu0 %v4114
        %v4125 = vpop.f32.mrf.mxu0
        %v4126 = vadd.f32 0.0, %v4125
        %v4127 = vpop.f32.mrf.mxu0
        %v4128 = vadd.f32 0.0, %v4127
        %4129 = vdwg.mxu0
        %v4132 = vunpack.c.l.b16 %v4066
        %v4133 = vunpack.c.l.b16 %v4067
        %v4134 = vpack.c.b16 %v4133, %v4132
        %v4137 = vunpack.c.l.b16 %v3123
        %v4138 = vunpack.c.l.b16 %v3124
        %v4139 = vpack.c.b16 %v4138, %v4137
        %v4142 = vsel %vm3353, %v4134, 0
        %4144 = vmatpush.bf16.msra.mxu0 0
        %4145 = vmatpush.bf16.msra.mxu0 0
        %4146 = vmatpush.bf16.msra.mxu0 0
        %4147 = vmatpush.bf16.msra.mxu0 0
        %4148 = vmatpush.bf16.msra.mxu0 0
        %4149 = vmatpush.bf16.msra.mxu0 0
        %4150 = vmatpush.bf16.msra.mxu0 0
        %4151 = vmatpush.bf16.msra.mxu0 %v4139
        %4152 = vmatmul.bf16.gmra.mxu0 %v4142
        %v4153 = vpop.f32.mrf.mxu0
        %v4154 = vadd.f32 0.0, %v4153
        %v4155 = vpop.f32.mrf.mxu0
        %v4156 = vadd.f32 0.0, %v4155
        %4157 = vdwg.mxu0
        %v4160 = vunpack.c.l.b16 %v4068
        %v4161 = vunpack.c.l.b16 %v4069
        %v4162 = vpack.c.b16 %v4161, %v4160
        %v4165 = vunpack.c.l.b16 %v3127
        %v4166 = vunpack.c.l.b16 %v3128
        %v4167 = vpack.c.b16 %v4166, %v4165
        %v4170 = vsel %vm3353, %v4162, 0
        %4172 = vmatpush.bf16.msra.mxu0 0
        %4173 = vmatpush.bf16.msra.mxu0 0
        %4174 = vmatpush.bf16.msra.mxu0 0
        %4175 = vmatpush.bf16.msra.mxu0 0
        %4176 = vmatpush.bf16.msra.mxu0 0
        %4177 = vmatpush.bf16.msra.mxu0 0
        %4178 = vmatpush.bf16.msra.mxu0 0
        %4179 = vmatpush.bf16.msra.mxu0 %v4167
        %4180 = vmatmul.bf16.gmra.mxu0 %v4170
        %v4181 = vpop.f32.mrf.mxu0
        %v4182 = vadd.f32 0.0, %v4181
        %v4183 = vpop.f32.mrf.mxu0
        %v4184 = vadd.f32 0.0, %v4183
        %4185 = vdwg.mxu0
        %v4188 = vunpack.c.l.b16 %v4070
        %v4189 = vunpack.c.l.b16 %v4071
        %v4190 = vpack.c.b16 %v4189, %v4188
        %v4193 = vunpack.c.l.b16 %v3131
        %v4194 = vunpack.c.l.b16 %v3132
        %v4195 = vpack.c.b16 %v4194, %v4193
        %v4198 = vsel %vm3353, %v4190, 0
        %4200 = vmatpush.bf16.msra.mxu0 0
        %4201 = vmatpush.bf16.msra.mxu0 0
        %4202 = vmatpush.bf16.msra.mxu0 0
        %4203 = vmatpush.bf16.msra.mxu0 0
        %4204 = vmatpush.bf16.msra.mxu0 0
        %4205 = vmatpush.bf16.msra.mxu0 0
        %4206 = vmatpush.bf16.msra.mxu0 0
        %4207 = vmatpush.bf16.msra.mxu0 %v4195
        %4208 = vmatmul.bf16.gmra.mxu0 %v4198
        %v4209 = vpop.f32.mrf.mxu0
        %v4210 = vadd.f32 0.0, %v4209
        %v4211 = vpop.f32.mrf.mxu0
        %v4212 = vadd.f32 0.0, %v4211
        %4213 = vdwg.mxu0
        %v4216 = vunpack.c.l.b16 %v4072
        %v4217 = vunpack.c.l.b16 %v4073
        %v4218 = vpack.c.b16 %v4217, %v4216
        %v4221 = vunpack.c.l.b16 %v3135
        %v4222 = vunpack.c.l.b16 %v3136
        %v4223 = vpack.c.b16 %v4222, %v4221
        %v4226 = vsel %vm3353, %v4218, 0
        %4228 = vmatpush.bf16.msra.mxu0 0
        %4229 = vmatpush.bf16.msra.mxu0 0
        %4230 = vmatpush.bf16.msra.mxu0 0
        %4231 = vmatpush.bf16.msra.mxu0 0
        %4232 = vmatpush.bf16.msra.mxu0 0
        %4233 = vmatpush.bf16.msra.mxu0 0
        %4234 = vmatpush.bf16.msra.mxu0 0
        %4235 = vmatpush.bf16.msra.mxu0 %v4223
        %4236 = vmatmul.bf16.gmra.mxu0 %v4226
        %v4237 = vpop.f32.mrf.mxu0
        %v4238 = vadd.f32 0.0, %v4237
        %v4239 = vpop.f32.mrf.mxu0
        %v4240 = vadd.f32 0.0, %v4239
        %4241 = vdwg.mxu0
        %v4242 = vpack.c.bf16 %v3552, %v3552
        %v4243 = vpack.c.bf16 %v3554, %v3554
        %v4244 = vpack.c.bf16 %v4098, %v4098
        %v4245 = vpack.c.bf16 %v4100, %v4100
        %v4246 = vpack.c.bf16 %v3580, %v3580
        %v4247 = vpack.c.bf16 %v3582, %v3582
        %v4248 = vpack.c.bf16 %v4126, %v4126
        %v4249 = vpack.c.bf16 %v4128, %v4128
        %v4250 = vpack.c.bf16 %v3608, %v3608
        %v4251 = vpack.c.bf16 %v3610, %v3610
        %v4252 = vpack.c.bf16 %v4154, %v4154
        %v4253 = vpack.c.bf16 %v4156, %v4156
        %v4254 = vpack.c.bf16 %v3636, %v3636
        %v4255 = vpack.c.bf16 %v3638, %v3638
        %v4256 = vpack.c.bf16 %v4182, %v4182
        %v4257 = vpack.c.bf16 %v4184, %v4184
        %v4258 = vpack.c.bf16 %v3664, %v3664
        %v4259 = vpack.c.bf16 %v3666, %v3666
        %v4260 = vpack.c.bf16 %v4210, %v4210
        %v4261 = vpack.c.bf16 %v4212, %v4212
        %v4262 = vpack.c.bf16 %v3692, %v3692
        %v4263 = vpack.c.bf16 %v3694, %v3694
        %v4264 = vpack.c.bf16 %v4238, %v4238
        %v4265 = vpack.c.bf16 %v4240, %v4240
        %v4266 = vld [vmem:[%s6] sm:$0xff]
        %v4267 = vld [vmem:[%s6 + $0x8] sm:$0xff]
        %v4268 = vld [vmem:[%s6 + $0x10] sm:$0xff]
        %v4269 = vld [vmem:[%s6 + $0x18] sm:$0xff]
        %v4270 = vld [vmem:[%s6 + $0x20] sm:$0xff]
        %v4271 = vld [vmem:[%s6 + $0x28] sm:$0xff]
        %v4272 = vld [vmem:[%s6 + $0x30] sm:$0xff]
        %v4273 = vld [vmem:[%s6 + $0x38] sm:$0xff]
        %v4274 = vld [vmem:[%s6 + $0x40] sm:$0xff]
        %v4275 = vld [vmem:[%s6 + $0x48] sm:$0xff]
        %v4276 = vld [vmem:[%s6 + $0x50] sm:$0xff]
        %v4277 = vld [vmem:[%s6 + $0x58] sm:$0xff]
        %v4278 = vld [vmem:[%s6 + $0x60] sm:$0xff]
        %v4279 = vld [vmem:[%s6 + $0x68] sm:$0xff]
        %v4280 = vld [vmem:[%s6 + $0x70] sm:$0xff]
        %v4281 = vld [vmem:[%s6 + $0x78] sm:$0xff]
        %v4282 = vld [vmem:[%s6 + $0x80] sm:$0xff]
        %v4283 = vld [vmem:[%s6 + $0x88] sm:$0xff]
        %v4284 = vld [vmem:[%s6 + $0x90] sm:$0xff]
        %v4285 = vld [vmem:[%s6 + $0x98] sm:$0xff]
        %v4286 = vld [vmem:[%s6 + $0xa0] sm:$0xff]
        %v4287 = vld [vmem:[%s6 + $0xa8] sm:$0xff]
        %v4288 = vld [vmem:[%s6 + $0xb0] sm:$0xff]
        %v4289 = vld [vmem:[%s6 + $0xb8] sm:$0xff]
        %v4294 = vunpack.c.l.b16 %v4242
        %v4295 = vunpack.c.l.b16 %v4243
        %v4296 = vunpack.c.l.b16 %v4244
        %v4297 = vunpack.c.l.b16 %v4245
        %v4298 = vpack.c.b16 %v4295, %v4294
        %v4299 = vpack.c.b16 %v4297, %v4296
        %v4304 = vunpack.c.l.b16 %v4266
        %v4305 = vunpack.c.h.b16 %v4266
        %v4306 = vunpack.c.l.b16 %v4267
        %v4307 = vunpack.c.h.b16 %v4267
        %v4308 = vunpack.c.l.b16 %v4268
        %v4309 = vunpack.c.h.b16 %v4268
        %v4310 = vunpack.c.l.b16 %v4269
        %v4311 = vunpack.c.h.b16 %v4269
        %v4312 = vpack.c.b16 %v4306, %v4304
        %v4313 = vpack.c.b16 %v4307, %v4305
        %v4314 = vpack.c.b16 %v4310, %v4308
        %v4315 = vpack.c.b16 %v4311, %v4309
        %v4321 = vsel %vm3154, %v4298, 0
        %v4324 = vsel %vm3154, %v4299, 0
        %4326 = vmatpush.bf16.msra.mxu0 0
        %4327 = vmatpush.bf16.msra.mxu0 0
        %4328 = vmatpush.bf16.msra.mxu0 0
        %4329 = vmatpush.bf16.msra.mxu0 0
        %4330 = vmatpush.bf16.msra.mxu0 0
        %4331 = vmatpush.bf16.msra.mxu0 0
        %4332 = vmatpush.bf16.msra.mxu0 %v4314
        %4333 = vmatpush.bf16.msra.mxu0 %v4312
        %4334 = vmatmul.bf16.gmra.mxu0 %v4321
        %v4335 = vpop.f32.mrf.mxu0
        %v4336 = vadd.f32 0.0, %v4335
        %v4337 = vpop.f32.mrf.mxu0
        %v4338 = vadd.f32 0.0, %v4337
        %4339 = vmatmul.bf16.gmra.mxu0 %v4324
        %v4340 = vpop.f32.mrf.mxu0
        %v4341 = vadd.f32 0.0, %v4340
        %v4342 = vpop.f32.mrf.mxu0
        %v4343 = vadd.f32 0.0, %v4342
        %4344 = vdwg.mxu0
        %4345 = vmatpush.bf16.msra.mxu0 0
        %4346 = vmatpush.bf16.msra.mxu0 0
        %4347 = vmatpush.bf16.msra.mxu0 0
        %4348 = vmatpush.bf16.msra.mxu0 0
        %4349 = vmatpush.bf16.msra.mxu0 0
        %4350 = vmatpush.bf16.msra.mxu0 0
        %4351 = vmatpush.bf16.msra.mxu0 %v4315
        %4352 = vmatpush.bf16.msra.mxu0 %v4313
        %4353 = vmatmul.bf16.gmra.mxu0 %v4321
        %v4354 = vpop.f32.mrf.mxu0
        %v4355 = vadd.f32 0.0, %v4354
        %v4356 = vpop.f32.mrf.mxu0
        %v4357 = vadd.f32 0.0, %v4356
        %4358 = vmatmul.bf16.gmra.mxu0 %v4324
        %v4359 = vpop.f32.mrf.mxu0
        %v4360 = vadd.f32 0.0, %v4359
        %v4361 = vpop.f32.mrf.mxu0
        %v4362 = vadd.f32 0.0, %v4361
        %4363 = vdwg.mxu0
        %v4368 = vunpack.c.l.b16 %v4246
        %v4369 = vunpack.c.l.b16 %v4247
        %v4370 = vunpack.c.l.b16 %v4248
        %v4371 = vunpack.c.l.b16 %v4249
        %v4372 = vpack.c.b16 %v4369, %v4368
        %v4373 = vpack.c.b16 %v4371, %v4370
        %v4378 = vunpack.c.l.b16 %v4270
        %v4379 = vunpack.c.h.b16 %v4270
        %v4380 = vunpack.c.l.b16 %v4271
        %v4381 = vunpack.c.h.b16 %v4271
        %v4382 = vunpack.c.l.b16 %v4272
        %v4383 = vunpack.c.h.b16 %v4272
        %v4384 = vunpack.c.l.b16 %v4273
        %v4385 = vunpack.c.h.b16 %v4273
        %v4386 = vpack.c.b16 %v4380, %v4378
        %v4387 = vpack.c.b16 %v4381, %v4379
        %v4388 = vpack.c.b16 %v4384, %v4382
        %v4389 = vpack.c.b16 %v4385, %v4383
        %v4395 = vsel %vm3154, %v4372, 0
        %v4398 = vsel %vm3154, %v4373, 0
        %4400 = vmatpush.bf16.msra.mxu0 0
        %4401 = vmatpush.bf16.msra.mxu0 0
        %4402 = vmatpush.bf16.msra.mxu0 0
        %4403 = vmatpush.bf16.msra.mxu0 0
        %4404 = vmatpush.bf16.msra.mxu0 0
        %4405 = vmatpush.bf16.msra.mxu0 0
        %4406 = vmatpush.bf16.msra.mxu0 %v4388
        %4407 = vmatpush.bf16.msra.mxu0 %v4386
        %4408 = vmatmul.bf16.gmra.mxu0 %v4395
        %v4409 = vpop.f32.mrf.mxu0
        %v4410 = vadd.f32 0.0, %v4409
        %v4411 = vpop.f32.mrf.mxu0
        %v4412 = vadd.f32 0.0, %v4411
        %4413 = vmatmul.bf16.gmra.mxu0 %v4398
        %v4414 = vpop.f32.mrf.mxu0
        %v4415 = vadd.f32 0.0, %v4414
        %v4416 = vpop.f32.mrf.mxu0
        %v4417 = vadd.f32 0.0, %v4416
        %4418 = vdwg.mxu0
        %4419 = vmatpush.bf16.msra.mxu0 0
        %4420 = vmatpush.bf16.msra.mxu0 0
        %4421 = vmatpush.bf16.msra.mxu0 0
        %4422 = vmatpush.bf16.msra.mxu0 0
        %4423 = vmatpush.bf16.msra.mxu0 0
        %4424 = vmatpush.bf16.msra.mxu0 0
        %4425 = vmatpush.bf16.msra.mxu0 %v4389
        %4426 = vmatpush.bf16.msra.mxu0 %v4387
        %4427 = vmatmul.bf16.gmra.mxu0 %v4395
        %v4428 = vpop.f32.mrf.mxu0
        %v4429 = vadd.f32 0.0, %v4428
        %v4430 = vpop.f32.mrf.mxu0
        %v4431 = vadd.f32 0.0, %v4430
        %4432 = vmatmul.bf16.gmra.mxu0 %v4398
        %v4433 = vpop.f32.mrf.mxu0
        %v4434 = vadd.f32 0.0, %v4433
        %v4435 = vpop.f32.mrf.mxu0
        %v4436 = vadd.f32 0.0, %v4435
        %4437 = vdwg.mxu0
        %v4442 = vunpack.c.l.b16 %v4250
        %v4443 = vunpack.c.l.b16 %v4251
        %v4444 = vunpack.c.l.b16 %v4252
        %v4445 = vunpack.c.l.b16 %v4253
        %v4446 = vpack.c.b16 %v4443, %v4442
        %v4447 = vpack.c.b16 %v4445, %v4444
        %v4452 = vunpack.c.l.b16 %v4274
        %v4453 = vunpack.c.h.b16 %v4274
        %v4454 = vunpack.c.l.b16 %v4275
        %v4455 = vunpack.c.h.b16 %v4275
        %v4456 = vunpack.c.l.b16 %v4276
        %v4457 = vunpack.c.h.b16 %v4276
        %v4458 = vunpack.c.l.b16 %v4277
        %v4459 = vunpack.c.h.b16 %v4277
        %v4460 = vpack.c.b16 %v4454, %v4452
        %v4461 = vpack.c.b16 %v4455, %v4453
        %v4462 = vpack.c.b16 %v4458, %v4456
        %v4463 = vpack.c.b16 %v4459, %v4457
        %v4469 = vsel %vm3154, %v4446, 0
        %v4472 = vsel %vm3154, %v4447, 0
        %4474 = vmatpush.bf16.msra.mxu0 0
        %4475 = vmatpush.bf16.msra.mxu0 0
        %4476 = vmatpush.bf16.msra.mxu0 0
        %4477 = vmatpush.bf16.msra.mxu0 0
        %4478 = vmatpush.bf16.msra.mxu0 0
        %4479 = vmatpush.bf16.msra.mxu0 0
        %4480 = vmatpush.bf16.msra.mxu0 %v4462
        %4481 = vmatpush.bf16.msra.mxu0 %v4460
        %4482 = vmatmul.bf16.gmra.mxu0 %v4469
        %v4483 = vpop.f32.mrf.mxu0
        %v4484 = vadd.f32 0.0, %v4483
        %v4485 = vpop.f32.mrf.mxu0
        %v4486 = vadd.f32 0.0, %v4485
        %4487 = vmatmul.bf16.gmra.mxu0 %v4472
        %v4488 = vpop.f32.mrf.mxu0
        %v4489 = vadd.f32 0.0, %v4488
        %v4490 = vpop.f32.mrf.mxu0
        %v4491 = vadd.f32 0.0, %v4490
        %4492 = vdwg.mxu0
        %4493 = vmatpush.bf16.msra.mxu0 0
        %4494 = vmatpush.bf16.msra.mxu0 0
        %4495 = vmatpush.bf16.msra.mxu0 0
        %4496 = vmatpush.bf16.msra.mxu0 0
        %4497 = vmatpush.bf16.msra.mxu0 0
        %4498 = vmatpush.bf16.msra.mxu0 0
        %4499 = vmatpush.bf16.msra.mxu0 %v4463
        %4500 = vmatpush.bf16.msra.mxu0 %v4461
        %4501 = vmatmul.bf16.gmra.mxu0 %v4469
        %v4502 = vpop.f32.mrf.mxu0
        %v4503 = vadd.f32 0.0, %v4502
        %v4504 = vpop.f32.mrf.mxu0
        %v4505 = vadd.f32 0.0, %v4504
        %4506 = vmatmul.bf16.gmra.mxu0 %v4472
        %v4507 = vpop.f32.mrf.mxu0
        %v4508 = vadd.f32 0.0, %v4507
        %v4509 = vpop.f32.mrf.mxu0
        %v4510 = vadd.f32 0.0, %v4509
        %4511 = vdwg.mxu0
        %v4516 = vunpack.c.l.b16 %v4254
        %v4517 = vunpack.c.l.b16 %v4255
        %v4518 = vunpack.c.l.b16 %v4256
        %v4519 = vunpack.c.l.b16 %v4257
        %v4520 = vpack.c.b16 %v4517, %v4516
        %v4521 = vpack.c.b16 %v4519, %v4518
        %v4526 = vunpack.c.l.b16 %v4278
        %v4527 = vunpack.c.h.b16 %v4278
        %v4528 = vunpack.c.l.b16 %v4279
        %v4529 = vunpack.c.h.b16 %v4279
        %v4530 = vunpack.c.l.b16 %v4280
        %v4531 = vunpack.c.h.b16 %v4280
        %v4532 = vunpack.c.l.b16 %v4281
        %v4533 = vunpack.c.h.b16 %v4281
        %v4534 = vpack.c.b16 %v4528, %v4526
        %v4535 = vpack.c.b16 %v4529, %v4527
        %v4536 = vpack.c.b16 %v4532, %v4530
        %v4537 = vpack.c.b16 %v4533, %v4531
        %v4543 = vsel %vm3154, %v4520, 0
        %v4546 = vsel %vm3154, %v4521, 0
        %4548 = vmatpush.bf16.msra.mxu0 0
        %4549 = vmatpush.bf16.msra.mxu0 0
        %4550 = vmatpush.bf16.msra.mxu0 0
        %4551 = vmatpush.bf16.msra.mxu0 0
        %4552 = vmatpush.bf16.msra.mxu0 0
        %4553 = vmatpush.bf16.msra.mxu0 0
        %4554 = vmatpush.bf16.msra.mxu0 %v4536
        %4555 = vmatpush.bf16.msra.mxu0 %v4534
        %4556 = vmatmul.bf16.gmra.mxu0 %v4543
        %v4557 = vpop.f32.mrf.mxu0
        %v4558 = vadd.f32 0.0, %v4557
        %v4559 = vpop.f32.mrf.mxu0
        %v4560 = vadd.f32 0.0, %v4559
        %4561 = vmatmul.bf16.gmra.mxu0 %v4546
        %v4562 = vpop.f32.mrf.mxu0
        %v4563 = vadd.f32 0.0, %v4562
        %v4564 = vpop.f32.mrf.mxu0
        %v4565 = vadd.f32 0.0, %v4564
        %4566 = vdwg.mxu0
        %4567 = vmatpush.bf16.msra.mxu0 0
        %4568 = vmatpush.bf16.msra.mxu0 0
        %4569 = vmatpush.bf16.msra.mxu0 0
        %4570 = vmatpush.bf16.msra.mxu0 0
        %4571 = vmatpush.bf16.msra.mxu0 0
        %4572 = vmatpush.bf16.msra.mxu0 0
        %4573 = vmatpush.bf16.msra.mxu0 %v4537
        %4574 = vmatpush.bf16.msra.mxu0 %v4535
        %4575 = vmatmul.bf16.gmra.mxu0 %v4543
        %v4576 = vpop.f32.mrf.mxu0
        %v4577 = vadd.f32 0.0, %v4576
        %v4578 = vpop.f32.mrf.mxu0
        %v4579 = vadd.f32 0.0, %v4578
        %4580 = vmatmul.bf16.gmra.mxu0 %v4546
        %v4581 = vpop.f32.mrf.mxu0
        %v4582 = vadd.f32 0.0, %v4581
        %v4583 = vpop.f32.mrf.mxu0
        %v4584 = vadd.f32 0.0, %v4583
        %4585 = vdwg.mxu0
        %v4590 = vunpack.c.l.b16 %v4258
        %v4591 = vunpack.c.l.b16 %v4259
        %v4592 = vunpack.c.l.b16 %v4260
        %v4593 = vunpack.c.l.b16 %v4261
        %v4594 = vpack.c.b16 %v4591, %v4590
        %v4595 = vpack.c.b16 %v4593, %v4592
        %v4600 = vunpack.c.l.b16 %v4282
        %v4601 = vunpack.c.h.b16 %v4282
        %v4602 = vunpack.c.l.b16 %v4283
        %v4603 = vunpack.c.h.b16 %v4283
        %v4604 = vunpack.c.l.b16 %v4284
        %v4605 = vunpack.c.h.b16 %v4284
        %v4606 = vunpack.c.l.b16 %v4285
        %v4607 = vunpack.c.h.b16 %v4285
        %v4608 = vpack.c.b16 %v4602, %v4600
        %v4609 = vpack.c.b16 %v4603, %v4601
        %v4610 = vpack.c.b16 %v4606, %v4604
        %v4611 = vpack.c.b16 %v4607, %v4605
        %v4617 = vsel %vm3154, %v4594, 0
        %v4620 = vsel %vm3154, %v4595, 0
        %4622 = vmatpush.bf16.msra.mxu0 0
        %4623 = vmatpush.bf16.msra.mxu0 0
        %4624 = vmatpush.bf16.msra.mxu0 0
        %4625 = vmatpush.bf16.msra.mxu0 0
        %4626 = vmatpush.bf16.msra.mxu0 0
        %4627 = vmatpush.bf16.msra.mxu0 0
        %4628 = vmatpush.bf16.msra.mxu0 %v4610
        %4629 = vmatpush.bf16.msra.mxu0 %v4608
        %4630 = vmatmul.bf16.gmra.mxu0 %v4617
        %v4631 = vpop.f32.mrf.mxu0
        %v4632 = vadd.f32 0.0, %v4631
        %v4633 = vpop.f32.mrf.mxu0
        %v4634 = vadd.f32 0.0, %v4633
        %4635 = vmatmul.bf16.gmra.mxu0 %v4620
        %v4636 = vpop.f32.mrf.mxu0
        %v4637 = vadd.f32 0.0, %v4636
        %v4638 = vpop.f32.mrf.mxu0
        %v4639 = vadd.f32 0.0, %v4638
        %4640 = vdwg.mxu0
        %4641 = vmatpush.bf16.msra.mxu0 0
        %4642 = vmatpush.bf16.msra.mxu0 0
        %4643 = vmatpush.bf16.msra.mxu0 0
        %4644 = vmatpush.bf16.msra.mxu0 0
        %4645 = vmatpush.bf16.msra.mxu0 0
        %4646 = vmatpush.bf16.msra.mxu0 0
        %4647 = vmatpush.bf16.msra.mxu0 %v4611
        %4648 = vmatpush.bf16.msra.mxu0 %v4609
        %4649 = vmatmul.bf16.gmra.mxu0 %v4617
        %v4650 = vpop.f32.mrf.mxu0
        %v4651 = vadd.f32 0.0, %v4650
        %v4652 = vpop.f32.mrf.mxu0
        %v4653 = vadd.f32 0.0, %v4652
        %4654 = vmatmul.bf16.gmra.mxu0 %v4620
        %v4655 = vpop.f32.mrf.mxu0
        %v4656 = vadd.f32 0.0, %v4655
        %v4657 = vpop.f32.mrf.mxu0
        %v4658 = vadd.f32 0.0, %v4657
        %4659 = vdwg.mxu0
        %v4664 = vunpack.c.l.b16 %v4262
        %v4665 = vunpack.c.l.b16 %v4263
        %v4666 = vunpack.c.l.b16 %v4264
        %v4667 = vunpack.c.l.b16 %v4265
        %v4668 = vpack.c.b16 %v4665, %v4664
        %v4669 = vpack.c.b16 %v4667, %v4666
        %v4674 = vunpack.c.l.b16 %v4286
        %v4675 = vunpack.c.h.b16 %v4286
        %v4676 = vunpack.c.l.b16 %v4287
        %v4677 = vunpack.c.h.b16 %v4287
        %v4678 = vunpack.c.l.b16 %v4288
        %v4679 = vunpack.c.h.b16 %v4288
        %v4680 = vunpack.c.l.b16 %v4289
        %v4681 = vunpack.c.h.b16 %v4289
        %v4682 = vpack.c.b16 %v4676, %v4674
        %v4683 = vpack.c.b16 %v4677, %v4675
        %v4684 = vpack.c.b16 %v4680, %v4678
        %v4685 = vpack.c.b16 %v4681, %v4679
        %v4691 = vsel %vm3154, %v4668, 0
        %v4694 = vsel %vm3154, %v4669, 0
        %4696 = vmatpush.bf16.msra.mxu0 0
        %4697 = vmatpush.bf16.msra.mxu0 0
        %4698 = vmatpush.bf16.msra.mxu0 0
        %4699 = vmatpush.bf16.msra.mxu0 0
        %4700 = vmatpush.bf16.msra.mxu0 0
        %4701 = vmatpush.bf16.msra.mxu0 0
        %4702 = vmatpush.bf16.msra.mxu0 %v4684
        %4703 = vmatpush.bf16.msra.mxu0 %v4682
        %4704 = vmatmul.bf16.gmra.mxu0 %v4691
        %v4705 = vpop.f32.mrf.mxu0
        %v4706 = vadd.f32 0.0, %v4705
        %v4707 = vpop.f32.mrf.mxu0
        %v4708 = vadd.f32 0.0, %v4707
        %4709 = vmatmul.bf16.gmra.mxu0 %v4694
        %v4710 = vpop.f32.mrf.mxu0
        %v4711 = vadd.f32 0.0, %v4710
        %v4712 = vpop.f32.mrf.mxu0
        %v4713 = vadd.f32 0.0, %v4712
        %4714 = vdwg.mxu0
        %4715 = vmatpush.bf16.msra.mxu0 0
        %4716 = vmatpush.bf16.msra.mxu0 0
        %4717 = vmatpush.bf16.msra.mxu0 0
        %4718 = vmatpush.bf16.msra.mxu0 0
        %4719 = vmatpush.bf16.msra.mxu0 0
        %4720 = vmatpush.bf16.msra.mxu0 0
        %4721 = vmatpush.bf16.msra.mxu0 %v4685
        %4722 = vmatpush.bf16.msra.mxu0 %v4683
        %4723 = vmatmul.bf16.gmra.mxu0 %v4691
        %v4724 = vpop.f32.mrf.mxu0
        %v4725 = vadd.f32 0.0, %v4724
        %v4726 = vpop.f32.mrf.mxu0
        %v4727 = vadd.f32 0.0, %v4726
        %4728 = vmatmul.bf16.gmra.mxu0 %v4694
        %v4729 = vpop.f32.mrf.mxu0
        %v4730 = vadd.f32 0.0, %v4729
        %v4731 = vpop.f32.mrf.mxu0
        %v4732 = vadd.f32 0.0, %v4731
        %4733 = vdwg.mxu0
        %v4734 = vadd.f32 %v4336, %v4410
        %v4735 = vadd.f32 %v4734, %v4484
        %v4736 = vadd.f32 %v4735, %v4558
        %v4737 = vadd.f32 %v4736, %v4632
        %v4738 = vadd.f32 %v4737, %v4706
        %v4739 = vsel %vm483, %v4355, 0.0
        %v4740 = vsel %vm483, %v4429, 0.0
        %v4741 = vadd.f32 %v4739, %v4740
        %v4742 = vsel %vm483, %v4503, 0.0
        %v4743 = vadd.f32 %v4741, %v4742
        %v4744 = vsel %vm483, %v4577, 0.0
        %v4745 = vadd.f32 %v4743, %v4744
        %v4746 = vsel %vm483, %v4651, 0.0
        %v4747 = vadd.f32 %v4745, %v4746
        %v4748 = vsel %vm483, %v4725, 0.0
        %v4749 = vadd.f32 %v4747, %v4748
        %v4750 = vadd.f32 %v4338, %v4412
        %v4751 = vadd.f32 %v4750, %v4486
        %v4752 = vadd.f32 %v4751, %v4560
        %v4753 = vadd.f32 %v4752, %v4634
        %v4754 = vadd.f32 %v4753, %v4708
        %v4755 = vsel %vm483, %v4357, 0.0
        %v4756 = vsel %vm483, %v4431, 0.0
        %v4757 = vadd.f32 %v4755, %v4756
        %v4758 = vsel %vm483, %v4505, 0.0
        %v4759 = vadd.f32 %v4757, %v4758
        %v4760 = vsel %vm483, %v4579, 0.0
        %v4761 = vadd.f32 %v4759, %v4760
        %v4762 = vsel %vm483, %v4653, 0.0
        %v4763 = vadd.f32 %v4761, %v4762
        %v4764 = vsel %vm483, %v4727, 0.0
        %v4765 = vadd.f32 %v4763, %v4764
        %v4766 = vadd.f32 %v4341, %v4415
        %v4767 = vadd.f32 %v4766, %v4489
        %v4768 = vadd.f32 %v4767, %v4563
        %v4769 = vadd.f32 %v4768, %v4637
        %v4770 = vadd.f32 %v4769, %v4711
        %v4771 = vsel %vm483, %v4360, 0.0
        %v4772 = vsel %vm483, %v4434, 0.0
        %v4773 = vadd.f32 %v4771, %v4772
        %v4774 = vsel %vm483, %v4508, 0.0
        %v4775 = vadd.f32 %v4773, %v4774
        %v4776 = vsel %vm483, %v4582, 0.0
        %v4777 = vadd.f32 %v4775, %v4776
        %v4778 = vsel %vm483, %v4656, 0.0
        %v4779 = vadd.f32 %v4777, %v4778
        %v4780 = vsel %vm483, %v4730, 0.0
        %v4781 = vadd.f32 %v4779, %v4780
        %v4782 = vadd.f32 %v4343, %v4417
        %v4783 = vadd.f32 %v4782, %v4491
        %v4784 = vadd.f32 %v4783, %v4565
        %v4785 = vadd.f32 %v4784, %v4639
        %v4786 = vadd.f32 %v4785, %v4713
        %v4787 = vsel %vm483, %v4362, 0.0
        %v4788 = vsel %vm483, %v4436, 0.0
        %v4789 = vadd.f32 %v4787, %v4788
        %v4790 = vsel %vm483, %v4510, 0.0
        %v4791 = vadd.f32 %v4789, %v4790
        %v4792 = vsel %vm483, %v4584, 0.0
        %v4793 = vadd.f32 %v4791, %v4792
        %v4794 = vsel %vm483, %v4658, 0.0
        %v4795 = vadd.f32 %v4793, %v4794
        %v4796 = vsel %vm483, %v4732, 0.0
        %v4797 = vadd.f32 %v4795, %v4796
        %v4798 = vld [vmem:[%s7] sm:$0x3]
        %v4800 = vperm.slane %v4798, 0
        %v4801 = vperm.slane %v4798, 1
        %v4804 = vadd.f32 %v4738, %v4800
        %v4805 = vadd.f32 %v4749, %v4801
        %v4806 = vadd.f32 %v4754, %v4800
        %v4807 = vadd.f32 %v4765, %v4801
        %v4808 = vadd.f32 %v4770, %v4800
        %v4809 = vadd.f32 %v4781, %v4801
        %v4810 = vadd.f32 %v4786, %v4800
        %v4811 = vadd.f32 %v4797, %v4801
        %v4812 = vadd.f32 %v473, %v4804
        %v4813 = vadd.f32 %v474, %v4805
        %v4814 = vadd.f32 %v475, %v4806
        %v4815 = vadd.f32 %v476, %v4807
        %v4816 = vadd.f32 %v477, %v4808
        %v4817 = vadd.f32 %v478, %v4809
        %v4818 = vadd.f32 %v479, %v4810
        %v4819 = vadd.f32 %v480, %v4811
        %v4820 = vld [vmem:[%s8] sm:$0x3]
        %v4821 = vld [vmem:[%s9] sm:$0x3]
        %v4822 = vsel %vm483, %v4813, 0.0
        %v4823 = vadd.f32 %v4812, %v4822
        %4824 = vadd.xlane.f32.xlu0 %v4823
        %v4825 = vpop.xlane.xlu0 %4824
        %v4826 = vsel %vm483, %v4815, 0.0
        %v4827 = vadd.f32 %v4814, %v4826
        %4828 = vadd.xlane.f32.xlu0 %v4827
        %v4829 = vpop.xlane.xlu0 %4828
        %v4830 = vsel %vm483, %v4817, 0.0
        %v4831 = vadd.f32 %v4816, %v4830
        %4832 = vadd.xlane.f32.xlu0 %v4831
        %v4833 = vpop.xlane.xlu0 %4832
        %v4834 = vsel %vm483, %v4819, 0.0
        %v4835 = vadd.f32 %v4818, %v4834
        %4836 = vadd.xlane.f32.xlu0 %v4835
        %v4837 = vpop.xlane.xlu0 %4836
        %v4838 = vmul.f32 %v4825, %v506
        %v4839 = vmul.f32 %v4829, %v506
        %v4840 = vmul.f32 %v4833, %v506
        %v4841 = vmul.f32 %v4837, %v506
        %v4842 = vsub.f32 %v4812, %v4838
        %v4843 = vsub.f32 %v4813, %v4838
        %v4844 = vsub.f32 %v4814, %v4839
        %v4845 = vsub.f32 %v4815, %v4839
        %v4846 = vsub.f32 %v4816, %v4840
        %v4847 = vsub.f32 %v4817, %v4840
        %v4848 = vsub.f32 %v4818, %v4841
        %v4849 = vsub.f32 %v4819, %v4841
        %v4850 = vmul.f32 %v4842, %v4842
        %v4851 = vmul.f32 %v4843, %v4843
        %v4852 = vmul.f32 %v4844, %v4844
        %v4853 = vmul.f32 %v4845, %v4845
        %v4854 = vmul.f32 %v4846, %v4846
        %v4855 = vmul.f32 %v4847, %v4847
        %v4856 = vmul.f32 %v4848, %v4848
        %v4857 = vmul.f32 %v4849, %v4849
        %v4858 = vsel %vm483, %v4851, 0.0
        %v4859 = vadd.f32 %v4850, %v4858
        %4860 = vadd.xlane.f32.xlu0 %v4859
        %v4861 = vpop.xlane.xlu0 %4860
        %v4862 = vsel %vm483, %v4853, 0.0
        %v4863 = vadd.f32 %v4852, %v4862
        %4864 = vadd.xlane.f32.xlu0 %v4863
        %v4865 = vpop.xlane.xlu0 %4864
        %v4866 = vsel %vm483, %v4855, 0.0
        %v4867 = vadd.f32 %v4854, %v4866
        %4868 = vadd.xlane.f32.xlu0 %v4867
        %v4869 = vpop.xlane.xlu0 %4868
        %v4870 = vsel %vm483, %v4857, 0.0
        %v4871 = vadd.f32 %v4856, %v4870
        %4872 = vadd.xlane.f32.xlu0 %v4871
        %v4873 = vpop.xlane.xlu0 %4872
        %v4874 = vmul.f32 %v4861, %v506
        %v4875 = vmul.f32 %v4865, %v506
        %v4876 = vmul.f32 %v4869, %v506
        %v4877 = vmul.f32 %v4873, %v506
        %v4878 = vadd.f32 %v4874, 1e-05
        %v4879 = vadd.f32 %v4875, 1e-05
        %v4880 = vadd.f32 %v4876, 1e-05
        %v4881 = vadd.f32 %v4877, 1e-05
        %v4882 = vrsqrt.pop %v4878
        %v4883 = vmul.f32 %v4882, %v4878
        %v4884 = vmul.f32 %v4883, %v4882
        %v4885 = vmul.f32 0.5, %v4884
        %v4886 = vsub.f32 1.5, %v4885
        %v4887 = vmul.f32 %v4882, %v4886
        %vm4888 = vweird.f32 %v4878
        %vm4889 = vweird.f32 %v4882
        %vm4890 = vmor %vm4888, %vm4889
        %v4891 = vsel %vm4890, %v4882, %v4887
        %v4892 = vrsqrt.pop %v4879
        %v4893 = vmul.f32 %v4892, %v4879
        %v4894 = vmul.f32 %v4893, %v4892
        %v4895 = vmul.f32 0.5, %v4894
        %v4896 = vsub.f32 1.5, %v4895
        %v4897 = vmul.f32 %v4892, %v4896
        %vm4898 = vweird.f32 %v4879
        %vm4899 = vweird.f32 %v4892
        %vm4900 = vmor %vm4898, %vm4899
        %v4901 = vsel %vm4900, %v4892, %v4897
        %v4902 = vrsqrt.pop %v4880
        %v4903 = vmul.f32 %v4902, %v4880
        %v4904 = vmul.f32 %v4903, %v4902
        %v4905 = vmul.f32 0.5, %v4904
        %v4906 = vsub.f32 1.5, %v4905
        %v4907 = vmul.f32 %v4902, %v4906
        %vm4908 = vweird.f32 %v4880
        %vm4909 = vweird.f32 %v4902
        %vm4910 = vmor %vm4908, %vm4909
        %v4911 = vsel %vm4910, %v4902, %v4907
        %v4912 = vrsqrt.pop %v4881
        %v4913 = vmul.f32 %v4912, %v4881
        %v4914 = vmul.f32 %v4913, %v4912
        %v4915 = vmul.f32 0.5, %v4914
        %v4916 = vsub.f32 1.5, %v4915
        %v4917 = vmul.f32 %v4912, %v4916
        %vm4918 = vweird.f32 %v4881
        %vm4919 = vweird.f32 %v4912
        %vm4920 = vmor %vm4918, %vm4919
        %v4921 = vsel %vm4920, %v4912, %v4917
        %v4922 = vmul.f32 %v4842, %v4891
        %v4923 = vmul.f32 %v4843, %v4891
        %v4924 = vmul.f32 %v4844, %v4901
        %v4925 = vmul.f32 %v4845, %v4901
        %v4926 = vmul.f32 %v4846, %v4911
        %v4927 = vmul.f32 %v4847, %v4911
        %v4928 = vmul.f32 %v4848, %v4921
        %v4929 = vmul.f32 %v4849, %v4921
        %v4931 = vperm.slane %v4820, 0
        %v4932 = vperm.slane %v4820, 1
        %v4935 = vmul.f32 %v4922, %v4931
        %v4936 = vmul.f32 %v4923, %v4932
        %v4937 = vmul.f32 %v4924, %v4931
        %v4938 = vmul.f32 %v4925, %v4932
        %v4939 = vmul.f32 %v4926, %v4931
        %v4940 = vmul.f32 %v4927, %v4932
        %v4941 = vmul.f32 %v4928, %v4931
        %v4942 = vmul.f32 %v4929, %v4932
        %v4944 = vperm.slane %v4821, 0
        %v4945 = vperm.slane %v4821, 1
        %v4948 = vadd.f32 %v4935, %v4944
        %v4949 = vadd.f32 %v4936, %v4945
        %v4950 = vadd.f32 %v4937, %v4944
        %v4951 = vadd.f32 %v4938, %v4945
        %v4952 = vadd.f32 %v4939, %v4944
        %v4953 = vadd.f32 %v4940, %v4945
        %v4954 = vadd.f32 %v4941, %v4944
        %v4955 = vadd.f32 %v4942, %v4945
        %v4956 = vpack.c.bf16 %v4950, %v4948
        %v4957 = vpack.c.bf16 %v4951, %v4949
        %v4958 = vpack.c.bf16 %v4954, %v4952
        %v4959 = vpack.c.bf16 %v4955, %v4953
        %v4960 = vld [vmem:[%s10] sm:$0xff]
        %v4961 = vld [vmem:[%s10 + $0x8] sm:$0xff]
        %v4962 = vld [vmem:[%s10 + $0x10] sm:$0xff]
        %v4963 = vld [vmem:[%s10 + $0x18] sm:$0xff]
        %v4964 = vld [vmem:[%s10 + $0x20] sm:$0xff]
        %v4965 = vld [vmem:[%s10 + $0x28] sm:$0xff]
        %v4966 = vld [vmem:[%s10 + $0x30] sm:$0xff]
        %v4967 = vld [vmem:[%s10 + $0x38] sm:$0xff]
        %v4968 = vld [vmem:[%s10 + $0x40] sm:$0xff]
        %v4969 = vld [vmem:[%s10 + $0x48] sm:$0xff]
        %v4970 = vld [vmem:[%s10 + $0x50] sm:$0xff]
        %v4971 = vld [vmem:[%s10 + $0x58] sm:$0xff]
        %v4972 = vld [vmem:[%s10 + $0x60] sm:$0xff]
        %v4973 = vld [vmem:[%s10 + $0x68] sm:$0xff]
        %v4974 = vld [vmem:[%s10 + $0x70] sm:$0xff]
        %v4975 = vld [vmem:[%s10 + $0x78] sm:$0xff]
        %v4976 = vld [vmem:[%s10 + $0x80] sm:$0xff]
        %v4977 = vld [vmem:[%s10 + $0x88] sm:$0xff]
        %v4978 = vld [vmem:[%s10 + $0x90] sm:$0xff]
        %v4979 = vld [vmem:[%s10 + $0x98] sm:$0xff]
        %v4980 = vld [vmem:[%s10 + $0xa0] sm:$0xff]
        %v4981 = vld [vmem:[%s10 + $0xa8] sm:$0xff]
        %v4982 = vld [vmem:[%s10 + $0xb0] sm:$0xff]
        %v4983 = vld [vmem:[%s10 + $0xb8] sm:$0xff]
        %v4984 = vld [vmem:[%s10 + $0xc0] sm:$0xff]
        %v4985 = vld [vmem:[%s10 + $0xc8] sm:$0xff]
        %v4986 = vld [vmem:[%s10 + $0xd0] sm:$0xff]
        %v4987 = vld [vmem:[%s10 + $0xd8] sm:$0xff]
        %v4988 = vld [vmem:[%s10 + $0xe0] sm:$0xff]
        %v4989 = vld [vmem:[%s10 + $0xe8] sm:$0xff]
        %v4990 = vld [vmem:[%s10 + $0xf0] sm:$0xff]
        %v4991 = vld [vmem:[%s10 + $0xf8] sm:$0xff]
        %v4992 = vld [vmem:[%s10 + $0x100] sm:$0xff]
        %v4993 = vld [vmem:[%s10 + $0x108] sm:$0xff]
        %v4994 = vld [vmem:[%s10 + $0x110] sm:$0xff]
        %v4995 = vld [vmem:[%s10 + $0x118] sm:$0xff]
        %v4996 = vld [vmem:[%s10 + $0x120] sm:$0xff]
        %v4997 = vld [vmem:[%s10 + $0x128] sm:$0xff]
        %v4998 = vld [vmem:[%s10 + $0x130] sm:$0xff]
        %v4999 = vld [vmem:[%s10 + $0x138] sm:$0xff]
        %v5000 = vld [vmem:[%s10 + $0x140] sm:$0xff]
        %v5001 = vld [vmem:[%s10 + $0x148] sm:$0xff]
        %v5002 = vld [vmem:[%s10 + $0x150] sm:$0xff]
        %v5003 = vld [vmem:[%s10 + $0x158] sm:$0xff]
        %v5004 = vld [vmem:[%s10 + $0x160] sm:$0xff]
        %v5005 = vld [vmem:[%s10 + $0x168] sm:$0xff]
        %v5006 = vld [vmem:[%s10 + $0x170] sm:$0xff]
        %v5007 = vld [vmem:[%s10 + $0x178] sm:$0xff]
        %v5008 = vld [vmem:[%s10 + $0x180] sm:$0xff]
        %v5009 = vld [vmem:[%s10 + $0x188] sm:$0xff]
        %v5010 = vld [vmem:[%s10 + $0x190] sm:$0xff]
        %v5011 = vld [vmem:[%s10 + $0x198] sm:$0xff]
        %v5012 = vld [vmem:[%s10 + $0x1a0] sm:$0xff]
        %v5013 = vld [vmem:[%s10 + $0x1a8] sm:$0xff]
        %v5014 = vld [vmem:[%s10 + $0x1b0] sm:$0xff]
        %v5015 = vld [vmem:[%s10 + $0x1b8] sm:$0xff]
        %v5016 = vld [vmem:[%s10 + $0x1c0] sm:$0xff]
        %v5017 = vld [vmem:[%s10 + $0x1c8] sm:$0xff]
        %v5018 = vld [vmem:[%s10 + $0x1d0] sm:$0xff]
        %v5019 = vld [vmem:[%s10 + $0x1d8] sm:$0xff]
        %v5020 = vld [vmem:[%s10 + $0x1e0] sm:$0xff]
        %v5021 = vld [vmem:[%s10 + $0x1e8] sm:$0xff]
        %v5022 = vld [vmem:[%s10 + $0x1f0] sm:$0xff]
        %v5023 = vld [vmem:[%s10 + $0x1f8] sm:$0xff]
        %v5024 = vld [vmem:[%s10 + $0x200] sm:$0xff]
        %v5025 = vld [vmem:[%s10 + $0x208] sm:$0xff]
        %v5026 = vld [vmem:[%s10 + $0x210] sm:$0xff]
        %v5027 = vld [vmem:[%s10 + $0x218] sm:$0xff]
        %v5028 = vld [vmem:[%s10 + $0x220] sm:$0xff]
        %v5029 = vld [vmem:[%s10 + $0x228] sm:$0xff]
        %v5030 = vld [vmem:[%s10 + $0x230] sm:$0xff]
        %v5031 = vld [vmem:[%s10 + $0x238] sm:$0xff]
        %v5032 = vld [vmem:[%s11] sm:$0x3f]
        %v5034 = vperm.slane %v5032, 0
        %v5035 = vperm.slane %v5032, 1
        %v5036 = vperm.slane %v5032, 2
        %v5037 = vperm.slane %v5032, 3
        %v5038 = vperm.slane %v5032, 4
        %v5039 = vperm.slane %v5032, 5
        %v5118 = vunpack.c.l.b16 %v4960
        %v5119 = vunpack.c.h.b16 %v4960
        %v5120 = vunpack.c.l.b16 %v4961
        %v5121 = vunpack.c.h.b16 %v4961
        %v5122 = vunpack.c.l.b16 %v4962
        %v5123 = vunpack.c.h.b16 %v4962
        %v5124 = vunpack.c.l.b16 %v4963
        %v5125 = vunpack.c.h.b16 %v4963
        %v5126 = vunpack.c.l.b16 %v4964
        %v5127 = vunpack.c.h.b16 %v4964
        %v5128 = vunpack.c.l.b16 %v4965
        %v5129 = vunpack.c.h.b16 %v4965
        %v5130 = vunpack.c.l.b16 %v4966
        %v5131 = vunpack.c.h.b16 %v4966
        %v5132 = vunpack.c.l.b16 %v4967
        %v5133 = vunpack.c.h.b16 %v4967
        %v5134 = vunpack.c.l.b16 %v4968
        %v5135 = vunpack.c.h.b16 %v4968
        %v5136 = vunpack.c.l.b16 %v4969
        %v5137 = vunpack.c.h.b16 %v4969
        %v5138 = vunpack.c.l.b16 %v4970
        %v5139 = vunpack.c.h.b16 %v4970
        %v5140 = vunpack.c.l.b16 %v4971
        %v5141 = vunpack.c.h.b16 %v4971
        %v5142 = vunpack.c.l.b16 %v4972
        %v5143 = vunpack.c.h.b16 %v4972
        %v5144 = vunpack.c.l.b16 %v4973
        %v5145 = vunpack.c.h.b16 %v4973
        %v5146 = vunpack.c.l.b16 %v4974
        %v5147 = vunpack.c.h.b16 %v4974
        %v5148 = vunpack.c.l.b16 %v4975
        %v5149 = vunpack.c.h.b16 %v4975
        %v5150 = vunpack.c.l.b16 %v4976
        %v5151 = vunpack.c.h.b16 %v4976
        %v5152 = vunpack.c.l.b16 %v4977
        %v5153 = vunpack.c.h.b16 %v4977
        %v5154 = vunpack.c.l.b16 %v4978
        %v5155 = vunpack.c.h.b16 %v4978
        %v5156 = vunpack.c.l.b16 %v4979
        %v5157 = vunpack.c.h.b16 %v4979
        %v5158 = vunpack.c.l.b16 %v4980
        %v5159 = vunpack.c.h.b16 %v4980
        %v5160 = vunpack.c.l.b16 %v4981
        %v5161 = vunpack.c.h.b16 %v4981
        %v5162 = vunpack.c.l.b16 %v4982
        %v5163 = vunpack.c.h.b16 %v4982
        %v5164 = vunpack.c.l.b16 %v4983
        %v5165 = vunpack.c.h.b16 %v4983
        %v5166 = vunpack.c.l.b16 %v4984
        %v5167 = vunpack.c.h.b16 %v4984
        %v5168 = vunpack.c.l.b16 %v4985
        %v5169 = vunpack.c.h.b16 %v4985
        %v5170 = vunpack.c.l.b16 %v4986
        %v5171 = vunpack.c.h.b16 %v4986
        %v5172 = vunpack.c.l.b16 %v4987
        %v5173 = vunpack.c.h.b16 %v4987
        %v5174 = vunpack.c.l.b16 %v4988
        %v5175 = vunpack.c.h.b16 %v4988
        %v5176 = vunpack.c.l.b16 %v4989
        %v5177 = vunpack.c.h.b16 %v4989
        %v5178 = vunpack.c.l.b16 %v4990
        %v5179 = vunpack.c.h.b16 %v4990
        %v5180 = vunpack.c.l.b16 %v4991
        %v5181 = vunpack.c.h.b16 %v4991
        %v5182 = vunpack.c.l.b16 %v4992
        %v5183 = vunpack.c.h.b16 %v4992
        %v5184 = vunpack.c.l.b16 %v4993
        %v5185 = vunpack.c.h.b16 %v4993
        %v5186 = vunpack.c.l.b16 %v4994
        %v5187 = vunpack.c.h.b16 %v4994
        %v5188 = vunpack.c.l.b16 %v4995
        %v5189 = vunpack.c.h.b16 %v4995
        %v5190 = vunpack.c.l.b16 %v4996
        %v5191 = vunpack.c.h.b16 %v4996
        %v5192 = vunpack.c.l.b16 %v4997
        %v5193 = vunpack.c.h.b16 %v4997
        %v5194 = vunpack.c.l.b16 %v4998
        %v5195 = vunpack.c.h.b16 %v4998
        %v5196 = vunpack.c.l.b16 %v4999
        %v5197 = vunpack.c.h.b16 %v4999
        %v5198 = vunpack.c.l.b16 %v5000
        %v5199 = vunpack.c.h.b16 %v5000
        %v5200 = vunpack.c.l.b16 %v5001
        %v5201 = vunpack.c.h.b16 %v5001
        %v5202 = vunpack.c.l.b16 %v5002
        %v5203 = vunpack.c.h.b16 %v5002
        %v5204 = vunpack.c.l.b16 %v5003
        %v5205 = vunpack.c.h.b16 %v5003
        %v5206 = vunpack.c.l.b16 %v5004
        %v5207 = vunpack.c.h.b16 %v5004
        %v5208 = vunpack.c.l.b16 %v5005
        %v5209 = vunpack.c.h.b16 %v5005
        %v5210 = vunpack.c.l.b16 %v5006
        %v5211 = vunpack.c.h.b16 %v5006
        %v5212 = vunpack.c.l.b16 %v5007
        %v5213 = vunpack.c.h.b16 %v5007
        %v5214 = vunpack.c.l.b16 %v5008
        %v5215 = vunpack.c.h.b16 %v5008
        %v5216 = vunpack.c.l.b16 %v5009
        %v5217 = vunpack.c.h.b16 %v5009
        %v5218 = vunpack.c.l.b16 %v5010
        %v5219 = vunpack.c.h.b16 %v5010
        %v5220 = vunpack.c.l.b16 %v5011
        %v5221 = vunpack.c.h.b16 %v5011
        %v5222 = vunpack.c.l.b16 %v5012
        %v5223 = vunpack.c.h.b16 %v5012
        %v5224 = vunpack.c.l.b16 %v5013
        %v5225 = vunpack.c.h.b16 %v5013
        %v5226 = vunpack.c.l.b16 %v5014
        %v5227 = vunpack.c.h.b16 %v5014
        %v5228 = vunpack.c.l.b16 %v5015
        %v5229 = vunpack.c.h.b16 %v5015
        %v5230 = vunpack.c.l.b16 %v5016
        %v5231 = vunpack.c.h.b16 %v5016
        %v5232 = vunpack.c.l.b16 %v5017
        %v5233 = vunpack.c.h.b16 %v5017
        %v5234 = vunpack.c.l.b16 %v5018
        %v5235 = vunpack.c.h.b16 %v5018
        %v5236 = vunpack.c.l.b16 %v5019
        %v5237 = vunpack.c.h.b16 %v5019
        %v5238 = vunpack.c.l.b16 %v5020
        %v5239 = vunpack.c.h.b16 %v5020
        %v5240 = vunpack.c.l.b16 %v5021
        %v5241 = vunpack.c.h.b16 %v5021
        %v5242 = vunpack.c.l.b16 %v5022
        %v5243 = vunpack.c.h.b16 %v5022
        %v5244 = vunpack.c.l.b16 %v5023
        %v5245 = vunpack.c.h.b16 %v5023
        %v5246 = vunpack.c.l.b16 %v5024
        %v5247 = vunpack.c.h.b16 %v5024
        %v5248 = vunpack.c.l.b16 %v5025
        %v5249 = vunpack.c.h.b16 %v5025
        %v5250 = vunpack.c.l.b16 %v5026
        %v5251 = vunpack.c.h.b16 %v5026
        %v5252 = vunpack.c.l.b16 %v5027
        %v5253 = vunpack.c.h.b16 %v5027
        %v5254 = vunpack.c.l.b16 %v5028
        %v5255 = vunpack.c.h.b16 %v5028
        %v5256 = vunpack.c.l.b16 %v5029
        %v5257 = vunpack.c.h.b16 %v5029
        %v5258 = vunpack.c.l.b16 %v5030
        %v5259 = vunpack.c.h.b16 %v5030
        %v5260 = vunpack.c.l.b16 %v5031
        %v5261 = vunpack.c.h.b16 %v5031
        %v5262 = vpack.c.b16 %v5124, %v5118
        %v5263 = vpack.c.b16 %v5125, %v5119
        %v5264 = vpack.c.b16 %v5126, %v5120
        %v5265 = vpack.c.b16 %v5127, %v5121
        %v5266 = vpack.c.b16 %v5128, %v5122
        %v5267 = vpack.c.b16 %v5129, %v5123
        %v5268 = vpack.c.b16 %v5136, %v5130
        %v5269 = vpack.c.b16 %v5137, %v5131
        %v5270 = vpack.c.b16 %v5138, %v5132
        %v5271 = vpack.c.b16 %v5139, %v5133
        %v5272 = vpack.c.b16 %v5140, %v5134
        %v5273 = vpack.c.b16 %v5141, %v5135
        %v5274 = vpack.c.b16 %v5148, %v5142
        %v5275 = vpack.c.b16 %v5149, %v5143
        %v5276 = vpack.c.b16 %v5150, %v5144
        %v5277 = vpack.c.b16 %v5151, %v5145
        %v5278 = vpack.c.b16 %v5152, %v5146
        %v5279 = vpack.c.b16 %v5153, %v5147
        %v5280 = vpack.c.b16 %v5160, %v5154
        %v5281 = vpack.c.b16 %v5161, %v5155
        %v5282 = vpack.c.b16 %v5162, %v5156
        %v5283 = vpack.c.b16 %v5163, %v5157
        %v5284 = vpack.c.b16 %v5164, %v5158
        %v5285 = vpack.c.b16 %v5165, %v5159
        %v5286 = vpack.c.b16 %v5172, %v5166
        %v5287 = vpack.c.b16 %v5173, %v5167
        %v5288 = vpack.c.b16 %v5174, %v5168
        %v5289 = vpack.c.b16 %v5175, %v5169
        %v5290 = vpack.c.b16 %v5176, %v5170
        %v5291 = vpack.c.b16 %v5177, %v5171
        %v5292 = vpack.c.b16 %v5184, %v5178
        %v5293 = vpack.c.b16 %v5185, %v5179
        %v5294 = vpack.c.b16 %v5186, %v5180
        %v5295 = vpack.c.b16 %v5187, %v5181
        %v5296 = vpack.c.b16 %v5188, %v5182
        %v5297 = vpack.c.b16 %v5189, %v5183
        %v5298 = vpack.c.b16 %v5196, %v5190
        %v5299 = vpack.c.b16 %v5197, %v5191
        %v5300 = vpack.c.b16 %v5198, %v5192
        %v5301 = vpack.c.b16 %v5199, %v5193
        %v5302 = vpack.c.b16 %v5200, %v5194
        %v5303 = vpack.c.b16 %v5201, %v5195
        %v5304 = vpack.c.b16 %v5208, %v5202
        %v5305 = vpack.c.b16 %v5209, %v5203
        %v5306 = vpack.c.b16 %v5210, %v5204
        %v5307 = vpack.c.b16 %v5211, %v5205
        %v5308 = vpack.c.b16 %v5212, %v5206
        %v5309 = vpack.c.b16 %v5213, %v5207
        %v5310 = vpack.c.b16 %v5220, %v5214
        %v5311 = vpack.c.b16 %v5221, %v5215
        %v5312 = vpack.c.b16 %v5222, %v5216
        %v5313 = vpack.c.b16 %v5223, %v5217
        %v5314 = vpack.c.b16 %v5224, %v5218
        %v5315 = vpack.c.b16 %v5225, %v5219
        %v5316 = vpack.c.b16 %v5232, %v5226
        %v5317 = vpack.c.b16 %v5233, %v5227
        %v5318 = vpack.c.b16 %v5234, %v5228
        %v5319 = vpack.c.b16 %v5235, %v5229
        %v5320 = vpack.c.b16 %v5236, %v5230
        %v5321 = vpack.c.b16 %v5237, %v5231
        %v5322 = vpack.c.b16 %v5244, %v5238
        %v5323 = vpack.c.b16 %v5245, %v5239
        %v5324 = vpack.c.b16 %v5246, %v5240
        %v5325 = vpack.c.b16 %v5247, %v5241
        %v5326 = vpack.c.b16 %v5248, %v5242
        %v5327 = vpack.c.b16 %v5249, %v5243
        %v5328 = vpack.c.b16 %v5256, %v5250
        %v5329 = vpack.c.b16 %v5257, %v5251
        %v5330 = vpack.c.b16 %v5258, %v5252
        %v5331 = vpack.c.b16 %v5259, %v5253
        %v5332 = vpack.c.b16 %v5260, %v5254
        %v5333 = vpack.c.b16 %v5261, %v5255
        %v5407 = vsel %vm483, %v4957, 0
        %v5410 = vsel %vm483, %v4959, 0
        %5412 = vmatpush.bf16.msra.mxu0 %v5304
        %5413 = vmatpush.bf16.msra.mxu0 %v5298
        %5414 = vmatpush.bf16.msra.mxu0 %v5292
        %5415 = vmatpush.bf16.msra.mxu0 %v5286
        %5416 = vmatpush.bf16.msra.mxu0 %v5280
        %5417 = vmatpush.bf16.msra.mxu0 %v5274
        %5418 = vmatpush.bf16.msra.mxu0 %v5268
        %5419 = vmatpush.bf16.msra.mxu0 %v5262
        %5420 = vmatmul.bf16.gmra.mxu0 %v4956
        %v5421 = vpop.f32.mrf.mxu0
        %v5422 = vadd.f32 %v5034, %v5421
        %v5423 = vpop.f32.mrf.mxu0
        %v5424 = vadd.f32 %v5034, %v5423
        %5425 = vmatmul.bf16.gmra.mxu0 %v4958
        %v5426 = vpop.f32.mrf.mxu0
        %v5427 = vadd.f32 %v5034, %v5426
        %v5428 = vpop.f32.mrf.mxu0
        %v5429 = vadd.f32 %v5034, %v5428
        %5430 = vdwg.mxu0
        %5431 = vmatpush.bf16.msra.mxu0 0
        %5432 = vmatpush.bf16.msra.mxu0 0
        %5433 = vmatpush.bf16.msra.mxu0 0
        %5434 = vmatpush.bf16.msra.mxu0 0
        %5435 = vmatpush.bf16.msra.mxu0 %v5328
        %5436 = vmatpush.bf16.msra.mxu0 %v5322
        %5437 = vmatpush.bf16.msra.mxu0 %v5316
        %5438 = vmatpush.bf16.msra.mxu0 %v5310
        %5439 = vmatmul.bf16.gmra.mxu0 %v5407
        %v5440 = vpop.f32.mrf.mxu0
        %v5441 = vadd.f32 %v5422, %v5440
        %v5442 = vpop.f32.mrf.mxu0
        %v5443 = vadd.f32 %v5424, %v5442
        %5444 = vmatmul.bf16.gmra.mxu0 %v5410
        %v5445 = vpop.f32.mrf.mxu0
        %v5446 = vadd.f32 %v5427, %v5445
        %v5447 = vpop.f32.mrf.mxu0
        %v5448 = vadd.f32 %v5429, %v5447
        %5449 = vdwg.mxu0
        %5450 = vmatpush.bf16.msra.mxu0 %v5305
        %5451 = vmatpush.bf16.msra.mxu0 %v5299
        %5452 = vmatpush.bf16.msra.mxu0 %v5293
        %5453 = vmatpush.bf16.msra.mxu0 %v5287
        %5454 = vmatpush.bf16.msra.mxu0 %v5281
        %5455 = vmatpush.bf16.msra.mxu0 %v5275
        %5456 = vmatpush.bf16.msra.mxu0 %v5269
        %5457 = vmatpush.bf16.msra.mxu0 %v5263
        %5458 = vmatmul.bf16.gmra.mxu0 %v4956
        %v5459 = vpop.f32.mrf.mxu0
        %v5460 = vadd.f32 %v5035, %v5459
        %v5461 = vpop.f32.mrf.mxu0
        %v5462 = vadd.f32 %v5035, %v5461
        %5463 = vmatmul.bf16.gmra.mxu0 %v4958
        %v5464 = vpop.f32.mrf.mxu0
        %v5465 = vadd.f32 %v5035, %v5464
        %v5466 = vpop.f32.mrf.mxu0
        %v5467 = vadd.f32 %v5035, %v5466
        %5468 = vdwg.mxu0
        %5469 = vmatpush.bf16.msra.mxu0 0
        %5470 = vmatpush.bf16.msra.mxu0 0
        %5471 = vmatpush.bf16.msra.mxu0 0
        %5472 = vmatpush.bf16.msra.mxu0 0
        %5473 = vmatpush.bf16.msra.mxu0 %v5329
        %5474 = vmatpush.bf16.msra.mxu0 %v5323
        %5475 = vmatpush.bf16.msra.mxu0 %v5317
        %5476 = vmatpush.bf16.msra.mxu0 %v5311
        %5477 = vmatmul.bf16.gmra.mxu0 %v5407
        %v5478 = vpop.f32.mrf.mxu0
        %v5479 = vadd.f32 %v5460, %v5478
        %v5480 = vpop.f32.mrf.mxu0
        %v5481 = vadd.f32 %v5462, %v5480
        %5482 = vmatmul.bf16.gmra.mxu0 %v5410
        %v5483 = vpop.f32.mrf.mxu0
        %v5484 = vadd.f32 %v5465, %v5483
        %v5485 = vpop.f32.mrf.mxu0
        %v5486 = vadd.f32 %v5467, %v5485
        %5487 = vdwg.mxu0
        %5488 = vmatpush.bf16.msra.mxu0 %v5306
        %5489 = vmatpush.bf16.msra.mxu0 %v5300
        %5490 = vmatpush.bf16.msra.mxu0 %v5294
        %5491 = vmatpush.bf16.msra.mxu0 %v5288
        %5492 = vmatpush.bf16.msra.mxu0 %v5282
        %5493 = vmatpush.bf16.msra.mxu0 %v5276
        %5494 = vmatpush.bf16.msra.mxu0 %v5270
        %5495 = vmatpush.bf16.msra.mxu0 %v5264
        %5496 = vmatmul.bf16.gmra.mxu0 %v4956
        %v5497 = vpop.f32.mrf.mxu0
        %v5498 = vadd.f32 %v5036, %v5497
        %v5499 = vpop.f32.mrf.mxu0
        %v5500 = vadd.f32 %v5036, %v5499
        %5501 = vmatmul.bf16.gmra.mxu0 %v4958
        %v5502 = vpop.f32.mrf.mxu0
        %v5503 = vadd.f32 %v5036, %v5502
        %v5504 = vpop.f32.mrf.mxu0
        %v5505 = vadd.f32 %v5036, %v5504
        %5506 = vdwg.mxu0
        %5507 = vmatpush.bf16.msra.mxu0 0
        %5508 = vmatpush.bf16.msra.mxu0 0
        %5509 = vmatpush.bf16.msra.mxu0 0
        %5510 = vmatpush.bf16.msra.mxu0 0
        %5511 = vmatpush.bf16.msra.mxu0 %v5330
        %5512 = vmatpush.bf16.msra.mxu0 %v5324
        %5513 = vmatpush.bf16.msra.mxu0 %v5318
        %5514 = vmatpush.bf16.msra.mxu0 %v5312
        %5515 = vmatmul.bf16.gmra.mxu0 %v5407
        %v5516 = vpop.f32.mrf.mxu0
        %v5517 = vadd.f32 %v5498, %v5516
        %v5518 = vpop.f32.mrf.mxu0
        %v5519 = vadd.f32 %v5500, %v5518
        %5520 = vmatmul.bf16.gmra.mxu0 %v5410
        %v5521 = vpop.f32.mrf.mxu0
        %v5522 = vadd.f32 %v5503, %v5521
        %v5523 = vpop.f32.mrf.mxu0
        %v5524 = vadd.f32 %v5505, %v5523
        %5525 = vdwg.mxu0
        %5526 = vmatpush.bf16.msra.mxu0 %v5307
        %5527 = vmatpush.bf16.msra.mxu0 %v5301
        %5528 = vmatpush.bf16.msra.mxu0 %v5295
        %5529 = vmatpush.bf16.msra.mxu0 %v5289
        %5530 = vmatpush.bf16.msra.mxu0 %v5283
        %5531 = vmatpush.bf16.msra.mxu0 %v5277
        %5532 = vmatpush.bf16.msra.mxu0 %v5271
        %5533 = vmatpush.bf16.msra.mxu0 %v5265
        %5534 = vmatmul.bf16.gmra.mxu0 %v4956
        %v5535 = vpop.f32.mrf.mxu0
        %v5536 = vadd.f32 %v5037, %v5535
        %v5537 = vpop.f32.mrf.mxu0
        %v5538 = vadd.f32 %v5037, %v5537
        %5539 = vmatmul.bf16.gmra.mxu0 %v4958
        %v5540 = vpop.f32.mrf.mxu0
        %v5541 = vadd.f32 %v5037, %v5540
        %v5542 = vpop.f32.mrf.mxu0
        %v5543 = vadd.f32 %v5037, %v5542
        %5544 = vdwg.mxu0
        %5545 = vmatpush.bf16.msra.mxu0 0
        %5546 = vmatpush.bf16.msra.mxu0 0
        %5547 = vmatpush.bf16.msra.mxu0 0
        %5548 = vmatpush.bf16.msra.mxu0 0
        %5549 = vmatpush.bf16.msra.mxu0 %v5331
        %5550 = vmatpush.bf16.msra.mxu0 %v5325
        %5551 = vmatpush.bf16.msra.mxu0 %v5319
        %5552 = vmatpush.bf16.msra.mxu0 %v5313
        %5553 = vmatmul.bf16.gmra.mxu0 %v5407
        %v5554 = vpop.f32.mrf.mxu0
        %v5555 = vadd.f32 %v5536, %v5554
        %v5556 = vpop.f32.mrf.mxu0
        %v5557 = vadd.f32 %v5538, %v5556
        %5558 = vmatmul.bf16.gmra.mxu0 %v5410
        %v5559 = vpop.f32.mrf.mxu0
        %v5560 = vadd.f32 %v5541, %v5559
        %v5561 = vpop.f32.mrf.mxu0
        %v5562 = vadd.f32 %v5543, %v5561
        %5563 = vdwg.mxu0
        %5564 = vmatpush.bf16.msra.mxu0 %v5308
        %5565 = vmatpush.bf16.msra.mxu0 %v5302
        %5566 = vmatpush.bf16.msra.mxu0 %v5296
        %5567 = vmatpush.bf16.msra.mxu0 %v5290
        %5568 = vmatpush.bf16.msra.mxu0 %v5284
        %5569 = vmatpush.bf16.msra.mxu0 %v5278
        %5570 = vmatpush.bf16.msra.mxu0 %v5272
        %5571 = vmatpush.bf16.msra.mxu0 %v5266
        %5572 = vmatmul.bf16.gmra.mxu0 %v4956
        %v5573 = vpop.f32.mrf.mxu0
        %v5574 = vadd.f32 %v5038, %v5573
        %v5575 = vpop.f32.mrf.mxu0
        %v5576 = vadd.f32 %v5038, %v5575
        %5577 = vmatmul.bf16.gmra.mxu0 %v4958
        %v5578 = vpop.f32.mrf.mxu0
        %v5579 = vadd.f32 %v5038, %v5578
        %v5580 = vpop.f32.mrf.mxu0
        %v5581 = vadd.f32 %v5038, %v5580
        %5582 = vdwg.mxu0
        %5583 = vmatpush.bf16.msra.mxu0 0
        %5584 = vmatpush.bf16.msra.mxu0 0
        %5585 = vmatpush.bf16.msra.mxu0 0
        %5586 = vmatpush.bf16.msra.mxu0 0
        %5587 = vmatpush.bf16.msra.mxu0 %v5332
        %5588 = vmatpush.bf16.msra.mxu0 %v5326
        %5589 = vmatpush.bf16.msra.mxu0 %v5320
        %5590 = vmatpush.bf16.msra.mxu0 %v5314
        %5591 = vmatmul.bf16.gmra.mxu0 %v5407
        %v5592 = vpop.f32.mrf.mxu0
        %v5593 = vadd.f32 %v5574, %v5592
        %v5594 = vpop.f32.mrf.mxu0
        %v5595 = vadd.f32 %v5576, %v5594
        %5596 = vmatmul.bf16.gmra.mxu0 %v5410
        %v5597 = vpop.f32.mrf.mxu0
        %v5598 = vadd.f32 %v5579, %v5597
        %v5599 = vpop.f32.mrf.mxu0
        %v5600 = vadd.f32 %v5581, %v5599
        %5601 = vdwg.mxu0
        %5602 = vmatpush.bf16.msra.mxu0 %v5309
        %5603 = vmatpush.bf16.msra.mxu0 %v5303
        %5604 = vmatpush.bf16.msra.mxu0 %v5297
        %5605 = vmatpush.bf16.msra.mxu0 %v5291
        %5606 = vmatpush.bf16.msra.mxu0 %v5285
        %5607 = vmatpush.bf16.msra.mxu0 %v5279
        %5608 = vmatpush.bf16.msra.mxu0 %v5273
        %5609 = vmatpush.bf16.msra.mxu0 %v5267
        %5610 = vmatmul.bf16.gmra.mxu0 %v4956
        %v5611 = vpop.f32.mrf.mxu0
        %v5612 = vadd.f32 %v5039, %v5611
        %v5613 = vpop.f32.mrf.mxu0
        %v5614 = vadd.f32 %v5039, %v5613
        %5615 = vmatmul.bf16.gmra.mxu0 %v4958
        %v5616 = vpop.f32.mrf.mxu0
        %v5617 = vadd.f32 %v5039, %v5616
        %v5618 = vpop.f32.mrf.mxu0
        %v5619 = vadd.f32 %v5039, %v5618
        %5620 = vdwg.mxu0
        %5621 = vmatpush.bf16.msra.mxu0 0
        %5622 = vmatpush.bf16.msra.mxu0 0
        %5623 = vmatpush.bf16.msra.mxu0 0
        %5624 = vmatpush.bf16.msra.mxu0 0
        %5625 = vmatpush.bf16.msra.mxu0 %v5333
        %5626 = vmatpush.bf16.msra.mxu0 %v5327
        %5627 = vmatpush.bf16.msra.mxu0 %v5321
        %5628 = vmatpush.bf16.msra.mxu0 %v5315
        %5629 = vmatmul.bf16.gmra.mxu0 %v5407
        %v5630 = vpop.f32.mrf.mxu0
        %v5631 = vadd.f32 %v5612, %v5630
        %v5632 = vpop.f32.mrf.mxu0
        %v5633 = vadd.f32 %v5614, %v5632
        %5634 = vmatmul.bf16.gmra.mxu0 %v5410
        %v5635 = vpop.f32.mrf.mxu0
        %v5636 = vadd.f32 %v5617, %v5635
        %v5637 = vpop.f32.mrf.mxu0
        %v5638 = vadd.f32 %v5619, %v5637
        %5639 = vdwg.mxu0
        %v5640 = vmax.f32 %v5441, 0.0
        %v5641 = vmax.f32 %v5479, 0.0
        %v5642 = vmax.f32 %v5517, 0.0
        %v5643 = vmax.f32 %v5555, 0.0
        %v5644 = vmax.f32 %v5593, 0.0
        %v5645 = vmax.f32 %v5631, 0.0
        %v5646 = vmax.f32 %v5443, 0.0
        %v5647 = vmax.f32 %v5481, 0.0
        %v5648 = vmax.f32 %v5519, 0.0
        %v5649 = vmax.f32 %v5557, 0.0
        %v5650 = vmax.f32 %v5595, 0.0
        %v5651 = vmax.f32 %v5633, 0.0
        %v5652 = vmax.f32 %v5446, 0.0
        %v5653 = vmax.f32 %v5484, 0.0
        %v5654 = vmax.f32 %v5522, 0.0
        %v5655 = vmax.f32 %v5560, 0.0
        %v5656 = vmax.f32 %v5598, 0.0
        %v5657 = vmax.f32 %v5636, 0.0
        %v5658 = vmax.f32 %v5448, 0.0
        %v5659 = vmax.f32 %v5486, 0.0
        %v5660 = vmax.f32 %v5524, 0.0
        %v5661 = vmax.f32 %v5562, 0.0
        %v5662 = vmax.f32 %v5600, 0.0
        %v5663 = vmax.f32 %v5638, 0.0
        %v5664 = vpack.c.bf16 %v5646, %v5640
        %v5665 = vpack.c.bf16 %v5647, %v5641
        %v5666 = vpack.c.bf16 %v5648, %v5642
        %v5667 = vpack.c.bf16 %v5649, %v5643
        %v5668 = vpack.c.bf16 %v5650, %v5644
        %v5669 = vpack.c.bf16 %v5651, %v5645
        %v5670 = vpack.c.bf16 %v5658, %v5652
        %v5671 = vpack.c.bf16 %v5659, %v5653
        %v5672 = vpack.c.bf16 %v5660, %v5654
        %v5673 = vpack.c.bf16 %v5661, %v5655
        %v5674 = vpack.c.bf16 %v5662, %v5656
        %v5675 = vpack.c.bf16 %v5663, %v5657
        %v5676 = vld [vmem:[%s12] sm:$0xff]
        %v5677 = vld [vmem:[%s12 + $0x8] sm:$0xff]
        %v5678 = vld [vmem:[%s12 + $0x10] sm:$0xff]
        %v5679 = vld [vmem:[%s12 + $0x18] sm:$0xff]
        %v5680 = vld [vmem:[%s12 + $0x20] sm:$0xff]
        %v5681 = vld [vmem:[%s12 + $0x28] sm:$0xff]
        %v5682 = vld [vmem:[%s12 + $0x30] sm:$0xff]
        %v5683 = vld [vmem:[%s12 + $0x38] sm:$0xff]
        %v5684 = vld [vmem:[%s12 + $0x40] sm:$0xff]
        %v5685 = vld [vmem:[%s12 + $0x48] sm:$0xff]
        %v5686 = vld [vmem:[%s12 + $0x50] sm:$0xff]
        %v5687 = vld [vmem:[%s12 + $0x58] sm:$0xff]
        %v5688 = vld [vmem:[%s12 + $0x60] sm:$0xff]
        %v5689 = vld [vmem:[%s12 + $0x68] sm:$0xff]
        %v5690 = vld [vmem:[%s12 + $0x70] sm:$0xff]
        %v5691 = vld [vmem:[%s12 + $0x78] sm:$0xff]
        %v5692 = vld [vmem:[%s12 + $0x80] sm:$0xff]
        %v5693 = vld [vmem:[%s12 + $0x88] sm:$0xff]
        %v5694 = vld [vmem:[%s12 + $0x90] sm:$0xff]
        %v5695 = vld [vmem:[%s12 + $0x98] sm:$0xff]
        %v5696 = vld [vmem:[%s12 + $0xa0] sm:$0xff]
        %v5697 = vld [vmem:[%s12 + $0xa8] sm:$0xff]
        %v5698 = vld [vmem:[%s12 + $0xb0] sm:$0xff]
        %v5699 = vld [vmem:[%s12 + $0xb8] sm:$0xff]
        %v5700 = vld [vmem:[%s12 + $0xc0] sm:$0xff]
        %v5701 = vld [vmem:[%s12 + $0xc8] sm:$0xff]
        %v5702 = vld [vmem:[%s12 + $0xd0] sm:$0xff]
        %v5703 = vld [vmem:[%s12 + $0xd8] sm:$0xff]
        %v5704 = vld [vmem:[%s12 + $0xe0] sm:$0xff]
        %v5705 = vld [vmem:[%s12 + $0xe8] sm:$0xff]
        %v5706 = vld [vmem:[%s12 + $0xf0] sm:$0xff]
        %v5707 = vld [vmem:[%s12 + $0xf8] sm:$0xff]
        %v5708 = vld [vmem:[%s12 + $0x100] sm:$0xff]
        %v5709 = vld [vmem:[%s12 + $0x108] sm:$0xff]
        %v5710 = vld [vmem:[%s12 + $0x110] sm:$0xff]
        %v5711 = vld [vmem:[%s12 + $0x118] sm:$0xff]
        %v5712 = vld [vmem:[%s12 + $0x120] sm:$0xff]
        %v5713 = vld [vmem:[%s12 + $0x128] sm:$0xff]
        %v5714 = vld [vmem:[%s12 + $0x130] sm:$0xff]
        %v5715 = vld [vmem:[%s12 + $0x138] sm:$0xff]
        %v5716 = vld [vmem:[%s12 + $0x140] sm:$0xff]
        %v5717 = vld [vmem:[%s12 + $0x148] sm:$0xff]
        %v5718 = vld [vmem:[%s12 + $0x150] sm:$0xff]
        %v5719 = vld [vmem:[%s12 + $0x158] sm:$0xff]
        %v5720 = vld [vmem:[%s12 + $0x160] sm:$0xff]
        %v5721 = vld [vmem:[%s12 + $0x168] sm:$0xff]
        %v5722 = vld [vmem:[%s12 + $0x170] sm:$0xff]
        %v5723 = vld [vmem:[%s12 + $0x178] sm:$0xff]
        %v5724 = vld [vmem:[%s12 + $0x180] sm:$0xff]
        %v5725 = vld [vmem:[%s12 + $0x188] sm:$0xff]
        %v5726 = vld [vmem:[%s12 + $0x190] sm:$0xff]
        %v5727 = vld [vmem:[%s12 + $0x198] sm:$0xff]
        %v5728 = vld [vmem:[%s12 + $0x1a0] sm:$0xff]
        %v5729 = vld [vmem:[%s12 + $0x1a8] sm:$0xff]
        %v5730 = vld [vmem:[%s12 + $0x1b0] sm:$0xff]
        %v5731 = vld [vmem:[%s12 + $0x1b8] sm:$0xff]
        %v5732 = vld [vmem:[%s12 + $0x1c0] sm:$0xff]
        %v5733 = vld [vmem:[%s12 + $0x1c8] sm:$0xff]
        %v5734 = vld [vmem:[%s12 + $0x1d0] sm:$0xff]
        %v5735 = vld [vmem:[%s12 + $0x1d8] sm:$0xff]
        %v5736 = vld [vmem:[%s12 + $0x1e0] sm:$0xff]
        %v5737 = vld [vmem:[%s12 + $0x1e8] sm:$0xff]
        %v5738 = vld [vmem:[%s12 + $0x1f0] sm:$0xff]
        %v5739 = vld [vmem:[%s12 + $0x1f8] sm:$0xff]
        %v5740 = vld [vmem:[%s12 + $0x200] sm:$0xff]
        %v5741 = vld [vmem:[%s12 + $0x208] sm:$0xff]
        %v5742 = vld [vmem:[%s12 + $0x210] sm:$0xff]
        %v5743 = vld [vmem:[%s12 + $0x218] sm:$0xff]
        %v5744 = vld [vmem:[%s12 + $0x220] sm:$0xff]
        %v5745 = vld [vmem:[%s12 + $0x228] sm:$0xff]
        %v5746 = vld [vmem:[%s12 + $0x230] sm:$0xff]
        %v5747 = vld [vmem:[%s12 + $0x238] sm:$0xff]
        %v5748 = vld [vmem:[%s12 + $0x240] sm:$0xff]
        %v5749 = vld [vmem:[%s12 + $0x248] sm:$0xff]
        %v5750 = vld [vmem:[%s12 + $0x250] sm:$0xff]
        %v5751 = vld [vmem:[%s12 + $0x258] sm:$0xff]
        %v5752 = vld [vmem:[%s12 + $0x260] sm:$0xff]
        %v5753 = vld [vmem:[%s12 + $0x268] sm:$0xff]
        %v5754 = vld [vmem:[%s12 + $0x270] sm:$0xff]
        %v5755 = vld [vmem:[%s12 + $0x278] sm:$0xff]
        %v5756 = vld [vmem:[%s12 + $0x280] sm:$0xff]
        %v5757 = vld [vmem:[%s12 + $0x288] sm:$0xff]
        %v5758 = vld [vmem:[%s12 + $0x290] sm:$0xff]
        %v5759 = vld [vmem:[%s12 + $0x298] sm:$0xff]
        %v5760 = vld [vmem:[%s12 + $0x2a0] sm:$0xff]
        %v5761 = vld [vmem:[%s12 + $0x2a8] sm:$0xff]
        %v5762 = vld [vmem:[%s12 + $0x2b0] sm:$0xff]
        %v5763 = vld [vmem:[%s12 + $0x2b8] sm:$0xff]
        %v5764 = vld [vmem:[%s12 + $0x2c0] sm:$0xff]
        %v5765 = vld [vmem:[%s12 + $0x2c8] sm:$0xff]
        %v5766 = vld [vmem:[%s12 + $0x2d0] sm:$0xff]
        %v5767 = vld [vmem:[%s12 + $0x2d8] sm:$0xff]
        %v5768 = vld [vmem:[%s12 + $0x2e0] sm:$0xff]
        %v5769 = vld [vmem:[%s12 + $0x2e8] sm:$0xff]
        %v5770 = vld [vmem:[%s12 + $0x2f0] sm:$0xff]
        %v5771 = vld [vmem:[%s12 + $0x2f8] sm:$0xff]
        %v5772 = vld [vmem:[%s13] sm:$0x3]
        %v5774 = vperm.slane %v5772, 0
        %v5775 = vperm.slane %v5772, 1
        %v5874 = vunpack.c.l.b16 %v5676
        %v5875 = vunpack.c.h.b16 %v5676
        %v5876 = vunpack.c.l.b16 %v5677
        %v5877 = vunpack.c.h.b16 %v5677
        %v5878 = vunpack.c.l.b16 %v5678
        %v5879 = vunpack.c.h.b16 %v5678
        %v5880 = vunpack.c.l.b16 %v5679
        %v5881 = vunpack.c.h.b16 %v5679
        %v5882 = vunpack.c.l.b16 %v5680
        %v5883 = vunpack.c.h.b16 %v5680
        %v5884 = vunpack.c.l.b16 %v5681
        %v5885 = vunpack.c.h.b16 %v5681
        %v5886 = vunpack.c.l.b16 %v5682
        %v5887 = vunpack.c.h.b16 %v5682
        %v5888 = vunpack.c.l.b16 %v5683
        %v5889 = vunpack.c.h.b16 %v5683
        %v5890 = vunpack.c.l.b16 %v5684
        %v5891 = vunpack.c.h.b16 %v5684
        %v5892 = vunpack.c.l.b16 %v5685
        %v5893 = vunpack.c.h.b16 %v5685
        %v5894 = vunpack.c.l.b16 %v5686
        %v5895 = vunpack.c.h.b16 %v5686
        %v5896 = vunpack.c.l.b16 %v5687
        %v5897 = vunpack.c.h.b16 %v5687
        %v5898 = vunpack.c.l.b16 %v5688
        %v5899 = vunpack.c.h.b16 %v5688
        %v5900 = vunpack.c.l.b16 %v5689
        %v5901 = vunpack.c.h.b16 %v5689
        %v5902 = vunpack.c.l.b16 %v5690
        %v5903 = vunpack.c.h.b16 %v5690
        %v5904 = vunpack.c.l.b16 %v5691
        %v5905 = vunpack.c.h.b16 %v5691
        %v5906 = vunpack.c.l.b16 %v5692
        %v5907 = vunpack.c.h.b16 %v5692
        %v5908 = vunpack.c.l.b16 %v5693
        %v5909 = vunpack.c.h.b16 %v5693
        %v5910 = vunpack.c.l.b16 %v5694
        %v5911 = vunpack.c.h.b16 %v5694
        %v5912 = vunpack.c.l.b16 %v5695
        %v5913 = vunpack.c.h.b16 %v5695
        %v5914 = vunpack.c.l.b16 %v5696
        %v5915 = vunpack.c.h.b16 %v5696
        %v5916 = vunpack.c.l.b16 %v5697
        %v5917 = vunpack.c.h.b16 %v5697
        %v5918 = vunpack.c.l.b16 %v5698
        %v5919 = vunpack.c.h.b16 %v5698
        %v5920 = vunpack.c.l.b16 %v5699
        %v5921 = vunpack.c.h.b16 %v5699
        %v5922 = vunpack.c.l.b16 %v5700
        %v5923 = vunpack.c.h.b16 %v5700
        %v5924 = vunpack.c.l.b16 %v5701
        %v5925 = vunpack.c.h.b16 %v5701
        %v5926 = vunpack.c.l.b16 %v5702
        %v5927 = vunpack.c.h.b16 %v5702
        %v5928 = vunpack.c.l.b16 %v5703
        %v5929 = vunpack.c.h.b16 %v5703
        %v5930 = vunpack.c.l.b16 %v5704
        %v5931 = vunpack.c.h.b16 %v5704
        %v5932 = vunpack.c.l.b16 %v5705
        %v5933 = vunpack.c.h.b16 %v5705
        %v5934 = vunpack.c.l.b16 %v5706
        %v5935 = vunpack.c.h.b16 %v5706
        %v5936 = vunpack.c.l.b16 %v5707
        %v5937 = vunpack.c.h.b16 %v5707
        %v5938 = vunpack.c.l.b16 %v5708
        %v5939 = vunpack.c.h.b16 %v5708
        %v5940 = vunpack.c.l.b16 %v5709
        %v5941 = vunpack.c.h.b16 %v5709
        %v5942 = vunpack.c.l.b16 %v5710
        %v5943 = vunpack.c.h.b16 %v5710
        %v5944 = vunpack.c.l.b16 %v5711
        %v5945 = vunpack.c.h.b16 %v5711
        %v5946 = vunpack.c.l.b16 %v5712
        %v5947 = vunpack.c.h.b16 %v5712
        %v5948 = vunpack.c.l.b16 %v5713
        %v5949 = vunpack.c.h.b16 %v5713
        %v5950 = vunpack.c.l.b16 %v5714
        %v5951 = vunpack.c.h.b16 %v5714
        %v5952 = vunpack.c.l.b16 %v5715
        %v5953 = vunpack.c.h.b16 %v5715
        %v5954 = vunpack.c.l.b16 %v5716
        %v5955 = vunpack.c.h.b16 %v5716
        %v5956 = vunpack.c.l.b16 %v5717
        %v5957 = vunpack.c.h.b16 %v5717
        %v5958 = vunpack.c.l.b16 %v5718
        %v5959 = vunpack.c.h.b16 %v5718
        %v5960 = vunpack.c.l.b16 %v5719
        %v5961 = vunpack.c.h.b16 %v5719
        %v5962 = vunpack.c.l.b16 %v5720
        %v5963 = vunpack.c.h.b16 %v5720
        %v5964 = vunpack.c.l.b16 %v5721
        %v5965 = vunpack.c.h.b16 %v5721
        %v5966 = vunpack.c.l.b16 %v5722
        %v5967 = vunpack.c.h.b16 %v5722
        %v5968 = vunpack.c.l.b16 %v5723
        %v5969 = vunpack.c.h.b16 %v5723
        %v5970 = vunpack.c.l.b16 %v5724
        %v5971 = vunpack.c.h.b16 %v5724
        %v5972 = vunpack.c.l.b16 %v5725
        %v5973 = vunpack.c.h.b16 %v5725
        %v5974 = vunpack.c.l.b16 %v5726
        %v5975 = vunpack.c.h.b16 %v5726
        %v5976 = vunpack.c.l.b16 %v5727
        %v5977 = vunpack.c.h.b16 %v5727
        %v5978 = vunpack.c.l.b16 %v5728
        %v5979 = vunpack.c.h.b16 %v5728
        %v5980 = vunpack.c.l.b16 %v5729
        %v5981 = vunpack.c.h.b16 %v5729
        %v5982 = vunpack.c.l.b16 %v5730
        %v5983 = vunpack.c.h.b16 %v5730
        %v5984 = vunpack.c.l.b16 %v5731
        %v5985 = vunpack.c.h.b16 %v5731
        %v5986 = vunpack.c.l.b16 %v5732
        %v5987 = vunpack.c.h.b16 %v5732
        %v5988 = vunpack.c.l.b16 %v5733
        %v5989 = vunpack.c.h.b16 %v5733
        %v5990 = vunpack.c.l.b16 %v5734
        %v5991 = vunpack.c.h.b16 %v5734
        %v5992 = vunpack.c.l.b16 %v5735
        %v5993 = vunpack.c.h.b16 %v5735
        %v5994 = vunpack.c.l.b16 %v5736
        %v5995 = vunpack.c.h.b16 %v5736
        %v5996 = vunpack.c.l.b16 %v5737
        %v5997 = vunpack.c.h.b16 %v5737
        %v5998 = vunpack.c.l.b16 %v5738
        %v5999 = vunpack.c.h.b16 %v5738
        %v6000 = vunpack.c.l.b16 %v5739
        %v6001 = vunpack.c.h.b16 %v5739
        %v6002 = vunpack.c.l.b16 %v5740
        %v6003 = vunpack.c.h.b16 %v5740
        %v6004 = vunpack.c.l.b16 %v5741
        %v6005 = vunpack.c.h.b16 %v5741
        %v6006 = vunpack.c.l.b16 %v5742
        %v6007 = vunpack.c.h.b16 %v5742
        %v6008 = vunpack.c.l.b16 %v5743
        %v6009 = vunpack.c.h.b16 %v5743
        %v6010 = vunpack.c.l.b16 %v5744
        %v6011 = vunpack.c.h.b16 %v5744
        %v6012 = vunpack.c.l.b16 %v5745
        %v6013 = vunpack.c.h.b16 %v5745
        %v6014 = vunpack.c.l.b16 %v5746
        %v6015 = vunpack.c.h.b16 %v5746
        %v6016 = vunpack.c.l.b16 %v5747
        %v6017 = vunpack.c.h.b16 %v5747
        %v6018 = vunpack.c.l.b16 %v5748
        %v6019 = vunpack.c.h.b16 %v5748
        %v6020 = vunpack.c.l.b16 %v5749
        %v6021 = vunpack.c.h.b16 %v5749
        %v6022 = vunpack.c.l.b16 %v5750
        %v6023 = vunpack.c.h.b16 %v5750
        %v6024 = vunpack.c.l.b16 %v5751
        %v6025 = vunpack.c.h.b16 %v5751
        %v6026 = vunpack.c.l.b16 %v5752
        %v6027 = vunpack.c.h.b16 %v5752
        %v6028 = vunpack.c.l.b16 %v5753
        %v6029 = vunpack.c.h.b16 %v5753
        %v6030 = vunpack.c.l.b16 %v5754
        %v6031 = vunpack.c.h.b16 %v5754
        %v6032 = vunpack.c.l.b16 %v5755
        %v6033 = vunpack.c.h.b16 %v5755
        %v6034 = vunpack.c.l.b16 %v5756
        %v6035 = vunpack.c.h.b16 %v5756
        %v6036 = vunpack.c.l.b16 %v5757
        %v6037 = vunpack.c.h.b16 %v5757
        %v6038 = vunpack.c.l.b16 %v5758
        %v6039 = vunpack.c.h.b16 %v5758
        %v6040 = vunpack.c.l.b16 %v5759
        %v6041 = vunpack.c.h.b16 %v5759
        %v6042 = vunpack.c.l.b16 %v5760
        %v6043 = vunpack.c.h.b16 %v5760
        %v6044 = vunpack.c.l.b16 %v5761
        %v6045 = vunpack.c.h.b16 %v5761
        %v6046 = vunpack.c.l.b16 %v5762
        %v6047 = vunpack.c.h.b16 %v5762
        %v6048 = vunpack.c.l.b16 %v5763
        %v6049 = vunpack.c.h.b16 %v5763
        %v6050 = vunpack.c.l.b16 %v5764
        %v6051 = vunpack.c.h.b16 %v5764
        %v6052 = vunpack.c.l.b16 %v5765
        %v6053 = vunpack.c.h.b16 %v5765
        %v6054 = vunpack.c.l.b16 %v5766
        %v6055 = vunpack.c.h.b16 %v5766
        %v6056 = vunpack.c.l.b16 %v5767
        %v6057 = vunpack.c.h.b16 %v5767
        %v6058 = vunpack.c.l.b16 %v5768
        %v6059 = vunpack.c.h.b16 %v5768
        %v6060 = vunpack.c.l.b16 %v5769
        %v6061 = vunpack.c.h.b16 %v5769
        %v6062 = vunpack.c.l.b16 %v5770
        %v6063 = vunpack.c.h.b16 %v5770
        %v6064 = vunpack.c.l.b16 %v5771
        %v6065 = vunpack.c.h.b16 %v5771
        %v6066 = vpack.c.b16 %v5876, %v5874
        %v6067 = vpack.c.b16 %v5877, %v5875
        %v6068 = vpack.c.b16 %v5880, %v5878
        %v6069 = vpack.c.b16 %v5881, %v5879
        %v6070 = vpack.c.b16 %v5884, %v5882
        %v6071 = vpack.c.b16 %v5885, %v5883
        %v6072 = vpack.c.b16 %v5888, %v5886
        %v6073 = vpack.c.b16 %v5889, %v5887
        %v6074 = vpack.c.b16 %v5892, %v5890
        %v6075 = vpack.c.b16 %v5893, %v5891
        %v6076 = vpack.c.b16 %v5896, %v5894
        %v6077 = vpack.c.b16 %v5897, %v5895
        %v6078 = vpack.c.b16 %v5900, %v5898
        %v6079 = vpack.c.b16 %v5901, %v5899
        %v6080 = vpack.c.b16 %v5904, %v5902
        %v6081 = vpack.c.b16 %v5905, %v5903
        %v6082 = vpack.c.b16 %v5908, %v5906
        %v6083 = vpack.c.b16 %v5909, %v5907
        %v6084 = vpack.c.b16 %v5912, %v5910
        %v6085 = vpack.c.b16 %v5913, %v5911
        %v6086 = vpack.c.b16 %v5916, %v5914
        %v6087 = vpack.c.b16 %v5917, %v5915
        %v6088 = vpack.c.b16 %v5920, %v5918
        %v6089 = vpack.c.b16 %v5921, %v5919
        %v6090 = vpack.c.b16 %v5924, %v5922
        %v6091 = vpack.c.b16 %v5925, %v5923
        %v6092 = vpack.c.b16 %v5928, %v5926
        %v6093 = vpack.c.b16 %v5929, %v5927
        %v6094 = vpack.c.b16 %v5932, %v5930
        %v6095 = vpack.c.b16 %v5933, %v5931
        %v6096 = vpack.c.b16 %v5936, %v5934
        %v6097 = vpack.c.b16 %v5937, %v5935
        %v6098 = vpack.c.b16 %v5940, %v5938
        %v6099 = vpack.c.b16 %v5941, %v5939
        %v6100 = vpack.c.b16 %v5944, %v5942
        %v6101 = vpack.c.b16 %v5945, %v5943
        %v6102 = vpack.c.b16 %v5948, %v5946
        %v6103 = vpack.c.b16 %v5949, %v5947
        %v6104 = vpack.c.b16 %v5952, %v5950
        %v6105 = vpack.c.b16 %v5953, %v5951
        %v6106 = vpack.c.b16 %v5956, %v5954
        %v6107 = vpack.c.b16 %v5957, %v5955
        %v6108 = vpack.c.b16 %v5960, %v5958
        %v6109 = vpack.c.b16 %v5961, %v5959
        %v6110 = vpack.c.b16 %v5964, %v5962
        %v6111 = vpack.c.b16 %v5965, %v5963
        %v6112 = vpack.c.b16 %v5968, %v5966
        %v6113 = vpack.c.b16 %v5969, %v5967
        %v6114 = vpack.c.b16 %v5972, %v5970
        %v6115 = vpack.c.b16 %v5973, %v5971
        %v6116 = vpack.c.b16 %v5976, %v5974
        %v6117 = vpack.c.b16 %v5977, %v5975
        %v6118 = vpack.c.b16 %v5980, %v5978
        %v6119 = vpack.c.b16 %v5981, %v5979
        %v6120 = vpack.c.b16 %v5984, %v5982
        %v6121 = vpack.c.b16 %v5985, %v5983
        %v6122 = vpack.c.b16 %v5988, %v5986
        %v6123 = vpack.c.b16 %v5989, %v5987
        %v6124 = vpack.c.b16 %v5992, %v5990
        %v6125 = vpack.c.b16 %v5993, %v5991
        %v6126 = vpack.c.b16 %v5996, %v5994
        %v6127 = vpack.c.b16 %v5997, %v5995
        %v6128 = vpack.c.b16 %v6000, %v5998
        %v6129 = vpack.c.b16 %v6001, %v5999
        %v6130 = vpack.c.b16 %v6004, %v6002
        %v6131 = vpack.c.b16 %v6005, %v6003
        %v6132 = vpack.c.b16 %v6008, %v6006
        %v6133 = vpack.c.b16 %v6009, %v6007
        %v6134 = vpack.c.b16 %v6012, %v6010
        %v6135 = vpack.c.b16 %v6013, %v6011
        %v6136 = vpack.c.b16 %v6016, %v6014
        %v6137 = vpack.c.b16 %v6017, %v6015
        %v6138 = vpack.c.b16 %v6020, %v6018
        %v6139 = vpack.c.b16 %v6021, %v6019
        %v6140 = vpack.c.b16 %v6024, %v6022
        %v6141 = vpack.c.b16 %v6025, %v6023
        %v6142 = vpack.c.b16 %v6028, %v6026
        %v6143 = vpack.c.b16 %v6029, %v6027
        %v6144 = vpack.c.b16 %v6032, %v6030
        %v6145 = vpack.c.b16 %v6033, %v6031
        %v6146 = vpack.c.b16 %v6036, %v6034
        %v6147 = vpack.c.b16 %v6037, %v6035
        %v6148 = vpack.c.b16 %v6040, %v6038
        %v6149 = vpack.c.b16 %v6041, %v6039
        %v6150 = vpack.c.b16 %v6044, %v6042
        %v6151 = vpack.c.b16 %v6045, %v6043
        %v6152 = vpack.c.b16 %v6048, %v6046
        %v6153 = vpack.c.b16 %v6049, %v6047
        %v6154 = vpack.c.b16 %v6052, %v6050
        %v6155 = vpack.c.b16 %v6053, %v6051
        %v6156 = vpack.c.b16 %v6056, %v6054
        %v6157 = vpack.c.b16 %v6057, %v6055
        %v6158 = vpack.c.b16 %v6060, %v6058
        %v6159 = vpack.c.b16 %v6061, %v6059
        %v6160 = vpack.c.b16 %v6064, %v6062
        %v6161 = vpack.c.b16 %v6065, %v6063
        %6258 = vmatpush.bf16.msra.mxu0 %v6080
        %6259 = vmatpush.bf16.msra.mxu0 %v6078
        %6260 = vmatpush.bf16.msra.mxu0 %v6076
        %6261 = vmatpush.bf16.msra.mxu0 %v6074
        %6262 = vmatpush.bf16.msra.mxu0 %v6072
        %6263 = vmatpush.bf16.msra.mxu0 %v6070
        %6264 = vmatpush.bf16.msra.mxu0 %v6068
        %6265 = vmatpush.bf16.msra.mxu0 %v6066
        %6266 = vmatmul.bf16.gmra.mxu0 %v5664
        %v6267 = vpop.f32.mrf.mxu0
        %v6268 = vadd.f32 %v5774, %v6267
        %v6269 = vpop.f32.mrf.mxu0
        %v6270 = vadd.f32 %v5774, %v6269
        %6271 = vmatmul.bf16.gmra.mxu0 %v5670
        %v6272 = vpop.f32.mrf.mxu0
        %v6273 = vadd.f32 %v5774, %v6272
        %v6274 = vpop.f32.mrf.mxu0
        %v6275 = vadd.f32 %v5774, %v6274
        %6276 = vdwg.mxu0
        %6277 = vmatpush.bf16.msra.mxu0 %v6096
        %6278 = vmatpush.bf16.msra.mxu0 %v6094
        %6279 = vmatpush.bf16.msra.mxu0 %v6092
        %6280 = vmatpush.bf16.msra.mxu0 %v6090
        %6281 = vmatpush.bf16.msra.mxu0 %v6088
        %6282 = vmatpush.bf16.msra.mxu0 %v6086
        %6283 = vmatpush.bf16.msra.mxu0 %v6084
        %6284 = vmatpush.bf16.msra.mxu0 %v6082
        %6285 = vmatmul.bf16.gmra.mxu0 %v5665
        %v6286 = vpop.f32.mrf.mxu0
        %v6287 = vadd.f32 %v6268, %v6286
        %v6288 = vpop.f32.mrf.mxu0
        %v6289 = vadd.f32 %v6270, %v6288
        %6290 = vmatmul.bf16.gmra.mxu0 %v5671
        %v6291 = vpop.f32.mrf.mxu0
        %v6292 = vadd.f32 %v6273, %v6291
        %v6293 = vpop.f32.mrf.mxu0
        %v6294 = vadd.f32 %v6275, %v6293
        %6295 = vdwg.mxu0
        %6296 = vmatpush.bf16.msra.mxu0 %v6112
        %6297 = vmatpush.bf16.msra.mxu0 %v6110
        %6298 = vmatpush.bf16.msra.mxu0 %v6108
        %6299 = vmatpush.bf16.msra.mxu0 %v6106
        %6300 = vmatpush.bf16.msra.mxu0 %v6104
        %6301 = vmatpush.bf16.msra.mxu0 %v6102
        %6302 = vmatpush.bf16.msra.mxu0 %v6100
        %6303 = vmatpush.bf16.msra.mxu0 %v6098
        %6304 = vmatmul.bf16.gmra.mxu0 %v5666
        %v6305 = vpop.f32.mrf.mxu0
        %v6306 = vadd.f32 %v6287, %v6305
        %v6307 = vpop.f32.mrf.mxu0
        %v6308 = vadd.f32 %v6289, %v6307
        %6309 = vmatmul.bf16.gmra.mxu0 %v5672
        %v6310 = vpop.f32.mrf.mxu0
        %v6311 = vadd.f32 %v6292, %v6310
        %v6312 = vpop.f32.mrf.mxu0
        %v6313 = vadd.f32 %v6294, %v6312
        %6314 = vdwg.mxu0
        %6315 = vmatpush.bf16.msra.mxu0 %v6128
        %6316 = vmatpush.bf16.msra.mxu0 %v6126
        %6317 = vmatpush.bf16.msra.mxu0 %v6124
        %6318 = vmatpush.bf16.msra.mxu0 %v6122
        %6319 = vmatpush.bf16.msra.mxu0 %v6120
        %6320 = vmatpush.bf16.msra.mxu0 %v6118
        %6321 = vmatpush.bf16.msra.mxu0 %v6116
        %6322 = vmatpush.bf16.msra.mxu0 %v6114
        %6323 = vmatmul.bf16.gmra.mxu0 %v5667
        %v6324 = vpop.f32.mrf.mxu0
        %v6325 = vadd.f32 %v6306, %v6324
        %v6326 = vpop.f32.mrf.mxu0
        %v6327 = vadd.f32 %v6308, %v6326
        %6328 = vmatmul.bf16.gmra.mxu0 %v5673
        %v6329 = vpop.f32.mrf.mxu0
        %v6330 = vadd.f32 %v6311, %v6329
        %v6331 = vpop.f32.mrf.mxu0
        %v6332 = vadd.f32 %v6313, %v6331
        %6333 = vdwg.mxu0
        %6334 = vmatpush.bf16.msra.mxu0 %v6144
        %6335 = vmatpush.bf16.msra.mxu0 %v6142
        %6336 = vmatpush.bf16.msra.mxu0 %v6140
        %6337 = vmatpush.bf16.msra.mxu0 %v6138
        %6338 = vmatpush.bf16.msra.mxu0 %v6136
        %6339 = vmatpush.bf16.msra.mxu0 %v6134
        %6340 = vmatpush.bf16.msra.mxu0 %v6132
        %6341 = vmatpush.bf16.msra.mxu0 %v6130
        %6342 = vmatmul.bf16.gmra.mxu0 %v5668
        %v6343 = vpop.f32.mrf.mxu0
        %v6344 = vadd.f32 %v6325, %v6343
        %v6345 = vpop.f32.mrf.mxu0
        %v6346 = vadd.f32 %v6327, %v6345
        %6347 = vmatmul.bf16.gmra.mxu0 %v5674
        %v6348 = vpop.f32.mrf.mxu0
        %v6349 = vadd.f32 %v6330, %v6348
        %v6350 = vpop.f32.mrf.mxu0
        %v6351 = vadd.f32 %v6332, %v6350
        %6352 = vdwg.mxu0
        %6353 = vmatpush.bf16.msra.mxu0 %v6160
        %6354 = vmatpush.bf16.msra.mxu0 %v6158
        %6355 = vmatpush.bf16.msra.mxu0 %v6156
        %6356 = vmatpush.bf16.msra.mxu0 %v6154
        %6357 = vmatpush.bf16.msra.mxu0 %v6152
        %6358 = vmatpush.bf16.msra.mxu0 %v6150
        %6359 = vmatpush.bf16.msra.mxu0 %v6148
        %6360 = vmatpush.bf16.msra.mxu0 %v6146
        %6361 = vmatmul.bf16.gmra.mxu0 %v5669
        %v6362 = vpop.f32.mrf.mxu0
        %v6363 = vadd.f32 %v6344, %v6362
        %v6364 = vpop.f32.mrf.mxu0
        %v6365 = vadd.f32 %v6346, %v6364
        %6366 = vmatmul.bf16.gmra.mxu0 %v5675
        %v6367 = vpop.f32.mrf.mxu0
        %v6368 = vadd.f32 %v6349, %v6367
        %v6369 = vpop.f32.mrf.mxu0
        %v6370 = vadd.f32 %v6351, %v6369
        %6371 = vdwg.mxu0
        %6372 = vmatpush.bf16.msra.mxu0 %v6081
        %6373 = vmatpush.bf16.msra.mxu0 %v6079
        %6374 = vmatpush.bf16.msra.mxu0 %v6077
        %6375 = vmatpush.bf16.msra.mxu0 %v6075
        %6376 = vmatpush.bf16.msra.mxu0 %v6073
        %6377 = vmatpush.bf16.msra.mxu0 %v6071
        %6378 = vmatpush.bf16.msra.mxu0 %v6069
        %6379 = vmatpush.bf16.msra.mxu0 %v6067
        %6380 = vmatmul.bf16.gmra.mxu0 %v5664
        %v6381 = vpop.f32.mrf.mxu0
        %v6382 = vadd.f32 %v5775, %v6381
        %v6383 = vpop.f32.mrf.mxu0
        %v6384 = vadd.f32 %v5775, %v6383
        %6385 = vmatmul.bf16.gmra.mxu0 %v5670
        %v6386 = vpop.f32.mrf.mxu0
        %v6387 = vadd.f32 %v5775, %v6386
        %v6388 = vpop.f32.mrf.mxu0
        %v6389 = vadd.f32 %v5775, %v6388
        %6390 = vdwg.mxu0
        %6391 = vmatpush.bf16.msra.mxu0 %v6097
        %6392 = vmatpush.bf16.msra.mxu0 %v6095
        %6393 = vmatpush.bf16.msra.mxu0 %v6093
        %6394 = vmatpush.bf16.msra.mxu0 %v6091
        %6395 = vmatpush.bf16.msra.mxu0 %v6089
        %6396 = vmatpush.bf16.msra.mxu0 %v6087
        %6397 = vmatpush.bf16.msra.mxu0 %v6085
        %6398 = vmatpush.bf16.msra.mxu0 %v6083
        %6399 = vmatmul.bf16.gmra.mxu0 %v5665
        %v6400 = vpop.f32.mrf.mxu0
        %v6401 = vadd.f32 %v6382, %v6400
        %v6402 = vpop.f32.mrf.mxu0
        %v6403 = vadd.f32 %v6384, %v6402
        %6404 = vmatmul.bf16.gmra.mxu0 %v5671
        %v6405 = vpop.f32.mrf.mxu0
        %v6406 = vadd.f32 %v6387, %v6405
        %v6407 = vpop.f32.mrf.mxu0
        %v6408 = vadd.f32 %v6389, %v6407
        %6409 = vdwg.mxu0
        %6410 = vmatpush.bf16.msra.mxu0 %v6113
        %6411 = vmatpush.bf16.msra.mxu0 %v6111
        %6412 = vmatpush.bf16.msra.mxu0 %v6109
        %6413 = vmatpush.bf16.msra.mxu0 %v6107
        %6414 = vmatpush.bf16.msra.mxu0 %v6105
        %6415 = vmatpush.bf16.msra.mxu0 %v6103
        %6416 = vmatpush.bf16.msra.mxu0 %v6101
        %6417 = vmatpush.bf16.msra.mxu0 %v6099
        %6418 = vmatmul.bf16.gmra.mxu0 %v5666
        %v6419 = vpop.f32.mrf.mxu0
        %v6420 = vadd.f32 %v6401, %v6419
        %v6421 = vpop.f32.mrf.mxu0
        %v6422 = vadd.f32 %v6403, %v6421
        %6423 = vmatmul.bf16.gmra.mxu0 %v5672
        %v6424 = vpop.f32.mrf.mxu0
        %v6425 = vadd.f32 %v6406, %v6424
        %v6426 = vpop.f32.mrf.mxu0
        %v6427 = vadd.f32 %v6408, %v6426
        %6428 = vdwg.mxu0
        %6429 = vmatpush.bf16.msra.mxu0 %v6129
        %6430 = vmatpush.bf16.msra.mxu0 %v6127
        %6431 = vmatpush.bf16.msra.mxu0 %v6125
        %6432 = vmatpush.bf16.msra.mxu0 %v6123
        %6433 = vmatpush.bf16.msra.mxu0 %v6121
        %6434 = vmatpush.bf16.msra.mxu0 %v6119
        %6435 = vmatpush.bf16.msra.mxu0 %v6117
        %6436 = vmatpush.bf16.msra.mxu0 %v6115
        %6437 = vmatmul.bf16.gmra.mxu0 %v5667
        %v6438 = vpop.f32.mrf.mxu0
        %v6439 = vadd.f32 %v6420, %v6438
        %v6440 = vpop.f32.mrf.mxu0
        %v6441 = vadd.f32 %v6422, %v6440
        %6442 = vmatmul.bf16.gmra.mxu0 %v5673
        %v6443 = vpop.f32.mrf.mxu0
        %v6444 = vadd.f32 %v6425, %v6443
        %v6445 = vpop.f32.mrf.mxu0
        %v6446 = vadd.f32 %v6427, %v6445
        %6447 = vdwg.mxu0
        %6448 = vmatpush.bf16.msra.mxu0 %v6145
        %6449 = vmatpush.bf16.msra.mxu0 %v6143
        %6450 = vmatpush.bf16.msra.mxu0 %v6141
        %6451 = vmatpush.bf16.msra.mxu0 %v6139
        %6452 = vmatpush.bf16.msra.mxu0 %v6137
        %6453 = vmatpush.bf16.msra.mxu0 %v6135
        %6454 = vmatpush.bf16.msra.mxu0 %v6133
        %6455 = vmatpush.bf16.msra.mxu0 %v6131
        %6456 = vmatmul.bf16.gmra.mxu0 %v5668
        %v6457 = vpop.f32.mrf.mxu0
        %v6458 = vadd.f32 %v6439, %v6457
        %v6459 = vpop.f32.mrf.mxu0
        %v6460 = vadd.f32 %v6441, %v6459
        %6461 = vmatmul.bf16.gmra.mxu0 %v5674
        %v6462 = vpop.f32.mrf.mxu0
        %v6463 = vadd.f32 %v6444, %v6462
        %v6464 = vpop.f32.mrf.mxu0
        %v6465 = vadd.f32 %v6446, %v6464
        %6466 = vdwg.mxu0
        %6467 = vmatpush.bf16.msra.mxu0 %v6161
        %6468 = vmatpush.bf16.msra.mxu0 %v6159
        %6469 = vmatpush.bf16.msra.mxu0 %v6157
        %6470 = vmatpush.bf16.msra.mxu0 %v6155
        %6471 = vmatpush.bf16.msra.mxu0 %v6153
        %6472 = vmatpush.bf16.msra.mxu0 %v6151
        %6473 = vmatpush.bf16.msra.mxu0 %v6149
        %6474 = vmatpush.bf16.msra.mxu0 %v6147
        %6475 = vmatmul.bf16.gmra.mxu0 %v5669
        %v6476 = vpop.f32.mrf.mxu0
        %v6477 = vadd.f32 %v6458, %v6476
        %v6478 = vpop.f32.mrf.mxu0
        %v6479 = vadd.f32 %v6460, %v6478
        %6480 = vmatmul.bf16.gmra.mxu0 %v5675
        %v6481 = vpop.f32.mrf.mxu0
        %v6482 = vadd.f32 %v6463, %v6481
        %v6483 = vpop.f32.mrf.mxu0
        %v6484 = vadd.f32 %v6465, %v6483
        %6485 = vdwg.mxu0
        %v6486 = vadd.f32 %v4812, %v6363
        %v6487 = vadd.f32 %v4813, %v6477
        %v6488 = vadd.f32 %v4814, %v6365
        %v6489 = vadd.f32 %v4815, %v6479
        %v6490 = vadd.f32 %v4816, %v6368
        %v6491 = vadd.f32 %v4817, %v6482
        %v6492 = vadd.f32 %v4818, %v6370
        %v6493 = vadd.f32 %v4819, %v6484
        %6494 = vst [vmem:[%s463] sm:$0xff] %v6486
        %6495 = vst.msk [vmem:[%s463 + $0x8] sm:$0xff] %vm483, %v6487
        %6496 = vst [vmem:[%s463 + $0x10] sm:$0xff] %v6488
        %6497 = vst.msk [vmem:[%s463 + $0x18] sm:$0xff] %vm483, %v6489
        %6498 = vst [vmem:[%s463 + $0x20] sm:$0xff] %v6490
        %6499 = vst.msk [vmem:[%s463 + $0x28] sm:$0xff] %vm483, %v6491
        %6500 = vst [vmem:[%s463 + $0x30] sm:$0xff] %v6492
        %6501 = vst.msk [vmem:[%s463 + $0x38] sm:$0xff] %vm483, %v6493
        %s6502 = sand.u32 %s335, 1
        %s6503 = scalar_lea.sflag [#allocation3], %s6502
        %s6504 = sand.u32 %s335, 1
        %s6505 = smul.addr %s6504, 64
        %s6506 = scalar_lea.vmem [#allocation2], %s6505
        // Predicated region
        $region77: #{transformer_block.1} parent=75 // pred_check
          %p6507 = pneg %p345
        $region78: #{transformer_block.1} parent=75 // pred_check_branch
          %6509 = sbr.rel (%p6507) target = $region80
        $region79: #{transformer_block.1} parent=75 // pred_region
          %s6510 = smul.u32 2, %s28
          %6512 = vsyncadd %s6503, 0
          %s6513 = smul.addr %s6510, 4
          %s6514 = smul.addr %s6513, 8
          %s6515 = scalar_lea.hbm %s14, %s6514
          %s6516 = sshll.u32 %s6506, 4
          %s6517 = int_to_ptr.vmem [resolvable:$true] %s6516
          %s6518 = sshll.u32 %s6515, 4
          %s6519 = int_to_ptr.hbm [resolvable:$true] %s6518
          %6524 = dma.vmem_to_hbm [thread:$0]  %s6517, 1024, %s6519, %s6503, 256, 256, 16
        $region80: #{transformer_block.1} parent=75 // pred_fallthru
          _
      $region76: #{transformer_block.1} parent=5 // pred_fallthru
        _
      %p6525 = scmp.le.s32.totalorder 2, %s23
      // Predicated region
      $region81: #{transformer_block.1} parent=5 // pred_check
        %p6526 = pneg %p6525
      $region82: #{transformer_block.1} parent=5 // pred_check_branch
        %6528 = sbr.rel (%p6526) target = $region84
      $region83: #{transformer_block.1} parent=5 // pred_region
        %s6529 = ssub.s32 %s23, 2
        // Predicated region
        $region85: #{transformer_block.1} parent=83 // pred_check
          %p6530 = pneg %p351
        $region86: #{transformer_block.1} parent=83 // pred_check_branch
          %6532 = sbr.rel (%p6530) target = $region88
        $region87: #{transformer_block.1} parent=83 // pred_region
          %s6533 = sand.u32 %s336, 1
          %s6534 = scalar_lea.sflag [#allocation3], %s6533
          %s6535 = sand.u32 %s336, 1
          %s6536 = smul.addr %s6535, 64
          %s6537 = scalar_lea.vmem [#allocation2], %s6536
          %6539 = dma.done %s6534, 1024
        $region88: #{transformer_block.1} parent=83 // pred_fallthru
          _
      $region84: #{transformer_block.1} parent=5 // pred_fallthru
        _
    $region6: #{transformer_block.1} parent=1 // loop_footer
      %s27 = sadd.s32 1, %s23
    $region7: #{transformer_block.1} parent=1 // loop_footer_branch
      %22 = sbr.rel target = $region3
    $region8: #{transformer_block.1} parent=1 // loop_exit
      _
    %6540 = vsyncpa [#allocation3], 1
    %s6541 = scalar_lea.sflag [#allocation3], 1
    %6542 = vsyncpa %s6541, 1

</llo_original>
